<compile_context>
chip_gen: v7x
topology: tpu7x:2x2x1
jax: 0.10.0
libtpu: 0.0.40
codegen_flags: <defaults>
</compile_context>

<pallas_src>
import functools

import jax
import jax.numpy as jnp
from jax.experimental import pallas as pl
from jax.experimental.pallas import tpu as pltpu


def _round_up(x, m):
    return (x + m - 1) // m * m


def ae_fwd_kernel(x_ref, *refs):
    """refs = (w0, b0, w1, b1, ..., w9, b9, o_ref).

    x_ref: bf16 (TB, d_in_pad).  Weights are bf16 [d_in_pad, d_out_pad];
    biases are f32 [1, d_out_pad].  Each layer: MXU matmul (bf16 in, f32
    accumulate) + f32 VPU bias-add/activation; the inter-layer activation is
    stored back as bf16 so the carried tile (and the next MXU input) is half
    the VMEM traffic of f32.
    """
    o_ref = refs[-1]
    wb = refs[:-1]
    n_layers = len(wb) // 2

    h = x_ref[...]                                     # bf16 (TB, d_in_p)
    for i in range(n_layers):
        w = wb[2 * i][...]                             # bf16 (d_in_p, d_out_p)
        b = wb[2 * i + 1][...]                         # f32  (1, d_out_p)
        acc = jnp.dot(h, w, preferred_element_type=jnp.float32) + b
        if i == n_layers - 1:
            o_ref[...] = jnp.tanh(acc).astype(o_ref.dtype)   # final Tanh, f32 out
        else:
            h = jnp.maximum(acc, 0.0).astype(jnp.bfloat16)   # ReLU -> bf16 carry


def init_ae_params(key, input_dim, z_dim, dtype=jnp.float32):
    """Deterministic init mimicking nn.Linear default (U[-1/sqrt(fan_in), +])."""
    dims = [input_dim, 300, 300, 150, 75, z_dim,   # encoder
            75, 150, 300, 300, input_dim]          # decoder
    params = []
    for i in range(len(dims) - 1):
        d_in, d_out = dims[i], dims[i + 1]
        key, kw, kb = jax.random.split(key, 3)
        bound = 1.0 / jnp.sqrt(jnp.float32(d_in))
        w = jax.random.uniform(kw, (d_in, d_out), dtype, -bound, bound)
        b = jax.random.uniform(kb, (d_out,), dtype, -bound, bound)
        params.append((w, b))
    return params


def prepare_ae_params(params):
    """One-time: pad feature dims to multiples of 128 and cast weights to bf16.

    Padded weight columns / bias entries are exactly zero, so padded output
    lanes stay zero through ReLU/Tanh and the real columns sliced off outside
    the kernel are exact.
    """
    flat = []
    for w, b in params:
        d_in, d_out = w.shape
        d_in_p, d_out_p = _round_up(d_in, 128), _round_up(d_out, 128)
        w_p = jnp.zeros((d_in_p, d_out_p), jnp.bfloat16)
        w_p = w_p.at[:d_in, :d_out].set(w.astype(jnp.bfloat16))
        b_p = jnp.zeros((1, d_out_p), jnp.float32)
        b_p = b_p.at[0, :d_out].set(b.astype(jnp.float32))
        flat.append(w_p)
        flat.append(b_p)
    return tuple(flat)


def ae_forward(x, flat, out_dim):
    """x: (B, input_dim); flat: output of prepare_ae_params; out_dim: true output width."""
    B, in_dim = x.shape
    in_dim_p = flat[0].shape[0]
    out_dim_p = flat[-2].shape[1]
    n_layers = len(flat) // 2

    # --- batch tiling:
    #   * >= 2 tiles and even, so the "parallel" batch axis keeps both v7x
    #     TensorCores busy even for small B,
    #   * <= 512 rows per tile (amortizes the ~0.35 us fixed cost per grid
    #     step on v6e/v5e, fills the MXU M dimension),
    #   * TB a multiple of 16 (bf16 sublane packing) and sized to minimize
    #     batch padding for awkward B.
    n_tiles = max(2, pl.cdiv(B, 512))
    n_tiles += n_tiles % 2
    TB = _round_up(pl.cdiv(B, n_tiles), 16)
    B_p = n_tiles * TB

    # Input padded + cast to bf16 once in the wrapper (halves input DMA and
    # matches the bf16 layer-0 matmul input).
    x_p = jnp.zeros((B_p, in_dim_p), jnp.bfloat16)
    x_p = x_p.at[:B, :in_dim].set(x.astype(jnp.bfloat16))

    grid = (n_tiles,)
    x_spec = pl.BlockSpec((TB, in_dim_p), lambda i: (i, 0))
    o_spec = pl.BlockSpec((TB, out_dim_p), lambda i: (i, 0))
    # Weights/biases: whole array, constant block index -> VMEM-resident
    # across all grid steps (~1.4 MiB bf16 total).
    wb_specs = [pl.BlockSpec(a.shape, lambda i: (0, 0)) for a in flat]

    # Advisory cost estimate for XLA's scheduler.
    flops = 2 * B_p * sum(flat[2 * i].shape[0] * flat[2 * i].shape[1]
                          for i in range(n_layers))
    bytes_accessed = (x_p.size * x_p.dtype.itemsize + B_p * out_dim_p * 4
                      + sum(int(a.size) * a.dtype.itemsize for a in flat))
    cost = pl.CostEstimate(flops=flops,
                           transcendentals=B_p * out_dim_p,
                           bytes_accessed=bytes_accessed)

    out_p = pl.pallas_call(
        ae_fwd_kernel,
        out_shape=jax.ShapeDtypeStruct((B_p, out_dim_p), jnp.float32),
        grid=grid,
        in_specs=[x_spec] + wb_specs,
        out_specs=o_spec,
        compiler_params=pltpu.CompilerParams(
            dimension_semantics=("parallel",),
            vmem_limit_bytes=32 * 1024 * 1024),
        cost_estimate=cost,
    )(x_p, *flat)

    return out_p[:B, :out_dim].astype(x.dtype)


# jit once: padding/slicing fuses around the custom call; out_dim is static.
ae_apply = jax.jit(ae_forward, static_argnums=(2,))


def ae_reference_f32(x, params):
    """Plain-JAX f32 reference (exact module semantics)."""
    h = x.astype(jnp.float32)
    n = len(params)
    for i, (w, b) in enumerate(params):
        h = h @ w + b
        h = jnp.tanh(h) if i == n - 1 else jnp.maximum(h, 0.0)
    return h.astype(x.dtype)


def ae_reference_bf16(x, params):
    """Reference with the same numerics as the kernel (bf16 matmul inputs,
    f32 accumulate/bias/activation, bf16 inter-layer carry)."""
    h = x.astype(jnp.bfloat16)
    n = len(params)
    for i, (w, b) in enumerate(params):
        acc = jnp.dot(h, w.astype(jnp.bfloat16),
                      preferred_element_type=jnp.float32) + b.astype(jnp.float32)
        if i == n - 1:
            h = jnp.tanh(acc)
        else:
            h = jnp.maximum(acc, 0.0).astype(jnp.bfloat16)
    return h.astype(x.dtype)


if __name__ == "__main__":
    key = jax.random.PRNGKey(0)
    k_param, k_x = jax.random.split(key)

    batch = 8
    input_dim = 64
    z_dim = 16

    params = init_ae_params(k_param, input_dim, z_dim)
    flat = prepare_ae_params(params)           # one-time pad + bf16 cast
    x = jax.random.normal(k_x, (batch, input_dim), dtype=jnp.float32)

    out = ae_apply(x, flat, input_dim)
    out = jax.block_until_ready(out)
    assert out.shape == (batch, input_dim), out.shape

    # Kernel math (bf16 MXU inputs / bf16 inter-layer carry, f32 accumulate)
    # matches a same-precision reference tightly...
    ref_bf16 = ae_reference_bf16(x, params)
    assert jnp.allclose(out, ref_bf16, atol=2e-3, rtol=2e-3), \
        float(jnp.max(jnp.abs(out - ref_bf16)))
    # ...and the f32 module semantics loosely (bf16 error accumulated over 10
    # layers is the accepted precision of this kernel).
    ref_f32 = ae_reference_f32(x, params)
    assert jnp.allclose(out, ref_f32, atol=2e-1, rtol=2e-1), \
        float(jnp.max(jnp.abs(out - ref_f32)))

    print("KERNEL_OK")
</pallas_src>

<mosaic_0001>
module attributes {stable_mosaic.version = 11 : i64} {
  func.func @ae_fwd_kernel(%arg0: i32, %arg1: memref<16x128xbf16, #tpu.memory_space<vmem>>, %arg2: memref<128x384xbf16, #tpu.memory_space<vmem>>, %arg3: memref<1x384xf32, #tpu.memory_space<vmem>>, %arg4: memref<384x384xbf16, #tpu.memory_space<vmem>>, %arg5: memref<1x384xf32, #tpu.memory_space<vmem>>, %arg6: memref<384x256xbf16, #tpu.memory_space<vmem>>, %arg7: memref<1x256xf32, #tpu.memory_space<vmem>>, %arg8: memref<256x128xbf16, #tpu.memory_space<vmem>>, %arg9: memref<1x128xf32, #tpu.memory_space<vmem>>, %arg10: memref<128x128xbf16, #tpu.memory_space<vmem>>, %arg11: memref<1x128xf32, #tpu.memory_space<vmem>>, %arg12: memref<128x128xbf16, #tpu.memory_space<vmem>>, %arg13: memref<1x128xf32, #tpu.memory_space<vmem>>, %arg14: memref<128x256xbf16, #tpu.memory_space<vmem>>, %arg15: memref<1x256xf32, #tpu.memory_space<vmem>>, %arg16: memref<256x384xbf16, #tpu.memory_space<vmem>>, %arg17: memref<1x384xf32, #tpu.memory_space<vmem>>, %arg18: memref<384x384xbf16, #tpu.memory_space<vmem>>, %arg19: memref<1x384xf32, #tpu.memory_space<vmem>>, %arg20: memref<384x128xbf16, #tpu.memory_space<vmem>>, %arg21: memref<1x128xf32, #tpu.memory_space<vmem>>, %arg22: memref<16x128xf32, #tpu.memory_space<vmem>>) attributes {dimension_semantics = [#tpu.dimension_semantics<parallel>], iteration_bounds = array<i64: 2>, scalar_prefetch = 0 : i64, scratch_operands = 0 : i64, tpu.core_type = #tpu.core_type<tc>, window_params = [{transform_indices = @transform_0, window_bounds = array<i64: 16, 128>}, {pipeline_mode = #tpu.pipeline_mode<synchronous>, transform_indices = @transform_1, window_bounds = array<i64: 128, 384>}, {pipeline_mode = #tpu.pipeline_mode<synchronous>, transform_indices = @transform_2, window_bounds = array<i64: 1, 384>}, {pipeline_mode = #tpu.pipeline_mode<synchronous>, transform_indices = @transform_3, window_bounds = array<i64: 384, 384>}, {pipeline_mode = #tpu.pipeline_mode<synchronous>, transform_indices = @transform_4, window_bounds = array<i64: 1, 384>}, {pipeline_mode = #tpu.pipeline_mode<synchronous>, transform_indices = @transform_5, window_bounds = array<i64: 384, 256>}, {pipeline_mode = #tpu.pipeline_mode<synchronous>, transform_indices = @transform_6, window_bounds = array<i64: 1, 256>}, {pipeline_mode = #tpu.pipeline_mode<synchronous>, transform_indices = @transform_7, window_bounds = array<i64: 256, 128>}, {pipeline_mode = #tpu.pipeline_mode<synchronous>, transform_indices = @transform_8, window_bounds = array<i64: 1, 128>}, {pipeline_mode = #tpu.pipeline_mode<synchronous>, transform_indices = @transform_9, window_bounds = array<i64: 128, 128>}, {pipeline_mode = #tpu.pipeline_mode<synchronous>, transform_indices = @transform_10, window_bounds = array<i64: 1, 128>}, {pipeline_mode = #tpu.pipeline_mode<synchronous>, transform_indices = @transform_11, window_bounds = array<i64: 128, 128>}, {pipeline_mode = #tpu.pipeline_mode<synchronous>, transform_indices = @transform_12, window_bounds = array<i64: 1, 128>}, {pipeline_mode = #tpu.pipeline_mode<synchronous>, transform_indices = @transform_13, window_bounds = array<i64: 128, 256>}, {pipeline_mode = #tpu.pipeline_mode<synchronous>, transform_indices = @transform_14, window_bounds = array<i64: 1, 256>}, {pipeline_mode = #tpu.pipeline_mode<synchronous>, transform_indices = @transform_15, window_bounds = array<i64: 256, 384>}, {pipeline_mode = #tpu.pipeline_mode<synchronous>, transform_indices = @transform_16, window_bounds = array<i64: 1, 384>}, {pipeline_mode = #tpu.pipeline_mode<synchronous>, transform_indices = @transform_17, window_bounds = array<i64: 384, 384>}, {pipeline_mode = #tpu.pipeline_mode<synchronous>, transform_indices = @transform_18, window_bounds = array<i64: 1, 384>}, {pipeline_mode = #tpu.pipeline_mode<synchronous>, transform_indices = @transform_19, window_bounds = array<i64: 384, 128>}, {pipeline_mode = #tpu.pipeline_mode<synchronous>, transform_indices = @transform_20, window_bounds = array<i64: 1, 128>}, {transform_indices = @transform_21, window_bounds = array<i64: 16, 128>}]} {
    %c0 = arith.constant 0 : index
    %c0_0 = arith.constant 0 : index
    %0 = vector.load %arg1[%c0, %c0_0] : memref<16x128xbf16, #tpu.memory_space<vmem>>, vector<16x128xbf16>
    %c0_1 = arith.constant 0 : index
    %c0_2 = arith.constant 0 : index
    %1 = vector.load %arg2[%c0_1, %c0_2] : memref<128x384xbf16, #tpu.memory_space<vmem>>, vector<128x384xbf16>
    %c0_3 = arith.constant 0 : index
    %c0_4 = arith.constant 0 : index
    %2 = vector.load %arg3[%c0_3, %c0_4] : memref<1x384xf32, #tpu.memory_space<vmem>>, vector<1x384xf32>
    %cst = arith.constant dense<0.000000e+00> : vector<16x384xf32>
    %3 = tpu.matmul %0, %1, %cst {dimension_numbers = #tpu.dot_dimension_numbers<[1], [0], [0], [1], [0, 0, 1, 1], [], []>} : vector<16x128xbf16>, vector<128x384xbf16>, vector<16x384xf32> -> vector<16x384xf32>
    %4 = vector.broadcast %2 : vector<1x384xf32> to vector<16x384xf32>
    %5 = arith.addf %3, %4 : vector<16x384xf32>
    %cst_5 = arith.constant 0.000000e+00 : f32
    %6 = vector.broadcast %cst_5 : f32 to vector<16x384xf32>
    %7 = arith.maximumf %5, %6 : vector<16x384xf32>
    %8 = arith.truncf %7 : vector<16x384xf32> to vector<16x384xbf16>
    %c0_6 = arith.constant 0 : index
    %c0_7 = arith.constant 0 : index
    %9 = vector.load %arg4[%c0_6, %c0_7] : memref<384x384xbf16, #tpu.memory_space<vmem>>, vector<384x384xbf16>
    %c0_8 = arith.constant 0 : index
    %c0_9 = arith.constant 0 : index
    %10 = vector.load %arg5[%c0_8, %c0_9] : memref<1x384xf32, #tpu.memory_space<vmem>>, vector<1x384xf32>
    %cst_10 = arith.constant dense<0.000000e+00> : vector<16x384xf32>
    %11 = tpu.matmul %8, %9, %cst_10 {dimension_numbers = #tpu.dot_dimension_numbers<[1], [0], [0], [1], [0, 0, 1, 1], [], []>} : vector<16x384xbf16>, vector<384x384xbf16>, vector<16x384xf32> -> vector<16x384xf32>
    %12 = vector.broadcast %10 : vector<1x384xf32> to vector<16x384xf32>
    %13 = arith.addf %11, %12 : vector<16x384xf32>
    %cst_11 = arith.constant 0.000000e+00 : f32
    %14 = vector.broadcast %cst_11 : f32 to vector<16x384xf32>
    %15 = arith.maximumf %13, %14 : vector<16x384xf32>
    %16 = arith.truncf %15 : vector<16x384xf32> to vector<16x384xbf16>
    %c0_12 = arith.constant 0 : index
    %c0_13 = arith.constant 0 : index
    %17 = vector.load %arg6[%c0_12, %c0_13] : memref<384x256xbf16, #tpu.memory_space<vmem>>, vector<384x256xbf16>
    %c0_14 = arith.constant 0 : index
    %c0_15 = arith.constant 0 : index
    %18 = vector.load %arg7[%c0_14, %c0_15] : memref<1x256xf32, #tpu.memory_space<vmem>>, vector<1x256xf32>
    %cst_16 = arith.constant dense<0.000000e+00> : vector<16x256xf32>
    %19 = tpu.matmul %16, %17, %cst_16 {dimension_numbers = #tpu.dot_dimension_numbers<[1], [0], [0], [1], [0, 0, 1, 1], [], []>} : vector<16x384xbf16>, vector<384x256xbf16>, vector<16x256xf32> -> vector<16x256xf32>
    %20 = vector.broadcast %18 : vector<1x256xf32> to vector<16x256xf32>
    %21 = arith.addf %19, %20 : vector<16x256xf32>
    %cst_17 = arith.constant 0.000000e+00 : f32
    %22 = vector.broadcast %cst_17 : f32 to vector<16x256xf32>
    %23 = arith.maximumf %21, %22 : vector<16x256xf32>
    %24 = arith.truncf %23 : vector<16x256xf32> to vector<16x256xbf16>
    %c0_18 = arith.constant 0 : index
    %c0_19 = arith.constant 0 : index
    %25 = vector.load %arg8[%c0_18, %c0_19] : memref<256x128xbf16, #tpu.memory_space<vmem>>, vector<256x128xbf16>
    %c0_20 = arith.constant 0 : index
    %c0_21 = arith.constant 0 : index
    %26 = vector.load %arg9[%c0_20, %c0_21] : memref<1x128xf32, #tpu.memory_space<vmem>>, vector<1x128xf32>
    %cst_22 = arith.constant dense<0.000000e+00> : vector<16x128xf32>
    %27 = tpu.matmul %24, %25, %cst_22 {dimension_numbers = #tpu.dot_dimension_numbers<[1], [0], [0], [1], [0, 0, 1, 1], [], []>} : vector<16x256xbf16>, vector<256x128xbf16>, vector<16x128xf32> -> vector<16x128xf32>
    %28 = vector.broadcast %26 : vector<1x128xf32> to vector<16x128xf32>
    %29 = arith.addf %27, %28 : vector<16x128xf32>
    %cst_23 = arith.constant 0.000000e+00 : f32
    %30 = vector.broadcast %cst_23 : f32 to vector<16x128xf32>
    %31 = arith.maximumf %29, %30 : vector<16x128xf32>
    %32 = arith.truncf %31 : vector<16x128xf32> to vector<16x128xbf16>
    %c0_24 = arith.constant 0 : index
    %c0_25 = arith.constant 0 : index
    %33 = vector.load %arg10[%c0_24, %c0_25] : memref<128x128xbf16, #tpu.memory_space<vmem>>, vector<128x128xbf16>
    %c0_26 = arith.constant 0 : index
    %c0_27 = arith.constant 0 : index
    %34 = vector.load %arg11[%c0_26, %c0_27] : memref<1x128xf32, #tpu.memory_space<vmem>>, vector<1x128xf32>
    %cst_28 = arith.constant dense<0.000000e+00> : vector<16x128xf32>
    %35 = tpu.matmul %32, %33, %cst_28 {dimension_numbers = #tpu.dot_dimension_numbers<[1], [0], [0], [1], [0, 0, 1, 1], [], []>} : vector<16x128xbf16>, vector<128x128xbf16>, vector<16x128xf32> -> vector<16x128xf32>
    %36 = vector.broadcast %34 : vector<1x128xf32> to vector<16x128xf32>
    %37 = arith.addf %35, %36 : vector<16x128xf32>
    %cst_29 = arith.constant 0.000000e+00 : f32
    %38 = vector.broadcast %cst_29 : f32 to vector<16x128xf32>
    %39 = arith.maximumf %37, %38 : vector<16x128xf32>
    %40 = arith.truncf %39 : vector<16x128xf32> to vector<16x128xbf16>
    %c0_30 = arith.constant 0 : index
    %c0_31 = arith.constant 0 : index
    %41 = vector.load %arg12[%c0_30, %c0_31] : memref<128x128xbf16, #tpu.memory_space<vmem>>, vector<128x128xbf16>
    %c0_32 = arith.constant 0 : index
    %c0_33 = arith.constant 0 : index
    %42 = vector.load %arg13[%c0_32, %c0_33] : memref<1x128xf32, #tpu.memory_space<vmem>>, vector<1x128xf32>
    %cst_34 = arith.constant dense<0.000000e+00> : vector<16x128xf32>
    %43 = tpu.matmul %40, %41, %cst_34 {dimension_numbers = #tpu.dot_dimension_numbers<[1], [0], [0], [1], [0, 0, 1, 1], [], []>} : vector<16x128xbf16>, vector<128x128xbf16>, vector<16x128xf32> -> vector<16x128xf32>
    %44 = vector.broadcast %42 : vector<1x128xf32> to vector<16x128xf32>
    %45 = arith.addf %43, %44 : vector<16x128xf32>
    %cst_35 = arith.constant 0.000000e+00 : f32
    %46 = vector.broadcast %cst_35 : f32 to vector<16x128xf32>
    %47 = arith.maximumf %45, %46 : vector<16x128xf32>
    %48 = arith.truncf %47 : vector<16x128xf32> to vector<16x128xbf16>
    %c0_36 = arith.constant 0 : index
    %c0_37 = arith.constant 0 : index
    %49 = vector.load %arg14[%c0_36, %c0_37] : memref<128x256xbf16, #tpu.memory_space<vmem>>, vector<128x256xbf16>
    %c0_38 = arith.constant 0 : index
    %c0_39 = arith.constant 0 : index
    %50 = vector.load %arg15[%c0_38, %c0_39] : memref<1x256xf32, #tpu.memory_space<vmem>>, vector<1x256xf32>
    %cst_40 = arith.constant dense<0.000000e+00> : vector<16x256xf32>
    %51 = tpu.matmul %48, %49, %cst_40 {dimension_numbers = #tpu.dot_dimension_numbers<[1], [0], [0], [1], [0, 0, 1, 1], [], []>} : vector<16x128xbf16>, vector<128x256xbf16>, vector<16x256xf32> -> vector<16x256xf32>
    %52 = vector.broadcast %50 : vector<1x256xf32> to vector<16x256xf32>
    %53 = arith.addf %51, %52 : vector<16x256xf32>
    %cst_41 = arith.constant 0.000000e+00 : f32
    %54 = vector.broadcast %cst_41 : f32 to vector<16x256xf32>
    %55 = arith.maximumf %53, %54 : vector<16x256xf32>
    %56 = arith.truncf %55 : vector<16x256xf32> to vector<16x256xbf16>
    %c0_42 = arith.constant 0 : index
    %c0_43 = arith.constant 0 : index
    %57 = vector.load %arg16[%c0_42, %c0_43] : memref<256x384xbf16, #tpu.memory_space<vmem>>, vector<256x384xbf16>
    %c0_44 = arith.constant 0 : index
    %c0_45 = arith.constant 0 : index
    %58 = vector.load %arg17[%c0_44, %c0_45] : memref<1x384xf32, #tpu.memory_space<vmem>>, vector<1x384xf32>
    %cst_46 = arith.constant dense<0.000000e+00> : vector<16x384xf32>
    %59 = tpu.matmul %56, %57, %cst_46 {dimension_numbers = #tpu.dot_dimension_numbers<[1], [0], [0], [1], [0, 0, 1, 1], [], []>} : vector<16x256xbf16>, vector<256x384xbf16>, vector<16x384xf32> -> vector<16x384xf32>
    %60 = vector.broadcast %58 : vector<1x384xf32> to vector<16x384xf32>
    %61 = arith.addf %59, %60 : vector<16x384xf32>
    %cst_47 = arith.constant 0.000000e+00 : f32
    %62 = vector.broadcast %cst_47 : f32 to vector<16x384xf32>
    %63 = arith.maximumf %61, %62 : vector<16x384xf32>
    %64 = arith.truncf %63 : vector<16x384xf32> to vector<16x384xbf16>
    %c0_48 = arith.constant 0 : index
    %c0_49 = arith.constant 0 : index
    %65 = vector.load %arg18[%c0_48, %c0_49] : memref<384x384xbf16, #tpu.memory_space<vmem>>, vector<384x384xbf16>
    %c0_50 = arith.constant 0 : index
    %c0_51 = arith.constant 0 : index
    %66 = vector.load %arg19[%c0_50, %c0_51] : memref<1x384xf32, #tpu.memory_space<vmem>>, vector<1x384xf32>
    %cst_52 = arith.constant dense<0.000000e+00> : vector<16x384xf32>
    %67 = tpu.matmul %64, %65, %cst_52 {dimension_numbers = #tpu.dot_dimension_numbers<[1], [0], [0], [1], [0, 0, 1, 1], [], []>} : vector<16x384xbf16>, vector<384x384xbf16>, vector<16x384xf32> -> vector<16x384xf32>
    %68 = vector.broadcast %66 : vector<1x384xf32> to vector<16x384xf32>
    %69 = arith.addf %67, %68 : vector<16x384xf32>
    %cst_53 = arith.constant 0.000000e+00 : f32
    %70 = vector.broadcast %cst_53 : f32 to vector<16x384xf32>
    %71 = arith.maximumf %69, %70 : vector<16x384xf32>
    %72 = arith.truncf %71 : vector<16x384xf32> to vector<16x384xbf16>
    %c0_54 = arith.constant 0 : index
    %c0_55 = arith.constant 0 : index
    %73 = vector.load %arg20[%c0_54, %c0_55] : memref<384x128xbf16, #tpu.memory_space<vmem>>, vector<384x128xbf16>
    %c0_56 = arith.constant 0 : index
    %c0_57 = arith.constant 0 : index
    %74 = vector.load %arg21[%c0_56, %c0_57] : memref<1x128xf32, #tpu.memory_space<vmem>>, vector<1x128xf32>
    %cst_58 = arith.constant dense<0.000000e+00> : vector<16x128xf32>
    %75 = tpu.matmul %72, %73, %cst_58 {dimension_numbers = #tpu.dot_dimension_numbers<[1], [0], [0], [1], [0, 0, 1, 1], [], []>} : vector<16x384xbf16>, vector<384x128xbf16>, vector<16x128xf32> -> vector<16x128xf32>
    %76 = vector.broadcast %74 : vector<1x128xf32> to vector<16x128xf32>
    %77 = arith.addf %75, %76 : vector<16x128xf32>
    %78 = math.tanh %77 : vector<16x128xf32>
    %c0_59 = arith.constant 0 : index
    %c0_60 = arith.constant 0 : index
    %79 = vector.load %arg22[%c0_59, %c0_60] : memref<16x128xf32, #tpu.memory_space<vmem>>, vector<16x128xf32>
    tpu.vector_store %arg22[%c0_59, %c0_60], %78 {strides = array<i32>} : memref<16x128xf32, #tpu.memory_space<vmem>>, vector<16x128xf32>,
    return
  }
  func.func @transform_0(%arg0: i32) -> (i32, i32) {
    %c0_i32 = arith.constant 0 : i32
    %c0_i32_0 = arith.constant 0 : i32
    return %arg0, %c0_i32 : i32, i32
  }
  func.func @transform_1(%arg0: i32) -> (i32, i32) {
    %c0_i32 = arith.constant 0 : i32
    %c0_i32_0 = arith.constant 0 : i32
    %c0_i32_1 = arith.constant 0 : i32
    return %c0_i32, %c0_i32_0 : i32, i32
  }
  func.func @transform_2(%arg0: i32) -> (i32, i32) {
    %c0_i32 = arith.constant 0 : i32
    %c0_i32_0 = arith.constant 0 : i32
    %c0_i32_1 = arith.constant 0 : i32
    return %c0_i32, %c0_i32_0 : i32, i32
  }
  func.func @transform_3(%arg0: i32) -> (i32, i32) {
    %c0_i32 = arith.constant 0 : i32
    %c0_i32_0 = arith.constant 0 : i32
    %c0_i32_1 = arith.constant 0 : i32
    return %c0_i32, %c0_i32_0 : i32, i32
  }
  func.func @transform_4(%arg0: i32) -> (i32, i32) {
    %c0_i32 = arith.constant 0 : i32
    %c0_i32_0 = arith.constant 0 : i32
    %c0_i32_1 = arith.constant 0 : i32
    return %c0_i32, %c0_i32_0 : i32, i32
  }
  func.func @transform_5(%arg0: i32) -> (i32, i32) {
    %c0_i32 = arith.constant 0 : i32
    %c0_i32_0 = arith.constant 0 : i32
    %c0_i32_1 = arith.constant 0 : i32
    return %c0_i32, %c0_i32_0 : i32, i32
  }
  func.func @transform_6(%arg0: i32) -> (i32, i32) {
    %c0_i32 = arith.constant 0 : i32
    %c0_i32_0 = arith.constant 0 : i32
    %c0_i32_1 = arith.constant 0 : i32
    return %c0_i32, %c0_i32_0 : i32, i32
  }
  func.func @transform_7(%arg0: i32) -> (i32, i32) {
    %c0_i32 = arith.constant 0 : i32
    %c0_i32_0 = arith.constant 0 : i32
    %c0_i32_1 = arith.constant 0 : i32
    return %c0_i32, %c0_i32_0 : i32, i32
  }
  func.func @transform_8(%arg0: i32) -> (i32, i32) {
    %c0_i32 = arith.constant 0 : i32
    %c0_i32_0 = arith.constant 0 : i32
    %c0_i32_1 = arith.constant 0 : i32
    return %c0_i32, %c0_i32_0 : i32, i32
  }
  func.func @transform_9(%arg0: i32) -> (i32, i32) {
    %c0_i32 = arith.constant 0 : i32
    %c0_i32_0 = arith.constant 0 : i32
    %c0_i32_1 = arith.constant 0 : i32
    return %c0_i32, %c0_i32_0 : i32, i32
  }
  func.func @transform_10(%arg0: i32) -> (i32, i32) {
    %c0_i32 = arith.constant 0 : i32
    %c0_i32_0 = arith.constant 0 : i32
    %c0_i32_1 = arith.constant 0 : i32
    return %c0_i32, %c0_i32_0 : i32, i32
  }
  func.func @transform_11(%arg0: i32) -> (i32, i32) {
    %c0_i32 = arith.constant 0 : i32
    %c0_i32_0 = arith.constant 0 : i32
    %c0_i32_1 = arith.constant 0 : i32
    return %c0_i32, %c0_i32_0 : i32, i32
  }
  func.func @transform_12(%arg0: i32) -> (i32, i32) {
    %c0_i32 = arith.constant 0 : i32
    %c0_i32_0 = arith.constant 0 : i32
    %c0_i32_1 = arith.constant 0 : i32
    return %c0_i32, %c0_i32_0 : i32, i32
  }
  func.func @transform_13(%arg0: i32) -> (i32, i32) {
    %c0_i32 = arith.constant 0 : i32
    %c0_i32_0 = arith.constant 0 : i32
    %c0_i32_1 = arith.constant 0 : i32
    return %c0_i32, %c0_i32_0 : i32, i32
  }
  func.func @transform_14(%arg0: i32) -> (i32, i32) {
    %c0_i32 = arith.constant 0 : i32
    %c0_i32_0 = arith.constant 0 : i32
    %c0_i32_1 = arith.constant 0 : i32
    return %c0_i32, %c0_i32_0 : i32, i32
  }
  func.func @transform_15(%arg0: i32) -> (i32, i32) {
    %c0_i32 = arith.constant 0 : i32
    %c0_i32_0 = arith.constant 0 : i32
    %c0_i32_1 = arith.constant 0 : i32
    return %c0_i32, %c0_i32_0 : i32, i32
  }
  func.func @transform_16(%arg0: i32) -> (i32, i32) {
    %c0_i32 = arith.constant 0 : i32
    %c0_i32_0 = arith.constant 0 : i32
    %c0_i32_1 = arith.constant 0 : i32
    return %c0_i32, %c0_i32_0 : i32, i32
  }
  func.func @transform_17(%arg0: i32) -> (i32, i32) {
    %c0_i32 = arith.constant 0 : i32
    %c0_i32_0 = arith.constant 0 : i32
    %c0_i32_1 = arith.constant 0 : i32
    return %c0_i32, %c0_i32_0 : i32, i32
  }
  func.func @transform_18(%arg0: i32) -> (i32, i32) {
    %c0_i32 = arith.constant 0 : i32
    %c0_i32_0 = arith.constant 0 : i32
    %c0_i32_1 = arith.constant 0 : i32
    return %c0_i32, %c0_i32_0 : i32, i32
  }
  func.func @transform_19(%arg0: i32) -> (i32, i32) {
    %c0_i32 = arith.constant 0 : i32
    %c0_i32_0 = arith.constant 0 : i32
    %c0_i32_1 = arith.constant 0 : i32
    return %c0_i32, %c0_i32_0 : i32, i32
  }
  func.func @transform_20(%arg0: i32) -> (i32, i32) {
    %c0_i32 = arith.constant 0 : i32
    %c0_i32_0 = arith.constant 0 : i32
    %c0_i32_1 = arith.constant 0 : i32
    return %c0_i32, %c0_i32_0 : i32, i32
  }
  func.func @transform_21(%arg0: i32) -> (i32, i32) {
    %c0_i32 = arith.constant 0 : i32
    %c0_i32_0 = arith.constant 0 : i32
    return %arg0, %c0_i32 : i32, i32
  }
}

</mosaic_0001>

<llo_original>
// kernel: ae_forward.1
$region0: #{ae_forward.1}
  #allocation0 [shape = 'u32[]', space=smem, size = 0x4, offset = 0x4, fixed_abs, tag = 'smem constant byte address 0x4 - core index']
  #allocation1 [shape = 'u32[144,128]{1,0:T(1,128)}', space=vmem, size = 0x12000, scoped, tag = 'internal scratch']
  %s0 = inlined_call_operand.vmem [shape: bf16[32,128], index: 0, kind: input, shape index: {}]
  %s1 = inlined_call_operand.hbm [shape: bf16[128,384], index: 1, kind: input, shape index: {}]
  %s2 = inlined_call_operand.vmem [shape: f32[1,384], index: 2, kind: input, shape index: {}]
  %s3 = inlined_call_operand.hbm [shape: bf16[384,384], index: 3, kind: input, shape index: {}]
  %s4 = inlined_call_operand.hbm [shape: f32[1,384], index: 4, kind: input, shape index: {}]
  %s5 = inlined_call_operand.hbm [shape: bf16[384,256], index: 5, kind: input, shape index: {}]
  %s6 = inlined_call_operand.hbm [shape: f32[1,256], index: 6, kind: input, shape index: {}]
  %s7 = inlined_call_operand.hbm [shape: bf16[256,128], index: 7, kind: input, shape index: {}]
  %s8 = inlined_call_operand.hbm [shape: f32[1,128], index: 8, kind: input, shape index: {}]
  %s9 = inlined_call_operand.vmem [shape: bf16[128,128], index: 9, kind: input, shape index: {}]
  %s10 = inlined_call_operand.hbm [shape: f32[1,128], index: 10, kind: input, shape index: {}]
  %s11 = inlined_call_operand.hbm [shape: bf16[128,128], index: 11, kind: input, shape index: {}]
  %s12 = inlined_call_operand.vmem [shape: f32[1,128], index: 12, kind: input, shape index: {}]
  %s13 = inlined_call_operand.hbm [shape: bf16[128,256], index: 13, kind: input, shape index: {}]
  %s14 = inlined_call_operand.vmem [shape: f32[1,256], index: 14, kind: input, shape index: {}]
  %s15 = inlined_call_operand.hbm [shape: bf16[256,384], index: 15, kind: input, shape index: {}]
  %s16 = inlined_call_operand.vmem [shape: f32[1,384], index: 16, kind: input, shape index: {}]
  %s17 = inlined_call_operand.hbm [shape: bf16[384,384], index: 17, kind: input, shape index: {}]
  %s18 = inlined_call_operand.vmem [shape: f32[1,384], index: 18, kind: input, shape index: {}]
  %s19 = inlined_call_operand.hbm [shape: bf16[384,128], index: 19, kind: input, shape index: {}]
  %s20 = inlined_call_operand.vmem [shape: f32[1,128], index: 20, kind: input, shape index: {}]
  %s21 = inlined_call_operand.vmem [shape: f32[32,128], index: 21, kind: output, shape index: {}]
  %s22 = sld [smem:[#allocation0]]
  $region169: #{ae_forward.1} parent=0
    _
  %s24 = ssub.s32 1, %s22
  %s25 = scalar_select 0, %s24, %s22
  $region1: #{ae_forward.1} parent=0
    #allocation2 [shape = 'u8[98304]{0}', space=vmem, size = 0x18000, scoped, tag = 'input window, operand 1, single buffered']
    #allocation3 [shape = 's32[2]{0}', space=sflag, size = 0x8, scoped, tag = 'scoped memory for ae_forward.1']
    #allocation4 [shape = 'u8[294912]{0}', space=vmem, size = 0x48000, scoped, tag = 'input window, operand 3, single buffered']
    #allocation5 [shape = 's32[1]{0}', space=sflag, size = 0x4, scoped, tag = 'scoped memory for ae_forward.1']
    #allocation6 [shape = 'u8[1536]{0}', space=vmem, size = 0x800, scoped, tag = 'input window, operand 4, single buffered']
    #allocation7 [shape = 'u8[196608]{0}', space=vmem, size = 0x30000, scoped, tag = 'input window, operand 5, single buffered']
    #allocation8 [shape = 's32[1]{0}', space=sflag, size = 0x4, scoped, tag = 'scoped memory for ae_forward.1']
    #allocation9 [shape = 'u8[1024]{0}', space=vmem, size = 0x400, scoped, tag = 'input window, operand 6, single buffered']
    #allocation10 [shape = 'u8[65536]{0}', space=vmem, size = 0x10000, scoped, tag = 'input window, operand 7, single buffered']
    #allocation11 [shape = 's32[1]{0}', space=sflag, size = 0x4, scoped, tag = 'scoped memory for ae_forward.1']
    #allocation12 [shape = 'u8[512]{0}', space=vmem, size = 0x400, scoped, tag = 'input window, operand 8, single buffered']
    #allocation13 [shape = 'u8[512]{0}', space=vmem, size = 0x400, scoped, tag = 'input window, operand 10, single buffered']
    #allocation14 [shape = 's32[1]{0}', space=sflag, size = 0x4, scoped, tag = 'scoped memory for ae_forward.1']
    #allocation15 [shape = 'u8[32768]{0}', space=vmem, size = 0x8000, scoped, tag = 'input window, operand 11, single buffered']
    #allocation16 [shape = 'u8[65536]{0}', space=vmem, size = 0x10000, scoped, tag = 'input window, operand 13, single buffered']
    #allocation17 [shape = 's32[1]{0}', space=sflag, size = 0x4, scoped, tag = 'scoped memory for ae_forward.1']
    #allocation18 [shape = 'u8[196608]{0}', space=vmem, size = 0x30000, scoped, tag = 'input window, operand 15, single buffered']
    #allocation19 [shape = 'u8[294912]{0}', space=vmem, size = 0x48000, scoped, tag = 'input window, operand 17, single buffered']
    #allocation20 [shape = 's32[1]{0}', space=sflag, size = 0x4, scoped, tag = 'scoped memory for ae_forward.1']
    #allocation21 [shape = 'u8[98304]{0}', space=vmem, size = 0x18000, scoped, tag = 'input window, operand 19, single buffered']
    %26 = vsyncpa [#allocation3], 0
    %27 = vsyncpa [#allocation5], 0
    %28 = vsyncpa [#allocation8], 0
    %29 = vsyncpa [#allocation11], 0
    %30 = vsyncpa [#allocation14], 0
    %31 = vsyncpa [#allocation17], 0
    %32 = vsyncpa [#allocation20], 0
    loop: start=0, step=1, limit=4
    $region2: #{ae_forward.1} parent=1 // loop_pre_header
      _
    $region3: #{ae_forward.1} parent=1 // loop_header
      %s34 = sphi 0, %s38
      %p35 = scmp.ge.s32.totalorder %s34, 4
      %s44 = sphi 0, %s46
      %s47 = sphi 0, %s44
      %s48 = sphi 0, %s47
      %s64 = sphi 0, %s48
      %s68 = sphi 0, %s68
      %s70 = sphi 0, %s68
      %s71 = sphi 0, %s70
      %s85 = sphi 0, %s71
      %s89 = sphi 0, %s89
      %s91 = sphi 0, %s89
      %s92 = sphi 0, %s91
      %s106 = sphi 0, %s92
      %s110 = sphi 0, %s110
      %s112 = sphi 0, %s110
      %s113 = sphi 0, %s112
      %s127 = sphi 0, %s113
      %s131 = sphi 0, %s131
      %s133 = sphi 0, %s131
      %s134 = sphi 0, %s133
      %s148 = sphi 0, %s134
      %s152 = sphi 0, %s152
      %s154 = sphi 0, %s152
      %s155 = sphi 0, %s154
      %s169 = sphi 0, %s155
      %s173 = sphi 0, %s173
      %s175 = sphi 0, %s173
      %s176 = sphi 0, %s175
      %s190 = sphi 0, %s176
      %s194 = sphi 0, %s194
      %s196 = sphi 0, %s194
      %s197 = sphi 0, %s196
      %s211 = sphi 0, %s197
      %s215 = sphi 0, %s215
      %s217 = sphi 0, %s215
      %s218 = sphi 0, %s217
      %s232 = sphi 0, %s218
      %s236 = sphi 0, %s236
      %s238 = sphi 0, %s236
      %s239 = sphi 0, %s238
      %s253 = sphi 0, %s239
      %s257 = sphi 0, %s257
      %s259 = sphi 0, %s257
      %s260 = sphi 0, %s259
      %s274 = sphi 0, %s260
      %s278 = sphi 0, %s278
      %s280 = sphi 0, %s278
      %s281 = sphi 0, %s280
      %s295 = sphi 0, %s281
      %s299 = sphi 0, %s299
      %s301 = sphi 0, %s299
      %s302 = sphi 0, %s301
      %s316 = sphi 0, %s302
      %s320 = sphi 0, %s320
      %s322 = sphi 0, %s320
      %s323 = sphi 0, %s322
      %s337 = sphi 0, %s323
      %s341 = sphi 0, %s341
      %s343 = sphi 0, %s341
      %s344 = sphi 0, %s343
      %s358 = sphi 0, %s344
      %s362 = sphi 0, %s362
      %s364 = sphi 0, %s362
      %s365 = sphi 0, %s364
      %s379 = sphi 0, %s365
      %s383 = sphi 0, %s383
      %s385 = sphi 0, %s383
      %s386 = sphi 0, %s385
      %s400 = sphi 0, %s386
      %s404 = sphi 0, %s404
      %s406 = sphi 0, %s404
      %s407 = sphi 0, %s406
      %s421 = sphi 0, %s407
      %s425 = sphi 0, %s425
      %s427 = sphi 0, %s425
      %s428 = sphi 0, %s427
      %s442 = sphi 0, %s428
      %s446 = sphi 0, %s446
      %s448 = sphi 0, %s446
      %s449 = sphi 0, %s448
      %s463 = sphi 0, %s449
      %s467 = sphi 0, %s467
      %s469 = sphi 0, %s467
      %s470 = sphi 0, %s469
      %s484 = sphi 0, %s470
      %s490 = sphi 0, %s492
      %s493 = sphi 0, %s490
      %s494 = sphi 0, %s493
      %s510 = sphi 0, %s494
    $region4: #{ae_forward.1} parent=1 // loop_header_branch
      %37 = sbr.rel (%p35) target = $region8
    $region5: #{ae_forward.1} parent=1 // loop_body
      %s39 = ssub.s32 %s34, 1
      %s40 = ssub.s32 %s34, 2
      %s41 = sadd.s32 %s34, 1
      %s42 = ssub.s32 %s34, %s41
      %p43 = scmp.eq.s32.totalorder %s42, 0
      %s45 = sadd.s32 %s44, 1
      %s46 = scalar_select %p43, %s44, %s45
      %p49 = pneg %p43
      %p50 = scmp.eq.s32.totalorder %s34, 1
      %p51 = por %p49, %p50
      %p52 = scmp.ne.s32.totalorder %s44, %s47
      %p53 = scmp.eq.s32.totalorder %s34, 0
      %p54 = por %p52, %p53
      %p55 = scmp.ne.s32.totalorder %s44, %s47
      %p56 = scmp.eq.s32.totalorder %s39, 1
      %p57 = por %p55, %p56
      %p58 = scmp.ne.s32.totalorder %s47, %s48
      %p59 = scmp.eq.s32.totalorder %s39, 0
      %p60 = por %p58, %p59
      %p61 = scmp.ne.s32.totalorder %s47, %s48
      %p62 = scmp.eq.s32.totalorder %s40, 1
      %p63 = por %p61, %p62
      %p65 = scmp.ne.s32.totalorder %s48, %s64
      %p66 = scmp.eq.s32.totalorder %s40, 0
      %p67 = por %p65, %p66
      %s69 = sadd.s32 %s68, 1
      %p72 = scmp.eq.s32.totalorder %s34, 1
      %p73 = scmp.ne.s32.totalorder %s68, %s70
      %p74 = scmp.eq.s32.totalorder %s34, 0
      %p75 = por %p73, %p74
      %p76 = scmp.ne.s32.totalorder %s68, %s70
      %p77 = scmp.eq.s32.totalorder %s39, 1
      %p78 = por %p76, %p77
      %p79 = scmp.ne.s32.totalorder %s70, %s71
      %p80 = scmp.eq.s32.totalorder %s39, 0
      %p81 = por %p79, %p80
      %p82 = scmp.ne.s32.totalorder %s70, %s71
      %p83 = scmp.eq.s32.totalorder %s40, 1
      %p84 = por %p82, %p83
      %p86 = scmp.ne.s32.totalorder %s71, %s85
      %p87 = scmp.eq.s32.totalorder %s40, 0
      %p88 = por %p86, %p87
      %s90 = sadd.s32 %s89, 1
      %p93 = scmp.eq.s32.totalorder %s34, 1
      %p94 = scmp.ne.s32.totalorder %s89, %s91
      %p95 = scmp.eq.s32.totalorder %s34, 0
      %p96 = por %p94, %p95
      %p97 = scmp.ne.s32.totalorder %s89, %s91
      %p98 = scmp.eq.s32.totalorder %s39, 1
      %p99 = por %p97, %p98
      %p100 = scmp.ne.s32.totalorder %s91, %s92
      %p101 = scmp.eq.s32.totalorder %s39, 0
      %p102 = por %p100, %p101
      %p103 = scmp.ne.s32.totalorder %s91, %s92
      %p104 = scmp.eq.s32.totalorder %s40, 1
      %p105 = por %p103, %p104
      %p107 = scmp.ne.s32.totalorder %s92, %s106
      %p108 = scmp.eq.s32.totalorder %s40, 0
      %p109 = por %p107, %p108
      %s111 = sadd.s32 %s110, 1
      %p114 = scmp.eq.s32.totalorder %s34, 1
      %p115 = scmp.ne.s32.totalorder %s110, %s112
      %p116 = scmp.eq.s32.totalorder %s34, 0
      %p117 = por %p115, %p116
      %p118 = scmp.ne.s32.totalorder %s110, %s112
      %p119 = scmp.eq.s32.totalorder %s39, 1
      %p120 = por %p118, %p119
      %p121 = scmp.ne.s32.totalorder %s112, %s113
      %p122 = scmp.eq.s32.totalorder %s39, 0
      %p123 = por %p121, %p122
      %p124 = scmp.ne.s32.totalorder %s112, %s113
      %p125 = scmp.eq.s32.totalorder %s40, 1
      %p126 = por %p124, %p125
      %p128 = scmp.ne.s32.totalorder %s113, %s127
      %p129 = scmp.eq.s32.totalorder %s40, 0
      %p130 = por %p128, %p129
      %s132 = sadd.s32 %s131, 1
      %p135 = scmp.eq.s32.totalorder %s34, 1
      %p136 = scmp.ne.s32.totalorder %s131, %s133
      %p137 = scmp.eq.s32.totalorder %s34, 0
      %p138 = por %p136, %p137
      %p139 = scmp.ne.s32.totalorder %s131, %s133
      %p140 = scmp.eq.s32.totalorder %s39, 1
      %p141 = por %p139, %p140
      %p142 = scmp.ne.s32.totalorder %s133, %s134
      %p143 = scmp.eq.s32.totalorder %s39, 0
      %p144 = por %p142, %p143
      %p145 = scmp.ne.s32.totalorder %s133, %s134
      %p146 = scmp.eq.s32.totalorder %s40, 1
      %p147 = por %p145, %p146
      %p149 = scmp.ne.s32.totalorder %s134, %s148
      %p150 = scmp.eq.s32.totalorder %s40, 0
      %p151 = por %p149, %p150
      %s153 = sadd.s32 %s152, 1
      %p156 = scmp.eq.s32.totalorder %s34, 1
      %p157 = scmp.ne.s32.totalorder %s152, %s154
      %p158 = scmp.eq.s32.totalorder %s34, 0
      %p159 = por %p157, %p158
      %p160 = scmp.ne.s32.totalorder %s152, %s154
      %p161 = scmp.eq.s32.totalorder %s39, 1
      %p162 = por %p160, %p161
      %p163 = scmp.ne.s32.totalorder %s154, %s155
      %p164 = scmp.eq.s32.totalorder %s39, 0
      %p165 = por %p163, %p164
      %p166 = scmp.ne.s32.totalorder %s154, %s155
      %p167 = scmp.eq.s32.totalorder %s40, 1
      %p168 = por %p166, %p167
      %p170 = scmp.ne.s32.totalorder %s155, %s169
      %p171 = scmp.eq.s32.totalorder %s40, 0
      %p172 = por %p170, %p171
      %s174 = sadd.s32 %s173, 1
      %p177 = scmp.eq.s32.totalorder %s34, 1
      %p178 = scmp.ne.s32.totalorder %s173, %s175
      %p179 = scmp.eq.s32.totalorder %s34, 0
      %p180 = por %p178, %p179
      %p181 = scmp.ne.s32.totalorder %s173, %s175
      %p182 = scmp.eq.s32.totalorder %s39, 1
      %p183 = por %p181, %p182
      %p184 = scmp.ne.s32.totalorder %s175, %s176
      %p185 = scmp.eq.s32.totalorder %s39, 0
      %p186 = por %p184, %p185
      %p187 = scmp.ne.s32.totalorder %s175, %s176
      %p188 = scmp.eq.s32.totalorder %s40, 1
      %p189 = por %p187, %p188
      %p191 = scmp.ne.s32.totalorder %s176, %s190
      %p192 = scmp.eq.s32.totalorder %s40, 0
      %p193 = por %p191, %p192
      %s195 = sadd.s32 %s194, 1
      %p198 = scmp.eq.s32.totalorder %s34, 1
      %p199 = scmp.ne.s32.totalorder %s194, %s196
      %p200 = scmp.eq.s32.totalorder %s34, 0
      %p201 = por %p199, %p200
      %p202 = scmp.ne.s32.totalorder %s194, %s196
      %p203 = scmp.eq.s32.totalorder %s39, 1
      %p204 = por %p202, %p203
      %p205 = scmp.ne.s32.totalorder %s196, %s197
      %p206 = scmp.eq.s32.totalorder %s39, 0
      %p207 = por %p205, %p206
      %p208 = scmp.ne.s32.totalorder %s196, %s197
      %p209 = scmp.eq.s32.totalorder %s40, 1
      %p210 = por %p208, %p209
      %p212 = scmp.ne.s32.totalorder %s197, %s211
      %p213 = scmp.eq.s32.totalorder %s40, 0
      %p214 = por %p212, %p213
      %s216 = sadd.s32 %s215, 1
      %p219 = scmp.eq.s32.totalorder %s34, 1
      %p220 = scmp.ne.s32.totalorder %s215, %s217
      %p221 = scmp.eq.s32.totalorder %s34, 0
      %p222 = por %p220, %p221
      %p223 = scmp.ne.s32.totalorder %s215, %s217
      %p224 = scmp.eq.s32.totalorder %s39, 1
      %p225 = por %p223, %p224
      %p226 = scmp.ne.s32.totalorder %s217, %s218
      %p227 = scmp.eq.s32.totalorder %s39, 0
      %p228 = por %p226, %p227
      %p229 = scmp.ne.s32.totalorder %s217, %s218
      %p230 = scmp.eq.s32.totalorder %s40, 1
      %p231 = por %p229, %p230
      %p233 = scmp.ne.s32.totalorder %s218, %s232
      %p234 = scmp.eq.s32.totalorder %s40, 0
      %p235 = por %p233, %p234
      %s237 = sadd.s32 %s236, 1
      %p240 = scmp.eq.s32.totalorder %s34, 1
      %p241 = scmp.ne.s32.totalorder %s236, %s238
      %p242 = scmp.eq.s32.totalorder %s34, 0
      %p243 = por %p241, %p242
      %p244 = scmp.ne.s32.totalorder %s236, %s238
      %p245 = scmp.eq.s32.totalorder %s39, 1
      %p246 = por %p244, %p245
      %p247 = scmp.ne.s32.totalorder %s238, %s239
      %p248 = scmp.eq.s32.totalorder %s39, 0
      %p249 = por %p247, %p248
      %p250 = scmp.ne.s32.totalorder %s238, %s239
      %p251 = scmp.eq.s32.totalorder %s40, 1
      %p252 = por %p250, %p251
      %p254 = scmp.ne.s32.totalorder %s239, %s253
      %p255 = scmp.eq.s32.totalorder %s40, 0
      %p256 = por %p254, %p255
      %s258 = sadd.s32 %s257, 1
      %p261 = scmp.eq.s32.totalorder %s34, 1
      %p262 = scmp.ne.s32.totalorder %s257, %s259
      %p263 = scmp.eq.s32.totalorder %s34, 0
      %p264 = por %p262, %p263
      %p265 = scmp.ne.s32.totalorder %s257, %s259
      %p266 = scmp.eq.s32.totalorder %s39, 1
      %p267 = por %p265, %p266
      %p268 = scmp.ne.s32.totalorder %s259, %s260
      %p269 = scmp.eq.s32.totalorder %s39, 0
      %p270 = por %p268, %p269
      %p271 = scmp.ne.s32.totalorder %s259, %s260
      %p272 = scmp.eq.s32.totalorder %s40, 1
      %p273 = por %p271, %p272
      %p275 = scmp.ne.s32.totalorder %s260, %s274
      %p276 = scmp.eq.s32.totalorder %s40, 0
      %p277 = por %p275, %p276
      %s279 = sadd.s32 %s278, 1
      %p282 = scmp.eq.s32.totalorder %s34, 1
      %p283 = scmp.ne.s32.totalorder %s278, %s280
      %p284 = scmp.eq.s32.totalorder %s34, 0
      %p285 = por %p283, %p284
      %p286 = scmp.ne.s32.totalorder %s278, %s280
      %p287 = scmp.eq.s32.totalorder %s39, 1
      %p288 = por %p286, %p287
      %p289 = scmp.ne.s32.totalorder %s280, %s281
      %p290 = scmp.eq.s32.totalorder %s39, 0
      %p291 = por %p289, %p290
      %p292 = scmp.ne.s32.totalorder %s280, %s281
      %p293 = scmp.eq.s32.totalorder %s40, 1
      %p294 = por %p292, %p293
      %p296 = scmp.ne.s32.totalorder %s281, %s295
      %p297 = scmp.eq.s32.totalorder %s40, 0
      %p298 = por %p296, %p297
      %s300 = sadd.s32 %s299, 1
      %p303 = scmp.eq.s32.totalorder %s34, 1
      %p304 = scmp.ne.s32.totalorder %s299, %s301
      %p305 = scmp.eq.s32.totalorder %s34, 0
      %p306 = por %p304, %p305
      %p307 = scmp.ne.s32.totalorder %s299, %s301
      %p308 = scmp.eq.s32.totalorder %s39, 1
      %p309 = por %p307, %p308
      %p310 = scmp.ne.s32.totalorder %s301, %s302
      %p311 = scmp.eq.s32.totalorder %s39, 0
      %p312 = por %p310, %p311
      %p313 = scmp.ne.s32.totalorder %s301, %s302
      %p314 = scmp.eq.s32.totalorder %s40, 1
      %p315 = por %p313, %p314
      %p317 = scmp.ne.s32.totalorder %s302, %s316
      %p318 = scmp.eq.s32.totalorder %s40, 0
      %p319 = por %p317, %p318
      %s321 = sadd.s32 %s320, 1
      %p324 = scmp.eq.s32.totalorder %s34, 1
      %p325 = scmp.ne.s32.totalorder %s320, %s322
      %p326 = scmp.eq.s32.totalorder %s34, 0
      %p327 = por %p325, %p326
      %p328 = scmp.ne.s32.totalorder %s320, %s322
      %p329 = scmp.eq.s32.totalorder %s39, 1
      %p330 = por %p328, %p329
      %p331 = scmp.ne.s32.totalorder %s322, %s323
      %p332 = scmp.eq.s32.totalorder %s39, 0
      %p333 = por %p331, %p332
      %p334 = scmp.ne.s32.totalorder %s322, %s323
      %p335 = scmp.eq.s32.totalorder %s40, 1
      %p336 = por %p334, %p335
      %p338 = scmp.ne.s32.totalorder %s323, %s337
      %p339 = scmp.eq.s32.totalorder %s40, 0
      %p340 = por %p338, %p339
      %s342 = sadd.s32 %s341, 1
      %p345 = scmp.eq.s32.totalorder %s34, 1
      %p346 = scmp.ne.s32.totalorder %s341, %s343
      %p347 = scmp.eq.s32.totalorder %s34, 0
      %p348 = por %p346, %p347
      %p349 = scmp.ne.s32.totalorder %s341, %s343
      %p350 = scmp.eq.s32.totalorder %s39, 1
      %p351 = por %p349, %p350
      %p352 = scmp.ne.s32.totalorder %s343, %s344
      %p353 = scmp.eq.s32.totalorder %s39, 0
      %p354 = por %p352, %p353
      %p355 = scmp.ne.s32.totalorder %s343, %s344
      %p356 = scmp.eq.s32.totalorder %s40, 1
      %p357 = por %p355, %p356
      %p359 = scmp.ne.s32.totalorder %s344, %s358
      %p360 = scmp.eq.s32.totalorder %s40, 0
      %p361 = por %p359, %p360
      %s363 = sadd.s32 %s362, 1
      %p366 = scmp.eq.s32.totalorder %s34, 1
      %p367 = scmp.ne.s32.totalorder %s362, %s364
      %p368 = scmp.eq.s32.totalorder %s34, 0
      %p369 = por %p367, %p368
      %p370 = scmp.ne.s32.totalorder %s362, %s364
      %p371 = scmp.eq.s32.totalorder %s39, 1
      %p372 = por %p370, %p371
      %p373 = scmp.ne.s32.totalorder %s364, %s365
      %p374 = scmp.eq.s32.totalorder %s39, 0
      %p375 = por %p373, %p374
      %p376 = scmp.ne.s32.totalorder %s364, %s365
      %p377 = scmp.eq.s32.totalorder %s40, 1
      %p378 = por %p376, %p377
      %p380 = scmp.ne.s32.totalorder %s365, %s379
      %p381 = scmp.eq.s32.totalorder %s40, 0
      %p382 = por %p380, %p381
      %s384 = sadd.s32 %s383, 1
      %p387 = scmp.eq.s32.totalorder %s34, 1
      %p388 = scmp.ne.s32.totalorder %s383, %s385
      %p389 = scmp.eq.s32.totalorder %s34, 0
      %p390 = por %p388, %p389
      %p391 = scmp.ne.s32.totalorder %s383, %s385
      %p392 = scmp.eq.s32.totalorder %s39, 1
      %p393 = por %p391, %p392
      %p394 = scmp.ne.s32.totalorder %s385, %s386
      %p395 = scmp.eq.s32.totalorder %s39, 0
      %p396 = por %p394, %p395
      %p397 = scmp.ne.s32.totalorder %s385, %s386
      %p398 = scmp.eq.s32.totalorder %s40, 1
      %p399 = por %p397, %p398
      %p401 = scmp.ne.s32.totalorder %s386, %s400
      %p402 = scmp.eq.s32.totalorder %s40, 0
      %p403 = por %p401, %p402
      %s405 = sadd.s32 %s404, 1
      %p408 = scmp.eq.s32.totalorder %s34, 1
      %p409 = scmp.ne.s32.totalorder %s404, %s406
      %p410 = scmp.eq.s32.totalorder %s34, 0
      %p411 = por %p409, %p410
      %p412 = scmp.ne.s32.totalorder %s404, %s406
      %p413 = scmp.eq.s32.totalorder %s39, 1
      %p414 = por %p412, %p413
      %p415 = scmp.ne.s32.totalorder %s406, %s407
      %p416 = scmp.eq.s32.totalorder %s39, 0
      %p417 = por %p415, %p416
      %p418 = scmp.ne.s32.totalorder %s406, %s407
      %p419 = scmp.eq.s32.totalorder %s40, 1
      %p420 = por %p418, %p419
      %p422 = scmp.ne.s32.totalorder %s407, %s421
      %p423 = scmp.eq.s32.totalorder %s40, 0
      %p424 = por %p422, %p423
      %s426 = sadd.s32 %s425, 1
      %p429 = scmp.eq.s32.totalorder %s34, 1
      %p430 = scmp.ne.s32.totalorder %s425, %s427
      %p431 = scmp.eq.s32.totalorder %s34, 0
      %p432 = por %p430, %p431
      %p433 = scmp.ne.s32.totalorder %s425, %s427
      %p434 = scmp.eq.s32.totalorder %s39, 1
      %p435 = por %p433, %p434
      %p436 = scmp.ne.s32.totalorder %s427, %s428
      %p437 = scmp.eq.s32.totalorder %s39, 0
      %p438 = por %p436, %p437
      %p439 = scmp.ne.s32.totalorder %s427, %s428
      %p440 = scmp.eq.s32.totalorder %s40, 1
      %p441 = por %p439, %p440
      %p443 = scmp.ne.s32.totalorder %s428, %s442
      %p444 = scmp.eq.s32.totalorder %s40, 0
      %p445 = por %p443, %p444
      %s447 = sadd.s32 %s446, 1
      %p450 = scmp.eq.s32.totalorder %s34, 1
      %p451 = scmp.ne.s32.totalorder %s446, %s448
      %p452 = scmp.eq.s32.totalorder %s34, 0
      %p453 = por %p451, %p452
      %p454 = scmp.ne.s32.totalorder %s446, %s448
      %p455 = scmp.eq.s32.totalorder %s39, 1
      %p456 = por %p454, %p455
      %p457 = scmp.ne.s32.totalorder %s448, %s449
      %p458 = scmp.eq.s32.totalorder %s39, 0
      %p459 = por %p457, %p458
      %p460 = scmp.ne.s32.totalorder %s448, %s449
      %p461 = scmp.eq.s32.totalorder %s40, 1
      %p462 = por %p460, %p461
      %p464 = scmp.ne.s32.totalorder %s449, %s463
      %p465 = scmp.eq.s32.totalorder %s40, 0
      %p466 = por %p464, %p465
      %s468 = sadd.s32 %s467, 1
      %p471 = scmp.eq.s32.totalorder %s34, 1
      %p472 = scmp.ne.s32.totalorder %s467, %s469
      %p473 = scmp.eq.s32.totalorder %s34, 0
      %p474 = por %p472, %p473
      %p475 = scmp.ne.s32.totalorder %s467, %s469
      %p476 = scmp.eq.s32.totalorder %s39, 1
      %p477 = por %p475, %p476
      %p478 = scmp.ne.s32.totalorder %s469, %s470
      %p479 = scmp.eq.s32.totalorder %s39, 0
      %p480 = por %p478, %p479
      %p481 = scmp.ne.s32.totalorder %s469, %s470
      %p482 = scmp.eq.s32.totalorder %s40, 1
      %p483 = por %p481, %p482
      %p485 = scmp.ne.s32.totalorder %s470, %s484
      %p486 = scmp.eq.s32.totalorder %s40, 0
      %p487 = por %p485, %p486
      %s488 = ssub.s32 %s34, %s41
      %p489 = scmp.eq.s32.totalorder %s488, 0
      %s491 = sadd.s32 %s490, 1
      %s492 = scalar_select %p489, %s490, %s491
      %p495 = pneg %p489
      %p496 = scmp.eq.s32.totalorder %s34, 1
      %p497 = por %p495, %p496
      %p498 = scmp.ne.s32.totalorder %s490, %s493
      %p499 = scmp.eq.s32.totalorder %s34, 0
      %p500 = por %p498, %p499
      %p501 = scmp.ne.s32.totalorder %s490, %s493
      %p502 = scmp.eq.s32.totalorder %s39, 1
      %p503 = por %p501, %p502
      %p504 = scmp.ne.s32.totalorder %s493, %s494
      %p505 = scmp.eq.s32.totalorder %s39, 0
      %p506 = por %p504, %p505
      %p507 = scmp.ne.s32.totalorder %s493, %s494
      %p508 = scmp.eq.s32.totalorder %s40, 1
      %p509 = por %p507, %p508
      %p511 = scmp.ne.s32.totalorder %s494, %s510
      %p512 = scmp.eq.s32.totalorder %s40, 0
      %p513 = por %p511, %p512
      %p514 = scmp.le.s32.totalorder 1, %s34
      %p515 = scmp.lt.s32.totalorder %s34, 3
      %p516 = pnand %p514, %p515
      %p517 = pneg %p516
      // Predicated region
      $region9: #{ae_forward.1} parent=5 // pred_check
        _
      $region10: #{ae_forward.1} parent=5 // pred_check_branch
        %519 = sbr.rel (%p516) target = $region12
      $region11: #{ae_forward.1} parent=5 // pred_region
        %s520 = ssub.s32 %s34, 1
        // Predicated region
        $region13: #{ae_forward.1} parent=11 // pred_check
          %p521 = pneg %p81
        $region14: #{ae_forward.1} parent=11 // pred_check_branch
          %523 = sbr.rel (%p521) target = $region16
        $region15: #{ae_forward.1} parent=11 // pred_region
          %s525 = ssub.s32 3072, 3072
          %526 = vsyncadd [#allocation3], %s525
          %s527 = sshll.u32 [#allocation2], 4
          %s528 = int_to_ptr.vmem [resolvable:$true] %s527
          %533 = dma.hbm_to_vmem [thread:$0]  %s1, 3072, %s528, [#allocation3], 192, 192, 12
        $region16: #{ae_forward.1} parent=11 // pred_fallthru
          _
        // Predicated region
        $region17: #{ae_forward.1} parent=11 // pred_check
          %p534 = pneg %p102
        $region18: #{ae_forward.1} parent=11 // pred_check_branch
          %536 = sbr.rel (%p534) target = $region20
        $region19: #{ae_forward.1} parent=11 // pred_region
          _
        $region20: #{ae_forward.1} parent=11 // pred_fallthru
          _
        // Predicated region
        $region21: #{ae_forward.1} parent=11 // pred_check
          %p537 = pneg %p123
        $region22: #{ae_forward.1} parent=11 // pred_check_branch
          %539 = sbr.rel (%p537) target = $region24
        $region23: #{ae_forward.1} parent=11 // pred_region
          %s541 = ssub.s32 9216, 9216
          %542 = vsyncadd [#allocation5], %s541
          %s543 = sshll.u32 [#allocation4], 4
          %s544 = int_to_ptr.vmem [resolvable:$true] %s543
          %549 = dma.hbm_to_vmem [thread:$0]  %s3, 9216, %s544, [#allocation5], 192, 192, 12
        $region24: #{ae_forward.1} parent=11 // pred_fallthru
          _
        // Predicated region
        $region25: #{ae_forward.1} parent=11 // pred_check
          %p550 = pneg %p144
        $region26: #{ae_forward.1} parent=11 // pred_check_branch
          %552 = sbr.rel (%p550) target = $region28
        $region27: #{ae_forward.1} parent=11 // pred_region
          %s554 = ssub.s32 48, 48
          %555 = vsyncadd [#allocation5], %s554
          %s557 = sshll.u32 [#allocation6], 4
          %s558 = int_to_ptr.vmem [resolvable:$true] %s557
          %560 = dma.hbm_to_vmem [thread:$0]  %s4, 48, %s558, [#allocation5]
        $region28: #{ae_forward.1} parent=11 // pred_fallthru
          _
        // Predicated region
        $region29: #{ae_forward.1} parent=11 // pred_check
          %p561 = pneg %p165
        $region30: #{ae_forward.1} parent=11 // pred_check_branch
          %563 = sbr.rel (%p561) target = $region32
        $region31: #{ae_forward.1} parent=11 // pred_region
          %s565 = ssub.s32 6144, 6144
          %566 = vsyncadd [#allocation8], %s565
          %s567 = sshll.u32 [#allocation7], 4
          %s568 = int_to_ptr.vmem [resolvable:$true] %s567
          %573 = dma.hbm_to_vmem [thread:$0]  %s5, 6144, %s568, [#allocation8], 128, 128, 8
        $region32: #{ae_forward.1} parent=11 // pred_fallthru
          _
        // Predicated region
        $region33: #{ae_forward.1} parent=11 // pred_check
          %p574 = pneg %p186
        $region34: #{ae_forward.1} parent=11 // pred_check_branch
          %576 = sbr.rel (%p574) target = $region36
        $region35: #{ae_forward.1} parent=11 // pred_region
          %s578 = ssub.s32 32, 32
          %579 = vsyncadd [#allocation8], %s578
          %s581 = sshll.u32 [#allocation9], 4
          %s582 = int_to_ptr.vmem [resolvable:$true] %s581
          %584 = dma.hbm_to_vmem [thread:$0]  %s6, 32, %s582, [#allocation8]
        $region36: #{ae_forward.1} parent=11 // pred_fallthru
          _
        // Predicated region
        $region37: #{ae_forward.1} parent=11 // pred_check
          %p585 = pneg %p207
        $region38: #{ae_forward.1} parent=11 // pred_check_branch
          %587 = sbr.rel (%p585) target = $region40
        $region39: #{ae_forward.1} parent=11 // pred_region
          %s589 = ssub.s32 2048, 2048
          %590 = vsyncadd [#allocation11], %s589
          %s591 = sshll.u32 [#allocation10], 4
          %s592 = int_to_ptr.vmem [resolvable:$true] %s591
          %597 = dma.hbm_to_vmem [thread:$0]  %s7, 2048, %s592, [#allocation11], 64, 64, 4
        $region40: #{ae_forward.1} parent=11 // pred_fallthru
          _
        // Predicated region
        $region41: #{ae_forward.1} parent=11 // pred_check
          %p598 = pneg %p228
        $region42: #{ae_forward.1} parent=11 // pred_check_branch
          %600 = sbr.rel (%p598) target = $region44
        $region43: #{ae_forward.1} parent=11 // pred_region
          %s602 = ssub.s32 16, 16
          %603 = vsyncadd [#allocation11], %s602
          %s605 = sshll.u32 [#allocation12], 4
          %s606 = int_to_ptr.vmem [resolvable:$true] %s605
          %608 = dma.hbm_to_vmem [thread:$0]  %s8, 16, %s606, [#allocation11]
        $region44: #{ae_forward.1} parent=11 // pred_fallthru
          _
        // Predicated region
        $region45: #{ae_forward.1} parent=11 // pred_check
          %p609 = pneg %p249
        $region46: #{ae_forward.1} parent=11 // pred_check_branch
          %611 = sbr.rel (%p609) target = $region48
        $region47: #{ae_forward.1} parent=11 // pred_region
          _
        $region48: #{ae_forward.1} parent=11 // pred_fallthru
          _
        // Predicated region
        $region49: #{ae_forward.1} parent=11 // pred_check
          %p612 = pneg %p270
        $region50: #{ae_forward.1} parent=11 // pred_check_branch
          %614 = sbr.rel (%p612) target = $region52
        $region51: #{ae_forward.1} parent=11 // pred_region
          %s616 = ssub.s32 16, 16
          %617 = vsyncadd [#allocation14], %s616
          %s619 = sshll.u32 [#allocation13], 4
          %s620 = int_to_ptr.vmem [resolvable:$true] %s619
          %622 = dma.hbm_to_vmem [thread:$0]  %s10, 16, %s620, [#allocation14]
        $region52: #{ae_forward.1} parent=11 // pred_fallthru
          _
        // Predicated region
        $region53: #{ae_forward.1} parent=11 // pred_check
          %p623 = pneg %p291
        $region54: #{ae_forward.1} parent=11 // pred_check_branch
          %625 = sbr.rel (%p623) target = $region56
        $region55: #{ae_forward.1} parent=11 // pred_region
          %s627 = ssub.s32 1024, 1024
          %628 = vsyncadd [#allocation14], %s627
          %s629 = sshll.u32 [#allocation15], 4
          %s630 = int_to_ptr.vmem [resolvable:$true] %s629
          %635 = dma.hbm_to_vmem [thread:$0]  %s11, 1024, %s630, [#allocation14], 64, 64, 4
        $region56: #{ae_forward.1} parent=11 // pred_fallthru
          _
        // Predicated region
        $region57: #{ae_forward.1} parent=11 // pred_check
          %p636 = pneg %p312
        $region58: #{ae_forward.1} parent=11 // pred_check_branch
          %638 = sbr.rel (%p636) target = $region60
        $region59: #{ae_forward.1} parent=11 // pred_region
          _
        $region60: #{ae_forward.1} parent=11 // pred_fallthru
          _
        // Predicated region
        $region61: #{ae_forward.1} parent=11 // pred_check
          %p639 = pneg %p333
        $region62: #{ae_forward.1} parent=11 // pred_check_branch
          %641 = sbr.rel (%p639) target = $region64
        $region63: #{ae_forward.1} parent=11 // pred_region
          %s643 = ssub.s32 2048, 2048
          %644 = vsyncadd [#allocation17], %s643
          %s645 = sshll.u32 [#allocation16], 4
          %s646 = int_to_ptr.vmem [resolvable:$true] %s645
          %651 = dma.hbm_to_vmem [thread:$0]  %s13, 2048, %s646, [#allocation17], 128, 128, 8
        $region64: #{ae_forward.1} parent=11 // pred_fallthru
          _
        // Predicated region
        $region65: #{ae_forward.1} parent=11 // pred_check
          %p652 = pneg %p354
        $region66: #{ae_forward.1} parent=11 // pred_check_branch
          %654 = sbr.rel (%p652) target = $region68
        $region67: #{ae_forward.1} parent=11 // pred_region
          _
        $region68: #{ae_forward.1} parent=11 // pred_fallthru
          _
        // Predicated region
        $region69: #{ae_forward.1} parent=11 // pred_check
          %p655 = pneg %p375
        $region70: #{ae_forward.1} parent=11 // pred_check_branch
          %657 = sbr.rel (%p655) target = $region72
        $region71: #{ae_forward.1} parent=11 // pred_region
          %s659 = ssub.s32 6144, 6144
          %660 = vsyncadd [#allocation17], %s659
          %s661 = sshll.u32 [#allocation18], 4
          %s662 = int_to_ptr.vmem [resolvable:$true] %s661
          %667 = dma.hbm_to_vmem [thread:$0]  %s15, 6144, %s662, [#allocation17], 192, 192, 12
        $region72: #{ae_forward.1} parent=11 // pred_fallthru
          _
        // Predicated region
        $region73: #{ae_forward.1} parent=11 // pred_check
          %p668 = pneg %p396
        $region74: #{ae_forward.1} parent=11 // pred_check_branch
          %670 = sbr.rel (%p668) target = $region76
        $region75: #{ae_forward.1} parent=11 // pred_region
          _
        $region76: #{ae_forward.1} parent=11 // pred_fallthru
          _
        // Predicated region
        $region77: #{ae_forward.1} parent=11 // pred_check
          %p671 = pneg %p417
        $region78: #{ae_forward.1} parent=11 // pred_check_branch
          %673 = sbr.rel (%p671) target = $region80
        $region79: #{ae_forward.1} parent=11 // pred_region
          %s675 = ssub.s32 9216, 9216
          %676 = vsyncadd [#allocation20], %s675
          %s677 = sshll.u32 [#allocation19], 4
          %s678 = int_to_ptr.vmem [resolvable:$true] %s677
          %683 = dma.hbm_to_vmem [thread:$0]  %s17, 9216, %s678, [#allocation20], 192, 192, 12
        $region80: #{ae_forward.1} parent=11 // pred_fallthru
          _
        // Predicated region
        $region81: #{ae_forward.1} parent=11 // pred_check
          %p684 = pneg %p438
        $region82: #{ae_forward.1} parent=11 // pred_check_branch
          %686 = sbr.rel (%p684) target = $region84
        $region83: #{ae_forward.1} parent=11 // pred_region
          _
        $region84: #{ae_forward.1} parent=11 // pred_fallthru
          _
        // Predicated region
        $region85: #{ae_forward.1} parent=11 // pred_check
          %p687 = pneg %p459
        $region86: #{ae_forward.1} parent=11 // pred_check_branch
          %689 = sbr.rel (%p687) target = $region88
        $region87: #{ae_forward.1} parent=11 // pred_region
          %s691 = ssub.s32 3072, 3072
          %692 = vsyncadd [#allocation20], %s691
          %s693 = sshll.u32 [#allocation21], 4
          %s694 = int_to_ptr.vmem [resolvable:$true] %s693
          %699 = dma.hbm_to_vmem [thread:$0]  %s19, 3072, %s694, [#allocation20], 64, 64, 4
        $region88: #{ae_forward.1} parent=11 // pred_fallthru
          _
        // Predicated region
        $region89: #{ae_forward.1} parent=11 // pred_check
          %p700 = pneg %p480
        $region90: #{ae_forward.1} parent=11 // pred_check_branch
          %702 = sbr.rel (%p700) target = $region92
        $region91: #{ae_forward.1} parent=11 // pred_region
          _
        $region92: #{ae_forward.1} parent=11 // pred_fallthru
          _
      $region12: #{ae_forward.1} parent=5 // pred_fallthru
        _
      %p703 = scmp.lt.s32.totalorder %s34, 2
      // Predicated region
      $region93: #{ae_forward.1} parent=5 // pred_check
        %p704 = pneg %p703
      $region94: #{ae_forward.1} parent=5 // pred_check_branch
        %706 = sbr.rel (%p704) target = $region96
      $region95: #{ae_forward.1} parent=5 // pred_region
        // Predicated region
        $region97: #{ae_forward.1} parent=95 // pred_check
          %p707 = pneg %p54
        $region98: #{ae_forward.1} parent=95 // pred_check_branch
          %709 = sbr.rel (%p707) target = $region100
        $region99: #{ae_forward.1} parent=95 // pred_region
          %s710 = smul.u32 2, %s34
          %p711 = scmp.lt.s32.totalorder %s710, 3
          %s712 = scalar_select %p711, %s710, 3
          %s713 = smul.addr %s712, 4
          %s714 = scalar_lea.vmem %s0, %s713
          %s715 = smul.u32 2, %s34
        $region100: #{ae_forward.1} parent=95 // pred_fallthru
          _
      $region96: #{ae_forward.1} parent=5 // pred_fallthru
        _
      %p716 = scmp.le.s32.totalorder 1, %s34
      %p717 = scmp.lt.s32.totalorder %s34, 3
      %p718 = pnand %p716, %p717
      %p719 = pneg %p718
      // Predicated region
      $region101: #{ae_forward.1} parent=5 // pred_check
        _
      $region102: #{ae_forward.1} parent=5 // pred_check_branch
        %721 = sbr.rel (%p718) target = $region104
      $region103: #{ae_forward.1} parent=5 // pred_region
        %s722 = ssub.s32 %s34, 1
        // Predicated region
        $region105: #{ae_forward.1} parent=103 // pred_check
          %p723 = pneg %p81
        $region106: #{ae_forward.1} parent=103 // pred_check_branch
          %725 = sbr.rel (%p723) target = $region108
        $region107: #{ae_forward.1} parent=103 // pred_region
          %726 = dma.done [#allocation3], 3072
        $region108: #{ae_forward.1} parent=103 // pred_fallthru
          _
        // Predicated region
        $region109: #{ae_forward.1} parent=103 // pred_check
          %p727 = pneg %p123
        $region110: #{ae_forward.1} parent=103 // pred_check_branch
          %729 = sbr.rel (%p727) target = $region112
        $region111: #{ae_forward.1} parent=103 // pred_region
          %730 = dma.done [#allocation5], 9216
        $region112: #{ae_forward.1} parent=103 // pred_fallthru
          _
        // Predicated region
        $region113: #{ae_forward.1} parent=103 // pred_check
          %p731 = pneg %p144
        $region114: #{ae_forward.1} parent=103 // pred_check_branch
          %733 = sbr.rel (%p731) target = $region116
        $region115: #{ae_forward.1} parent=103 // pred_region
          %734 = dma.done [#allocation5], 48
        $region116: #{ae_forward.1} parent=103 // pred_fallthru
          _
        // Predicated region
        $region117: #{ae_forward.1} parent=103 // pred_check
          %p735 = pneg %p165
        $region118: #{ae_forward.1} parent=103 // pred_check_branch
          %737 = sbr.rel (%p735) target = $region120
        $region119: #{ae_forward.1} parent=103 // pred_region
          %738 = dma.done [#allocation8], 6144
        $region120: #{ae_forward.1} parent=103 // pred_fallthru
          _
        // Predicated region
        $region121: #{ae_forward.1} parent=103 // pred_check
          %p739 = pneg %p186
        $region122: #{ae_forward.1} parent=103 // pred_check_branch
          %741 = sbr.rel (%p739) target = $region124
        $region123: #{ae_forward.1} parent=103 // pred_region
          %742 = dma.done [#allocation8], 32
        $region124: #{ae_forward.1} parent=103 // pred_fallthru
          _
        // Predicated region
        $region125: #{ae_forward.1} parent=103 // pred_check
          %p743 = pneg %p207
        $region126: #{ae_forward.1} parent=103 // pred_check_branch
          %745 = sbr.rel (%p743) target = $region128
        $region127: #{ae_forward.1} parent=103 // pred_region
          %746 = dma.done [#allocation11], 2048
        $region128: #{ae_forward.1} parent=103 // pred_fallthru
          _
        // Predicated region
        $region129: #{ae_forward.1} parent=103 // pred_check
          %p747 = pneg %p228
        $region130: #{ae_forward.1} parent=103 // pred_check_branch
          %749 = sbr.rel (%p747) target = $region132
        $region131: #{ae_forward.1} parent=103 // pred_region
          %750 = dma.done [#allocation11], 16
        $region132: #{ae_forward.1} parent=103 // pred_fallthru
          _
        // Predicated region
        $region133: #{ae_forward.1} parent=103 // pred_check
          %p751 = pneg %p270
        $region134: #{ae_forward.1} parent=103 // pred_check_branch
          %753 = sbr.rel (%p751) target = $region136
        $region135: #{ae_forward.1} parent=103 // pred_region
          %754 = dma.done [#allocation14], 16
        $region136: #{ae_forward.1} parent=103 // pred_fallthru
          _
        // Predicated region
        $region137: #{ae_forward.1} parent=103 // pred_check
          %p755 = pneg %p291
        $region138: #{ae_forward.1} parent=103 // pred_check_branch
          %757 = sbr.rel (%p755) target = $region140
        $region139: #{ae_forward.1} parent=103 // pred_region
          %758 = dma.done [#allocation14], 1024
        $region140: #{ae_forward.1} parent=103 // pred_fallthru
          _
        // Predicated region
        $region141: #{ae_forward.1} parent=103 // pred_check
          %p759 = pneg %p333
        $region142: #{ae_forward.1} parent=103 // pred_check_branch
          %761 = sbr.rel (%p759) target = $region144
        $region143: #{ae_forward.1} parent=103 // pred_region
          %762 = dma.done [#allocation17], 2048
        $region144: #{ae_forward.1} parent=103 // pred_fallthru
          _
        // Predicated region
        $region145: #{ae_forward.1} parent=103 // pred_check
          %p763 = pneg %p375
        $region146: #{ae_forward.1} parent=103 // pred_check_branch
          %765 = sbr.rel (%p763) target = $region148
        $region147: #{ae_forward.1} parent=103 // pred_region
          %766 = dma.done [#allocation17], 6144
        $region148: #{ae_forward.1} parent=103 // pred_fallthru
          _
        // Predicated region
        $region149: #{ae_forward.1} parent=103 // pred_check
          %p767 = pneg %p417
        $region150: #{ae_forward.1} parent=103 // pred_check_branch
          %769 = sbr.rel (%p767) target = $region152
        $region151: #{ae_forward.1} parent=103 // pred_region
          %770 = dma.done [#allocation20], 9216
        $region152: #{ae_forward.1} parent=103 // pred_fallthru
          _
        // Predicated region
        $region153: #{ae_forward.1} parent=103 // pred_check
          %p771 = pneg %p459
        $region154: #{ae_forward.1} parent=103 // pred_check_branch
          %773 = sbr.rel (%p771) target = $region156
        $region155: #{ae_forward.1} parent=103 // pred_region
          %774 = dma.done [#allocation20], 3072
        $region156: #{ae_forward.1} parent=103 // pred_fallthru
          _
        %s775 = smul.u32 2, %s39
        %p776 = scmp.lt.s32.totalorder %s775, 3
        %s777 = scalar_select %p776, %s775, 3
        %s778 = smul.addr %s777, 4
        %s779 = scalar_lea.vmem %s0, %s778
        %p780 = pneg %p60
        %p781 = pneg %p57
        %p782 = pneg %p81
        %p783 = pneg %p78
        %p784 = pneg %p102
        %p785 = pneg %p99
        %p786 = pneg %p123
        %p787 = pneg %p120
        %p788 = pneg %p144
        %p789 = pneg %p141
        %p790 = pneg %p165
        %p791 = pneg %p162
        %p792 = pneg %p186
        %p793 = pneg %p183
        %p794 = pneg %p207
        %p795 = pneg %p204
        %p796 = pneg %p228
        %p797 = pneg %p225
        %p798 = pneg %p249
        %p799 = pneg %p246
        %p800 = pneg %p270
        %p801 = pneg %p267
        %p802 = pneg %p291
        %p803 = pneg %p288
        %p804 = pneg %p312
        %p805 = pneg %p309
        %p806 = pneg %p333
        %p807 = pneg %p330
        %p808 = pneg %p354
        %p809 = pneg %p351
        %p810 = pneg %p375
        %p811 = pneg %p372
        %p812 = pneg %p396
        %p813 = pneg %p393
        %p814 = pneg %p417
        %p815 = pneg %p414
        %p816 = pneg %p438
        %p817 = pneg %p435
        %p818 = pneg %p459
        %p819 = pneg %p456
        %p820 = pneg %p480
        %p821 = pneg %p477
        %p822 = pneg %p506
        %p823 = pneg %p503
        %s824 = smul.u32 2, %s39
        %p825 = scmp.lt.s32.totalorder %s824, 3
        %s826 = scalar_select %p825, %s824, 3
        %s827 = smul.addr %s826, 8
        %s828 = scalar_lea.vmem %s21, %s827
        %s829 = smul.u32 2, %s39
        %p830 = scmp.lt.s32.totalorder %s829, 3
        %s831 = scalar_select %p830, %s829, 3
        %s832 = smul.addr %s831, 4
        %s833 = scalar_lea.vmem %s0, %s832
        %s834 = smul.u32 2, %s39
        %s835 = smul.u32 2, %s39
        %p836 = scmp.lt.s32.totalorder %s835, 3
        %s837 = scalar_select %p836, %s835, 3
        %s838 = smul.addr %s837, 8
        %s839 = scalar_lea.vmem %s21, %s838
        %s840 = smul.u32 2, %s39
        %v842 = vld [vmem:[%s833] sm:$0xf]
        %v843 = vld [vmem:[%s833 + $0x4] sm:$0xf]
        %v844 = vld [vmem:[#allocation2] sm:$0xff]
        %v845 = vld [vmem:[#allocation2 + $0x8] sm:$0xf]
        %v846 = vld [vmem:[#allocation2 + $0xc] sm:$0xff]
        %v847 = vld [vmem:[#allocation2 + $0x14] sm:$0xf]
        %v848 = vld [vmem:[#allocation2 + $0x18] sm:$0xff]
        %v849 = vld [vmem:[#allocation2 + $0x20] sm:$0xf]
        %v850 = vld [vmem:[#allocation2 + $0x24] sm:$0xff]
        %v851 = vld [vmem:[#allocation2 + $0x2c] sm:$0xf]
        %v852 = vld [vmem:[#allocation2 + $0x30] sm:$0xff]
        %v853 = vld [vmem:[#allocation2 + $0x38] sm:$0xf]
        %v854 = vld [vmem:[#allocation2 + $0x3c] sm:$0xff]
        %v855 = vld [vmem:[#allocation2 + $0x44] sm:$0xf]
        %v856 = vld [vmem:[#allocation2 + $0x48] sm:$0xff]
        %v857 = vld [vmem:[#allocation2 + $0x50] sm:$0xf]
        %v858 = vld [vmem:[#allocation2 + $0x54] sm:$0xff]
        %v859 = vld [vmem:[#allocation2 + $0x5c] sm:$0xf]
        %v860 = vld [vmem:[#allocation2 + $0x60] sm:$0xff]
        %v861 = vld [vmem:[#allocation2 + $0x68] sm:$0xf]
        %v862 = vld [vmem:[#allocation2 + $0x6c] sm:$0xff]
        %v863 = vld [vmem:[#allocation2 + $0x74] sm:$0xf]
        %v864 = vld [vmem:[#allocation2 + $0x78] sm:$0xff]
        %v865 = vld [vmem:[#allocation2 + $0x80] sm:$0xf]
        %v866 = vld [vmem:[#allocation2 + $0x84] sm:$0xff]
        %v867 = vld [vmem:[#allocation2 + $0x8c] sm:$0xf]
        %v868 = vld [vmem:[#allocation2 + $0x90] sm:$0xff]
        %v869 = vld [vmem:[#allocation2 + $0x98] sm:$0xf]
        %v870 = vld [vmem:[#allocation2 + $0x9c] sm:$0xff]
        %v871 = vld [vmem:[#allocation2 + $0xa4] sm:$0xf]
        %v872 = vld [vmem:[#allocation2 + $0xa8] sm:$0xff]
        %v873 = vld [vmem:[#allocation2 + $0xb0] sm:$0xf]
        %v874 = vld [vmem:[#allocation2 + $0xb4] sm:$0xff]
        %v875 = vld [vmem:[#allocation2 + $0xbc] sm:$0xf]
        %v876 = vld [vmem:[%s2] sm:$0x7]
        %v878 = vlaneseq
        %v879 = vshrl.u32 %v878, 7
        %v880 = vsub.s32 0, %v879
        %v881 = vrot.slane %v876, %v880
        %v882 = vlaneseq
        %v883 = vshrl.u32 %v882, 7
        %v884 = vsub.s32 1, %v883
        %v885 = vrot.slane %v876, %v884
        %v886 = vlaneseq
        %v887 = vshrl.u32 %v886, 7
        %v888 = vsub.s32 2, %v887
        %v889 = vrot.slane %v876, %v888
        %v895 = vunpack.c.l.b16 %v842
        %v896 = vunpack.c.l.b16 %v843
        %v897 = vpack.c.b16 %v896, %v895
        %v931 = vunpack.c.l.b16 %v844
        %v932 = vunpack.c.h.b16 %v844
        %v933 = vunpack.c.l.b16 %v845
        %v934 = vunpack.c.l.b16 %v846
        %v935 = vunpack.c.h.b16 %v846
        %v936 = vunpack.c.l.b16 %v847
        %v937 = vunpack.c.l.b16 %v848
        %v938 = vunpack.c.h.b16 %v848
        %v939 = vunpack.c.l.b16 %v849
        %v940 = vunpack.c.l.b16 %v850
        %v941 = vunpack.c.h.b16 %v850
        %v942 = vunpack.c.l.b16 %v851
        %v943 = vunpack.c.l.b16 %v852
        %v944 = vunpack.c.h.b16 %v852
        %v945 = vunpack.c.l.b16 %v853
        %v946 = vunpack.c.l.b16 %v854
        %v947 = vunpack.c.h.b16 %v854
        %v948 = vunpack.c.l.b16 %v855
        %v949 = vunpack.c.l.b16 %v856
        %v950 = vunpack.c.h.b16 %v856
        %v951 = vunpack.c.l.b16 %v857
        %v952 = vunpack.c.l.b16 %v858
        %v953 = vunpack.c.h.b16 %v858
        %v954 = vunpack.c.l.b16 %v859
        %v955 = vunpack.c.l.b16 %v860
        %v956 = vunpack.c.h.b16 %v860
        %v957 = vunpack.c.l.b16 %v861
        %v958 = vunpack.c.l.b16 %v862
        %v959 = vunpack.c.h.b16 %v862
        %v960 = vunpack.c.l.b16 %v863
        %v961 = vunpack.c.l.b16 %v864
        %v962 = vunpack.c.h.b16 %v864
        %v963 = vunpack.c.l.b16 %v865
        %v964 = vunpack.c.l.b16 %v866
        %v965 = vunpack.c.h.b16 %v866
        %v966 = vunpack.c.l.b16 %v867
        %v967 = vunpack.c.l.b16 %v868
        %v968 = vunpack.c.h.b16 %v868
        %v969 = vunpack.c.l.b16 %v869
        %v970 = vunpack.c.l.b16 %v870
        %v971 = vunpack.c.h.b16 %v870
        %v972 = vunpack.c.l.b16 %v871
        %v973 = vunpack.c.l.b16 %v872
        %v974 = vunpack.c.h.b16 %v872
        %v975 = vunpack.c.l.b16 %v873
        %v976 = vunpack.c.l.b16 %v874
        %v977 = vunpack.c.h.b16 %v874
        %v978 = vunpack.c.l.b16 %v875
        %v979 = vpack.c.b16 %v934, %v931
        %v980 = vpack.c.b16 %v935, %v932
        %v981 = vpack.c.b16 %v936, %v933
        %v982 = vpack.c.b16 %v940, %v937
        %v983 = vpack.c.b16 %v941, %v938
        %v984 = vpack.c.b16 %v942, %v939
        %v985 = vpack.c.b16 %v946, %v943
        %v986 = vpack.c.b16 %v947, %v944
        %v987 = vpack.c.b16 %v948, %v945
        %v988 = vpack.c.b16 %v952, %v949
        %v989 = vpack.c.b16 %v953, %v950
        %v990 = vpack.c.b16 %v954, %v951
        %v991 = vpack.c.b16 %v958, %v955
        %v992 = vpack.c.b16 %v959, %v956
        %v993 = vpack.c.b16 %v960, %v957
        %v994 = vpack.c.b16 %v964, %v961
        %v995 = vpack.c.b16 %v965, %v962
        %v996 = vpack.c.b16 %v966, %v963
        %v997 = vpack.c.b16 %v970, %v967
        %v998 = vpack.c.b16 %v971, %v968
        %v999 = vpack.c.b16 %v972, %v969
        %v1000 = vpack.c.b16 %v976, %v973
        %v1001 = vpack.c.b16 %v977, %v974
        %v1002 = vpack.c.b16 %v978, %v975
        %1027 = vmatprep.subr.bf16.mxu0 %v980
        %1028 = vmatpush1.bf16.msra.mxu0 %v979
        %1029 = vmatprep.subr.bf16.mxu0 %v983
        %1030 = vmatpush1.bf16.msra.mxu0 %v982
        %1031 = vmatprep.subr.bf16.mxu0 %v986
        %1032 = vmatpush1.bf16.msra.mxu0 %v985
        %1033 = vmatprep.subr.bf16.mxu0 %v989
        %1034 = vmatpush1.bf16.msra.mxu0 %v988
        %1035 = vmatprep.subr.bf16.mxu0 %v992
        %1036 = vmatpush1.bf16.msra.mxu0 %v991
        %1037 = vmatprep.subr.bf16.mxu0 %v995
        %1038 = vmatpush1.bf16.msra.mxu0 %v994
        %1039 = vmatprep.subr.bf16.mxu0 %v998
        %1040 = vmatpush1.bf16.msra.mxu0 %v997
        %1041 = vmatprep.subr.bf16.mxu0 %v1001
        %1042 = vmatpush1.bf16.msra.mxu0 %v1000
        %1043 = vmatprep.subr.bf16.mxu0 0
        %1044 = vmatpush1.bf16.msra.mxu0 0
        %1045 = vmatprep.subr.bf16.mxu0 0
        %1046 = vmatpush1.bf16.msra.mxu0 0
        %1047 = vmatprep.subr.bf16.mxu0 0
        %1048 = vmatpush1.bf16.msra.mxu0 0
        %1049 = vmatprep.subr.bf16.mxu0 0
        %1050 = vmatpush1.bf16.msra.mxu0 0
        %1051 = vmatprep.subr.bf16.mxu0 0
        %1052 = vmatpush1.bf16.msra.mxu0 0
        %1053 = vmatprep.subr.bf16.mxu0 0
        %1054 = vmatpush1.bf16.msra.mxu0 0
        %1055 = vmatprep.subr.bf16.mxu0 0
        %1056 = vmatpush1.bf16.msra.mxu0 0
        %1057 = vmatprep.subr.bf16.mxu0 0
        %1058 = vmatpush1.bf16.msra.mxu0 0
        %1059 = vmatprep.mubr.bf16.mxu0 0
        %1060 = vmatmul.mubr.bf16.gmra.mrb[0].mxu0 %v897
        %v1061 = vpop.f32.mrb[0].mxu0
        %v1062 = vadd.f32 %v881, %v1061
        %v1063 = vpop.f32.mrb[0].mxu0
        %v1064 = vadd.f32 %v885, %v1063
        %v1065 = vpop.f32.mrb[0].mxu0
        %v1066 = vadd.f32 %v881, %v1065
        %v1067 = vpop.f32.mrb[0].mxu0
        %v1068 = vadd.f32 %v885, %v1067
        %1069 = vdwg.mxu0
        %1070 = vmatprep.subr.bf16.mxu0 0
        %1071 = vmatpush1.bf16.msra.mxu0 %v981
        %1072 = vmatprep.subr.bf16.mxu0 0
        %1073 = vmatpush1.bf16.msra.mxu0 %v984
        %1074 = vmatprep.subr.bf16.mxu0 0
        %1075 = vmatpush1.bf16.msra.mxu0 %v987
        %1076 = vmatprep.subr.bf16.mxu0 0
        %1077 = vmatpush1.bf16.msra.mxu0 %v990
        %1078 = vmatprep.subr.bf16.mxu0 0
        %1079 = vmatpush1.bf16.msra.mxu0 %v993
        %1080 = vmatprep.subr.bf16.mxu0 0
        %1081 = vmatpush1.bf16.msra.mxu0 %v996
        %1082 = vmatprep.subr.bf16.mxu0 0
        %1083 = vmatpush1.bf16.msra.mxu0 %v999
        %1084 = vmatprep.subr.bf16.mxu0 0
        %1085 = vmatpush1.bf16.msra.mxu0 %v1002
        %1086 = vmatprep.subr.bf16.mxu0 0
        %1087 = vmatpush1.bf16.msra.mxu0 0
        %1088 = vmatprep.subr.bf16.mxu0 0
        %1089 = vmatpush1.bf16.msra.mxu0 0
        %1090 = vmatprep.subr.bf16.mxu0 0
        %1091 = vmatpush1.bf16.msra.mxu0 0
        %1092 = vmatprep.subr.bf16.mxu0 0
        %1093 = vmatpush1.bf16.msra.mxu0 0
        %1094 = vmatprep.subr.bf16.mxu0 0
        %1095 = vmatpush1.bf16.msra.mxu0 0
        %1096 = vmatprep.subr.bf16.mxu0 0
        %1097 = vmatpush1.bf16.msra.mxu0 0
        %1098 = vmatprep.subr.bf16.mxu0 0
        %1099 = vmatpush1.bf16.msra.mxu0 0
        %1100 = vmatprep.subr.bf16.mxu0 0
        %1101 = vmatpush1.bf16.msra.mxu0 0
        %1102 = vmatprep.mubr.bf16.mxu0 0
        %1103 = vmatmul.mubr.bf16.gmra.mrb[0].mxu0 %v897
        %v1104 = vpop.f32.mrb[0].mxu0
        %v1105 = vadd.f32 %v889, %v1104
        %v1106 = vpop.f32.mrb[0].mxu0
        %v1107 = vpop.f32.mrb[0].mxu0
        %v1108 = vadd.f32 %v889, %v1107
        %v1109 = vpop.f32.mrb[0].mxu0
        %1110 = vdwg.mxu0
        %v1111 = vmax.f32 %v1062, 0.0
        %v1112 = vmax.f32 %v1064, 0.0
        %v1113 = vmax.f32 %v1105, 0.0
        %v1114 = vmax.f32 %v1066, 0.0
        %v1115 = vmax.f32 %v1068, 0.0
        %v1116 = vmax.f32 %v1108, 0.0
        %v1117 = vpack.c.bf16 %v1114, %v1111
        %v1118 = vpack.c.bf16 %v1115, %v1112
        %v1119 = vpack.c.bf16 %v1116, %v1113
        %v1120 = vld [vmem:[#allocation4] sm:$0xff]
        %v1121 = vld [vmem:[#allocation4 + $0x8] sm:$0xf]
        %v1122 = vld [vmem:[#allocation4 + $0xc] sm:$0xff]
        %v1123 = vld [vmem:[#allocation4 + $0x14] sm:$0xf]
        %v1124 = vld [vmem:[#allocation4 + $0x18] sm:$0xff]
        %v1125 = vld [vmem:[#allocation4 + $0x20] sm:$0xf]
        %v1126 = vld [vmem:[#allocation4 + $0x24] sm:$0xff]
        %v1127 = vld [vmem:[#allocation4 + $0x2c] sm:$0xf]
        %v1128 = vld [vmem:[#allocation4 + $0x30] sm:$0xff]
        %v1129 = vld [vmem:[#allocation4 + $0x38] sm:$0xf]
        %v1130 = vld [vmem:[#allocation4 + $0x3c] sm:$0xff]
        %v1131 = vld [vmem:[#allocation4 + $0x44] sm:$0xf]
        %v1132 = vld [vmem:[#allocation4 + $0x48] sm:$0xff]
        %v1133 = vld [vmem:[#allocation4 + $0x50] sm:$0xf]
        %v1134 = vld [vmem:[#allocation4 + $0x54] sm:$0xff]
        %v1135 = vld [vmem:[#allocation4 + $0x5c] sm:$0xf]
        %v1136 = vld [vmem:[#allocation4 + $0x60] sm:$0xff]
        %v1137 = vld [vmem:[#allocation4 + $0x68] sm:$0xf]
        %v1138 = vld [vmem:[#allocation4 + $0x6c] sm:$0xff]
        %v1139 = vld [vmem:[#allocation4 + $0x74] sm:$0xf]
        %v1140 = vld [vmem:[#allocation4 + $0x78] sm:$0xff]
        %v1141 = vld [vmem:[#allocation4 + $0x80] sm:$0xf]
        %v1142 = vld [vmem:[#allocation4 + $0x84] sm:$0xff]
        %v1143 = vld [vmem:[#allocation4 + $0x8c] sm:$0xf]
        %v1144 = vld [vmem:[#allocation4 + $0x90] sm:$0xff]
        %v1145 = vld [vmem:[#allocation4 + $0x98] sm:$0xf]
        %v1146 = vld [vmem:[#allocation4 + $0x9c] sm:$0xff]
        %v1147 = vld [vmem:[#allocation4 + $0xa4] sm:$0xf]
        %v1148 = vld [vmem:[#allocation4 + $0xa8] sm:$0xff]
        %v1149 = vld [vmem:[#allocation4 + $0xb0] sm:$0xf]
        %v1150 = vld [vmem:[#allocation4 + $0xb4] sm:$0xff]
        %v1151 = vld [vmem:[#allocation4 + $0xbc] sm:$0xf]
        %v1152 = vld [vmem:[#allocation4 + $0xc0] sm:$0xff]
        %v1153 = vld [vmem:[#allocation4 + $0xc8] sm:$0xf]
        %v1154 = vld [vmem:[#allocation4 + $0xcc] sm:$0xff]
        %v1155 = vld [vmem:[#allocation4 + $0xd4] sm:$0xf]
        %v1156 = vld [vmem:[#allocation4 + $0xd8] sm:$0xff]
        %v1157 = vld [vmem:[#allocation4 + $0xe0] sm:$0xf]
        %v1158 = vld [vmem:[#allocation4 + $0xe4] sm:$0xff]
        %v1159 = vld [vmem:[#allocation4 + $0xec] sm:$0xf]
        %v1160 = vld [vmem:[#allocation4 + $0xf0] sm:$0xff]
        %v1161 = vld [vmem:[#allocation4 + $0xf8] sm:$0xf]
        %v1162 = vld [vmem:[#allocation4 + $0xfc] sm:$0xff]
        %v1163 = vld [vmem:[#allocation4 + $0x104] sm:$0xf]
        %v1164 = vld [vmem:[#allocation4 + $0x108] sm:$0xff]
        %v1165 = vld [vmem:[#allocation4 + $0x110] sm:$0xf]
        %v1166 = vld [vmem:[#allocation4 + $0x114] sm:$0xff]
        %v1167 = vld [vmem:[#allocation4 + $0x11c] sm:$0xf]
        %v1168 = vld [vmem:[#allocation4 + $0x120] sm:$0xff]
        %v1169 = vld [vmem:[#allocation4 + $0x128] sm:$0xf]
        %v1170 = vld [vmem:[#allocation4 + $0x12c] sm:$0xff]
        %v1171 = vld [vmem:[#allocation4 + $0x134] sm:$0xf]
        %v1172 = vld [vmem:[#allocation4 + $0x138] sm:$0xff]
        %v1173 = vld [vmem:[#allocation4 + $0x140] sm:$0xf]
        %v1174 = vld [vmem:[#allocation4 + $0x144] sm:$0xff]
        %v1175 = vld [vmem:[#allocation4 + $0x14c] sm:$0xf]
        %v1176 = vld [vmem:[#allocation4 + $0x150] sm:$0xff]
        %v1177 = vld [vmem:[#allocation4 + $0x158] sm:$0xf]
        %v1178 = vld [vmem:[#allocation4 + $0x15c] sm:$0xff]
        %v1179 = vld [vmem:[#allocation4 + $0x164] sm:$0xf]
        %v1180 = vld [vmem:[#allocation4 + $0x168] sm:$0xff]
        %v1181 = vld [vmem:[#allocation4 + $0x170] sm:$0xf]
        %v1182 = vld [vmem:[#allocation4 + $0x174] sm:$0xff]
        %v1183 = vld [vmem:[#allocation4 + $0x17c] sm:$0xf]
        %v1184 = vld [vmem:[#allocation4 + $0x180] sm:$0xff]
        %v1185 = vld [vmem:[#allocation4 + $0x188] sm:$0xf]
        %v1186 = vld [vmem:[#allocation4 + $0x18c] sm:$0xff]
        %v1187 = vld [vmem:[#allocation4 + $0x194] sm:$0xf]
        %v1188 = vld [vmem:[#allocation4 + $0x198] sm:$0xff]
        %v1189 = vld [vmem:[#allocation4 + $0x1a0] sm:$0xf]
        %v1190 = vld [vmem:[#allocation4 + $0x1a4] sm:$0xff]
        %v1191 = vld [vmem:[#allocation4 + $0x1ac] sm:$0xf]
        %v1192 = vld [vmem:[#allocation4 + $0x1b0] sm:$0xff]
        %v1193 = vld [vmem:[#allocation4 + $0x1b8] sm:$0xf]
        %v1194 = vld [vmem:[#allocation4 + $0x1bc] sm:$0xff]
        %v1195 = vld [vmem:[#allocation4 + $0x1c4] sm:$0xf]
        %v1196 = vld [vmem:[#allocation4 + $0x1c8] sm:$0xff]
        %v1197 = vld [vmem:[#allocation4 + $0x1d0] sm:$0xf]
        %v1198 = vld [vmem:[#allocation4 + $0x1d4] sm:$0xff]
        %v1199 = vld [vmem:[#allocation4 + $0x1dc] sm:$0xf]
        %v1200 = vld [vmem:[#allocation4 + $0x1e0] sm:$0xff]
        %v1201 = vld [vmem:[#allocation4 + $0x1e8] sm:$0xf]
        %v1202 = vld [vmem:[#allocation4 + $0x1ec] sm:$0xff]
        %v1203 = vld [vmem:[#allocation4 + $0x1f4] sm:$0xf]
        %v1204 = vld [vmem:[#allocation4 + $0x1f8] sm:$0xff]
        %v1205 = vld [vmem:[#allocation4 + $0x200] sm:$0xf]
        %v1206 = vld [vmem:[#allocation4 + $0x204] sm:$0xff]
        %v1207 = vld [vmem:[#allocation4 + $0x20c] sm:$0xf]
        %v1208 = vld [vmem:[#allocation4 + $0x210] sm:$0xff]
        %v1209 = vld [vmem:[#allocation4 + $0x218] sm:$0xf]
        %v1210 = vld [vmem:[#allocation4 + $0x21c] sm:$0xff]
        %v1211 = vld [vmem:[#allocation4 + $0x224] sm:$0xf]
        %v1212 = vld [vmem:[#allocation4 + $0x228] sm:$0xff]
        %v1213 = vld [vmem:[#allocation4 + $0x230] sm:$0xf]
        %v1214 = vld [vmem:[#allocation4 + $0x234] sm:$0xff]
        %v1215 = vld [vmem:[#allocation4 + $0x23c] sm:$0xf]
        %v1216 = vld [vmem:[#allocation6] sm:$0x7]
        %v1218 = vlaneseq
        %v1219 = vshrl.u32 %v1218, 7
        %v1220 = vsub.s32 0, %v1219
        %v1221 = vrot.slane %v1216, %v1220
        %v1222 = vlaneseq
        %v1223 = vshrl.u32 %v1222, 7
        %v1224 = vsub.s32 1, %v1223
        %v1225 = vrot.slane %v1216, %v1224
        %v1226 = vlaneseq
        %v1227 = vshrl.u32 %v1226, 7
        %v1228 = vsub.s32 2, %v1227
        %v1229 = vrot.slane %v1216, %v1228
        %v1329 = vunpack.c.l.b16 %v1120
        %v1330 = vunpack.c.h.b16 %v1120
        %v1331 = vunpack.c.l.b16 %v1121
        %v1332 = vunpack.c.l.b16 %v1122
        %v1333 = vunpack.c.h.b16 %v1122
        %v1334 = vunpack.c.l.b16 %v1123
        %v1335 = vunpack.c.l.b16 %v1124
        %v1336 = vunpack.c.h.b16 %v1124
        %v1337 = vunpack.c.l.b16 %v1125
        %v1338 = vunpack.c.l.b16 %v1126
        %v1339 = vunpack.c.h.b16 %v1126
        %v1340 = vunpack.c.l.b16 %v1127
        %v1341 = vunpack.c.l.b16 %v1128
        %v1342 = vunpack.c.h.b16 %v1128
        %v1343 = vunpack.c.l.b16 %v1129
        %v1344 = vunpack.c.l.b16 %v1130
        %v1345 = vunpack.c.h.b16 %v1130
        %v1346 = vunpack.c.l.b16 %v1131
        %v1347 = vunpack.c.l.b16 %v1132
        %v1348 = vunpack.c.h.b16 %v1132
        %v1349 = vunpack.c.l.b16 %v1133
        %v1350 = vunpack.c.l.b16 %v1134
        %v1351 = vunpack.c.h.b16 %v1134
        %v1352 = vunpack.c.l.b16 %v1135
        %v1353 = vunpack.c.l.b16 %v1136
        %v1354 = vunpack.c.h.b16 %v1136
        %v1355 = vunpack.c.l.b16 %v1137
        %v1356 = vunpack.c.l.b16 %v1138
        %v1357 = vunpack.c.h.b16 %v1138
        %v1358 = vunpack.c.l.b16 %v1139
        %v1359 = vunpack.c.l.b16 %v1140
        %v1360 = vunpack.c.h.b16 %v1140
        %v1361 = vunpack.c.l.b16 %v1141
        %v1362 = vunpack.c.l.b16 %v1142
        %v1363 = vunpack.c.h.b16 %v1142
        %v1364 = vunpack.c.l.b16 %v1143
        %v1365 = vunpack.c.l.b16 %v1144
        %v1366 = vunpack.c.h.b16 %v1144
        %v1367 = vunpack.c.l.b16 %v1145
        %v1368 = vunpack.c.l.b16 %v1146
        %v1369 = vunpack.c.h.b16 %v1146
        %v1370 = vunpack.c.l.b16 %v1147
        %v1371 = vunpack.c.l.b16 %v1148
        %v1372 = vunpack.c.h.b16 %v1148
        %v1373 = vunpack.c.l.b16 %v1149
        %v1374 = vunpack.c.l.b16 %v1150
        %v1375 = vunpack.c.h.b16 %v1150
        %v1376 = vunpack.c.l.b16 %v1151
        %v1377 = vunpack.c.l.b16 %v1152
        %v1378 = vunpack.c.h.b16 %v1152
        %v1379 = vunpack.c.l.b16 %v1153
        %v1380 = vunpack.c.l.b16 %v1154
        %v1381 = vunpack.c.h.b16 %v1154
        %v1382 = vunpack.c.l.b16 %v1155
        %v1383 = vunpack.c.l.b16 %v1156
        %v1384 = vunpack.c.h.b16 %v1156
        %v1385 = vunpack.c.l.b16 %v1157
        %v1386 = vunpack.c.l.b16 %v1158
        %v1387 = vunpack.c.h.b16 %v1158
        %v1388 = vunpack.c.l.b16 %v1159
        %v1389 = vunpack.c.l.b16 %v1160
        %v1390 = vunpack.c.h.b16 %v1160
        %v1391 = vunpack.c.l.b16 %v1161
        %v1392 = vunpack.c.l.b16 %v1162
        %v1393 = vunpack.c.h.b16 %v1162
        %v1394 = vunpack.c.l.b16 %v1163
        %v1395 = vunpack.c.l.b16 %v1164
        %v1396 = vunpack.c.h.b16 %v1164
        %v1397 = vunpack.c.l.b16 %v1165
        %v1398 = vunpack.c.l.b16 %v1166
        %v1399 = vunpack.c.h.b16 %v1166
        %v1400 = vunpack.c.l.b16 %v1167
        %v1401 = vunpack.c.l.b16 %v1168
        %v1402 = vunpack.c.h.b16 %v1168
        %v1403 = vunpack.c.l.b16 %v1169
        %v1404 = vunpack.c.l.b16 %v1170
        %v1405 = vunpack.c.h.b16 %v1170
        %v1406 = vunpack.c.l.b16 %v1171
        %v1407 = vunpack.c.l.b16 %v1172
        %v1408 = vunpack.c.h.b16 %v1172
        %v1409 = vunpack.c.l.b16 %v1173
        %v1410 = vunpack.c.l.b16 %v1174
        %v1411 = vunpack.c.h.b16 %v1174
        %v1412 = vunpack.c.l.b16 %v1175
        %v1413 = vunpack.c.l.b16 %v1176
        %v1414 = vunpack.c.h.b16 %v1176
        %v1415 = vunpack.c.l.b16 %v1177
        %v1416 = vunpack.c.l.b16 %v1178
        %v1417 = vunpack.c.h.b16 %v1178
        %v1418 = vunpack.c.l.b16 %v1179
        %v1419 = vunpack.c.l.b16 %v1180
        %v1420 = vunpack.c.h.b16 %v1180
        %v1421 = vunpack.c.l.b16 %v1181
        %v1422 = vunpack.c.l.b16 %v1182
        %v1423 = vunpack.c.h.b16 %v1182
        %v1424 = vunpack.c.l.b16 %v1183
        %v1425 = vunpack.c.l.b16 %v1184
        %v1426 = vunpack.c.h.b16 %v1184
        %v1427 = vunpack.c.l.b16 %v1185
        %v1428 = vunpack.c.l.b16 %v1186
        %v1429 = vunpack.c.h.b16 %v1186
        %v1430 = vunpack.c.l.b16 %v1187
        %v1431 = vunpack.c.l.b16 %v1188
        %v1432 = vunpack.c.h.b16 %v1188
        %v1433 = vunpack.c.l.b16 %v1189
        %v1434 = vunpack.c.l.b16 %v1190
        %v1435 = vunpack.c.h.b16 %v1190
        %v1436 = vunpack.c.l.b16 %v1191
        %v1437 = vunpack.c.l.b16 %v1192
        %v1438 = vunpack.c.h.b16 %v1192
        %v1439 = vunpack.c.l.b16 %v1193
        %v1440 = vunpack.c.l.b16 %v1194
        %v1441 = vunpack.c.h.b16 %v1194
        %v1442 = vunpack.c.l.b16 %v1195
        %v1443 = vunpack.c.l.b16 %v1196
        %v1444 = vunpack.c.h.b16 %v1196
        %v1445 = vunpack.c.l.b16 %v1197
        %v1446 = vunpack.c.l.b16 %v1198
        %v1447 = vunpack.c.h.b16 %v1198
        %v1448 = vunpack.c.l.b16 %v1199
        %v1449 = vunpack.c.l.b16 %v1200
        %v1450 = vunpack.c.h.b16 %v1200
        %v1451 = vunpack.c.l.b16 %v1201
        %v1452 = vunpack.c.l.b16 %v1202
        %v1453 = vunpack.c.h.b16 %v1202
        %v1454 = vunpack.c.l.b16 %v1203
        %v1455 = vunpack.c.l.b16 %v1204
        %v1456 = vunpack.c.h.b16 %v1204
        %v1457 = vunpack.c.l.b16 %v1205
        %v1458 = vunpack.c.l.b16 %v1206
        %v1459 = vunpack.c.h.b16 %v1206
        %v1460 = vunpack.c.l.b16 %v1207
        %v1461 = vunpack.c.l.b16 %v1208
        %v1462 = vunpack.c.h.b16 %v1208
        %v1463 = vunpack.c.l.b16 %v1209
        %v1464 = vunpack.c.l.b16 %v1210
        %v1465 = vunpack.c.h.b16 %v1210
        %v1466 = vunpack.c.l.b16 %v1211
        %v1467 = vunpack.c.l.b16 %v1212
        %v1468 = vunpack.c.h.b16 %v1212
        %v1469 = vunpack.c.l.b16 %v1213
        %v1470 = vunpack.c.l.b16 %v1214
        %v1471 = vunpack.c.h.b16 %v1214
        %v1472 = vunpack.c.l.b16 %v1215
        %v1473 = vpack.c.b16 %v1332, %v1329
        %v1474 = vpack.c.b16 %v1333, %v1330
        %v1475 = vpack.c.b16 %v1334, %v1331
        %v1476 = vpack.c.b16 %v1338, %v1335
        %v1477 = vpack.c.b16 %v1339, %v1336
        %v1478 = vpack.c.b16 %v1340, %v1337
        %v1479 = vpack.c.b16 %v1344, %v1341
        %v1480 = vpack.c.b16 %v1345, %v1342
        %v1481 = vpack.c.b16 %v1346, %v1343
        %v1482 = vpack.c.b16 %v1350, %v1347
        %v1483 = vpack.c.b16 %v1351, %v1348
        %v1484 = vpack.c.b16 %v1352, %v1349
        %v1485 = vpack.c.b16 %v1356, %v1353
        %v1486 = vpack.c.b16 %v1357, %v1354
        %v1487 = vpack.c.b16 %v1358, %v1355
        %v1488 = vpack.c.b16 %v1362, %v1359
        %v1489 = vpack.c.b16 %v1363, %v1360
        %v1490 = vpack.c.b16 %v1364, %v1361
        %v1491 = vpack.c.b16 %v1368, %v1365
        %v1492 = vpack.c.b16 %v1369, %v1366
        %v1493 = vpack.c.b16 %v1370, %v1367
        %v1494 = vpack.c.b16 %v1374, %v1371
        %v1495 = vpack.c.b16 %v1375, %v1372
        %v1496 = vpack.c.b16 %v1376, %v1373
        %v1497 = vpack.c.b16 %v1380, %v1377
        %v1498 = vpack.c.b16 %v1381, %v1378
        %v1499 = vpack.c.b16 %v1382, %v1379
        %v1500 = vpack.c.b16 %v1386, %v1383
        %v1501 = vpack.c.b16 %v1387, %v1384
        %v1502 = vpack.c.b16 %v1388, %v1385
        %v1503 = vpack.c.b16 %v1392, %v1389
        %v1504 = vpack.c.b16 %v1393, %v1390
        %v1505 = vpack.c.b16 %v1394, %v1391
        %v1506 = vpack.c.b16 %v1398, %v1395
        %v1507 = vpack.c.b16 %v1399, %v1396
        %v1508 = vpack.c.b16 %v1400, %v1397
        %v1509 = vpack.c.b16 %v1404, %v1401
        %v1510 = vpack.c.b16 %v1405, %v1402
        %v1511 = vpack.c.b16 %v1406, %v1403
        %v1512 = vpack.c.b16 %v1410, %v1407
        %v1513 = vpack.c.b16 %v1411, %v1408
        %v1514 = vpack.c.b16 %v1412, %v1409
        %v1515 = vpack.c.b16 %v1416, %v1413
        %v1516 = vpack.c.b16 %v1417, %v1414
        %v1517 = vpack.c.b16 %v1418, %v1415
        %v1518 = vpack.c.b16 %v1422, %v1419
        %v1519 = vpack.c.b16 %v1423, %v1420
        %v1520 = vpack.c.b16 %v1424, %v1421
        %v1521 = vpack.c.b16 %v1428, %v1425
        %v1522 = vpack.c.b16 %v1429, %v1426
        %v1523 = vpack.c.b16 %v1430, %v1427
        %v1524 = vpack.c.b16 %v1434, %v1431
        %v1525 = vpack.c.b16 %v1435, %v1432
        %v1526 = vpack.c.b16 %v1436, %v1433
        %v1527 = vpack.c.b16 %v1440, %v1437
        %v1528 = vpack.c.b16 %v1441, %v1438
        %v1529 = vpack.c.b16 %v1442, %v1439
        %v1530 = vpack.c.b16 %v1446, %v1443
        %v1531 = vpack.c.b16 %v1447, %v1444
        %v1532 = vpack.c.b16 %v1448, %v1445
        %v1533 = vpack.c.b16 %v1452, %v1449
        %v1534 = vpack.c.b16 %v1453, %v1450
        %v1535 = vpack.c.b16 %v1454, %v1451
        %v1536 = vpack.c.b16 %v1458, %v1455
        %v1537 = vpack.c.b16 %v1459, %v1456
        %v1538 = vpack.c.b16 %v1460, %v1457
        %v1539 = vpack.c.b16 %v1464, %v1461
        %v1540 = vpack.c.b16 %v1465, %v1462
        %v1541 = vpack.c.b16 %v1466, %v1463
        %v1542 = vpack.c.b16 %v1470, %v1467
        %v1543 = vpack.c.b16 %v1471, %v1468
        %v1544 = vpack.c.b16 %v1472, %v1469
        %1617 = vmatprep.subr.bf16.mxu0 %v1474
        %1618 = vmatpush1.bf16.msra.mxu0 %v1473
        %1619 = vmatprep.subr.bf16.mxu0 %v1477
        %1620 = vmatpush1.bf16.msra.mxu0 %v1476
        %1621 = vmatprep.subr.bf16.mxu0 %v1480
        %1622 = vmatpush1.bf16.msra.mxu0 %v1479
        %1623 = vmatprep.subr.bf16.mxu0 %v1483
        %1624 = vmatpush1.bf16.msra.mxu0 %v1482
        %1625 = vmatprep.subr.bf16.mxu0 %v1486
        %1626 = vmatpush1.bf16.msra.mxu0 %v1485
        %1627 = vmatprep.subr.bf16.mxu0 %v1489
        %1628 = vmatpush1.bf16.msra.mxu0 %v1488
        %1629 = vmatprep.subr.bf16.mxu0 %v1492
        %1630 = vmatpush1.bf16.msra.mxu0 %v1491
        %1631 = vmatprep.subr.bf16.mxu0 %v1495
        %1632 = vmatpush1.bf16.msra.mxu0 %v1494
        %1633 = vmatprep.subr.bf16.mxu0 %v1498
        %1634 = vmatpush1.bf16.msra.mxu0 %v1497
        %1635 = vmatprep.subr.bf16.mxu0 %v1501
        %1636 = vmatpush1.bf16.msra.mxu0 %v1500
        %1637 = vmatprep.subr.bf16.mxu0 %v1504
        %1638 = vmatpush1.bf16.msra.mxu0 %v1503
        %1639 = vmatprep.subr.bf16.mxu0 %v1507
        %1640 = vmatpush1.bf16.msra.mxu0 %v1506
        %1641 = vmatprep.subr.bf16.mxu0 %v1510
        %1642 = vmatpush1.bf16.msra.mxu0 %v1509
        %1643 = vmatprep.subr.bf16.mxu0 %v1513
        %1644 = vmatpush1.bf16.msra.mxu0 %v1512
        %1645 = vmatprep.subr.bf16.mxu0 %v1516
        %1646 = vmatpush1.bf16.msra.mxu0 %v1515
        %1647 = vmatprep.subr.bf16.mxu0 %v1519
        %1648 = vmatpush1.bf16.msra.mxu0 %v1518
        %1649 = vmatprep.mubr.bf16.mxu0 %v1118
        %1650 = vmatmul.mubr.bf16.gmra.mrb[0].mxu0 %v1117
        %v1651 = vpop.f32.mrb[0].mxu0
        %v1652 = vadd.f32 %v1221, %v1651
        %v1653 = vpop.f32.mrb[0].mxu0
        %v1654 = vadd.f32 %v1225, %v1653
        %v1655 = vpop.f32.mrb[0].mxu0
        %v1656 = vadd.f32 %v1221, %v1655
        %v1657 = vpop.f32.mrb[0].mxu0
        %v1658 = vadd.f32 %v1225, %v1657
        %1659 = vdwg.mxu0
        %1660 = vmatprep.subr.bf16.mxu0 %v1522
        %1661 = vmatpush1.bf16.msra.mxu0 %v1521
        %1662 = vmatprep.subr.bf16.mxu0 %v1525
        %1663 = vmatpush1.bf16.msra.mxu0 %v1524
        %1664 = vmatprep.subr.bf16.mxu0 %v1528
        %1665 = vmatpush1.bf16.msra.mxu0 %v1527
        %1666 = vmatprep.subr.bf16.mxu0 %v1531
        %1667 = vmatpush1.bf16.msra.mxu0 %v1530
        %1668 = vmatprep.subr.bf16.mxu0 %v1534
        %1669 = vmatpush1.bf16.msra.mxu0 %v1533
        %1670 = vmatprep.subr.bf16.mxu0 %v1537
        %1671 = vmatpush1.bf16.msra.mxu0 %v1536
        %1672 = vmatprep.subr.bf16.mxu0 %v1540
        %1673 = vmatpush1.bf16.msra.mxu0 %v1539
        %1674 = vmatprep.subr.bf16.mxu0 %v1543
        %1675 = vmatpush1.bf16.msra.mxu0 %v1542
        %1676 = vmatprep.subr.bf16.mxu0 0
        %1677 = vmatpush1.bf16.msra.mxu0 0
        %1678 = vmatprep.subr.bf16.mxu0 0
        %1679 = vmatpush1.bf16.msra.mxu0 0
        %1680 = vmatprep.subr.bf16.mxu0 0
        %1681 = vmatpush1.bf16.msra.mxu0 0
        %1682 = vmatprep.subr.bf16.mxu0 0
        %1683 = vmatpush1.bf16.msra.mxu0 0
        %1684 = vmatprep.subr.bf16.mxu0 0
        %1685 = vmatpush1.bf16.msra.mxu0 0
        %1686 = vmatprep.subr.bf16.mxu0 0
        %1687 = vmatpush1.bf16.msra.mxu0 0
        %1688 = vmatprep.subr.bf16.mxu0 0
        %1689 = vmatpush1.bf16.msra.mxu0 0
        %1690 = vmatprep.subr.bf16.mxu0 0
        %1691 = vmatpush1.bf16.msra.mxu0 0
        %1692 = vmatprep.mubr.bf16.mxu0 0
        %1693 = vmatmul.mubr.bf16.gmra.mrb[0].mxu0 %v1119
        %v1694 = vpop.f32.mrb[0].mxu0
        %v1695 = vadd.f32 %v1652, %v1694
        %v1696 = vpop.f32.mrb[0].mxu0
        %v1697 = vadd.f32 %v1654, %v1696
        %v1698 = vpop.f32.mrb[0].mxu0
        %v1699 = vadd.f32 %v1656, %v1698
        %v1700 = vpop.f32.mrb[0].mxu0
        %v1701 = vadd.f32 %v1658, %v1700
        %1702 = vdwg.mxu0
        %1703 = vmatprep.subr.bf16.mxu0 0
        %1704 = vmatpush1.bf16.msra.mxu0 %v1475
        %1705 = vmatprep.subr.bf16.mxu0 0
        %1706 = vmatpush1.bf16.msra.mxu0 %v1478
        %1707 = vmatprep.subr.bf16.mxu0 0
        %1708 = vmatpush1.bf16.msra.mxu0 %v1481
        %1709 = vmatprep.subr.bf16.mxu0 0
        %1710 = vmatpush1.bf16.msra.mxu0 %v1484
        %1711 = vmatprep.subr.bf16.mxu0 0
        %1712 = vmatpush1.bf16.msra.mxu0 %v1487
        %1713 = vmatprep.subr.bf16.mxu0 0
        %1714 = vmatpush1.bf16.msra.mxu0 %v1490
        %1715 = vmatprep.subr.bf16.mxu0 0
        %1716 = vmatpush1.bf16.msra.mxu0 %v1493
        %1717 = vmatprep.subr.bf16.mxu0 0
        %1718 = vmatpush1.bf16.msra.mxu0 %v1496
        %1719 = vmatprep.subr.bf16.mxu0 0
        %1720 = vmatpush1.bf16.msra.mxu0 %v1499
        %1721 = vmatprep.subr.bf16.mxu0 0
        %1722 = vmatpush1.bf16.msra.mxu0 %v1502
        %1723 = vmatprep.subr.bf16.mxu0 0
        %1724 = vmatpush1.bf16.msra.mxu0 %v1505
        %1725 = vmatprep.subr.bf16.mxu0 0
        %1726 = vmatpush1.bf16.msra.mxu0 %v1508
        %1727 = vmatprep.subr.bf16.mxu0 0
        %1728 = vmatpush1.bf16.msra.mxu0 %v1511
        %1729 = vmatprep.subr.bf16.mxu0 0
        %1730 = vmatpush1.bf16.msra.mxu0 %v1514
        %1731 = vmatprep.subr.bf16.mxu0 0
        %1732 = vmatpush1.bf16.msra.mxu0 %v1517
        %1733 = vmatprep.subr.bf16.mxu0 0
        %1734 = vmatpush1.bf16.msra.mxu0 %v1520
        %1735 = vmatprep.mubr.bf16.mxu0 %v1118
        %1736 = vmatmul.mubr.bf16.gmra.mrb[0].mxu0 %v1117
        %v1737 = vpop.f32.mrb[0].mxu0
        %v1738 = vadd.f32 %v1229, %v1737
        %v1739 = vpop.f32.mrb[0].mxu0
        %v1740 = vpop.f32.mrb[0].mxu0
        %v1741 = vadd.f32 %v1229, %v1740
        %v1742 = vpop.f32.mrb[0].mxu0
        %1743 = vdwg.mxu0
        %1744 = vmatprep.subr.bf16.mxu0 0
        %1745 = vmatpush1.bf16.msra.mxu0 %v1523
        %1746 = vmatprep.subr.bf16.mxu0 0
        %1747 = vmatpush1.bf16.msra.mxu0 %v1526
        %1748 = vmatprep.subr.bf16.mxu0 0
        %1749 = vmatpush1.bf16.msra.mxu0 %v1529
        %1750 = vmatprep.subr.bf16.mxu0 0
        %1751 = vmatpush1.bf16.msra.mxu0 %v1532
        %1752 = vmatprep.subr.bf16.mxu0 0
        %1753 = vmatpush1.bf16.msra.mxu0 %v1535
        %1754 = vmatprep.subr.bf16.mxu0 0
        %1755 = vmatpush1.bf16.msra.mxu0 %v1538
        %1756 = vmatprep.subr.bf16.mxu0 0
        %1757 = vmatpush1.bf16.msra.mxu0 %v1541
        %1758 = vmatprep.subr.bf16.mxu0 0
        %1759 = vmatpush1.bf16.msra.mxu0 %v1544
        %1760 = vmatprep.subr.bf16.mxu0 0
        %1761 = vmatpush1.bf16.msra.mxu0 0
        %1762 = vmatprep.subr.bf16.mxu0 0
        %1763 = vmatpush1.bf16.msra.mxu0 0
        %1764 = vmatprep.subr.bf16.mxu0 0
        %1765 = vmatpush1.bf16.msra.mxu0 0
        %1766 = vmatprep.subr.bf16.mxu0 0
        %1767 = vmatpush1.bf16.msra.mxu0 0
        %1768 = vmatprep.subr.bf16.mxu0 0
        %1769 = vmatpush1.bf16.msra.mxu0 0
        %1770 = vmatprep.subr.bf16.mxu0 0
        %1771 = vmatpush1.bf16.msra.mxu0 0
        %1772 = vmatprep.subr.bf16.mxu0 0
        %1773 = vmatpush1.bf16.msra.mxu0 0
        %1774 = vmatprep.subr.bf16.mxu0 0
        %1775 = vmatpush1.bf16.msra.mxu0 0
        %1776 = vmatprep.mubr.bf16.mxu0 0
        %1777 = vmatmul.mubr.bf16.gmra.mrb[0].mxu0 %v1119
        %v1778 = vpop.f32.mrb[0].mxu0
        %v1779 = vadd.f32 %v1738, %v1778
        %v1780 = vpop.f32.mrb[0].mxu0
        %v1781 = vpop.f32.mrb[0].mxu0
        %v1782 = vadd.f32 %v1741, %v1781
        %v1783 = vpop.f32.mrb[0].mxu0
        %1784 = vdwg.mxu0
        %v1785 = vmax.f32 %v1695, 0.0
        %v1786 = vmax.f32 %v1697, 0.0
        %v1787 = vmax.f32 %v1779, 0.0
        %v1788 = vmax.f32 %v1699, 0.0
        %v1789 = vmax.f32 %v1701, 0.0
        %v1790 = vmax.f32 %v1782, 0.0
        %v1791 = vpack.c.bf16 %v1788, %v1785
        %v1792 = vpack.c.bf16 %v1789, %v1786
        %v1793 = vpack.c.bf16 %v1790, %v1787
        %v1794 = vld [vmem:[#allocation7] sm:$0xff]
        %v1795 = vld [vmem:[#allocation7 + $0x8] sm:$0xff]
        %v1796 = vld [vmem:[#allocation7 + $0x10] sm:$0xff]
        %v1797 = vld [vmem:[#allocation7 + $0x18] sm:$0xff]
        %v1798 = vld [vmem:[#allocation7 + $0x20] sm:$0xff]
        %v1799 = vld [vmem:[#allocation7 + $0x28] sm:$0xff]
        %v1800 = vld [vmem:[#allocation7 + $0x30] sm:$0xff]
        %v1801 = vld [vmem:[#allocation7 + $0x38] sm:$0xff]
        %v1802 = vld [vmem:[#allocation7 + $0x40] sm:$0xff]
        %v1803 = vld [vmem:[#allocation7 + $0x48] sm:$0xff]
        %v1804 = vld [vmem:[#allocation7 + $0x50] sm:$0xff]
        %v1805 = vld [vmem:[#allocation7 + $0x58] sm:$0xff]
        %v1806 = vld [vmem:[#allocation7 + $0x60] sm:$0xff]
        %v1807 = vld [vmem:[#allocation7 + $0x68] sm:$0xff]
        %v1808 = vld [vmem:[#allocation7 + $0x70] sm:$0xff]
        %v1809 = vld [vmem:[#allocation7 + $0x78] sm:$0xff]
        %v1810 = vld [vmem:[#allocation7 + $0x80] sm:$0xff]
        %v1811 = vld [vmem:[#allocation7 + $0x88] sm:$0xff]
        %v1812 = vld [vmem:[#allocation7 + $0x90] sm:$0xff]
        %v1813 = vld [vmem:[#allocation7 + $0x98] sm:$0xff]
        %v1814 = vld [vmem:[#allocation7 + $0xa0] sm:$0xff]
        %v1815 = vld [vmem:[#allocation7 + $0xa8] sm:$0xff]
        %v1816 = vld [vmem:[#allocation7 + $0xb0] sm:$0xff]
        %v1817 = vld [vmem:[#allocation7 + $0xb8] sm:$0xff]
        %v1818 = vld [vmem:[#allocation7 + $0xc0] sm:$0xff]
        %v1819 = vld [vmem:[#allocation7 + $0xc8] sm:$0xff]
        %v1820 = vld [vmem:[#allocation7 + $0xd0] sm:$0xff]
        %v1821 = vld [vmem:[#allocation7 + $0xd8] sm:$0xff]
        %v1822 = vld [vmem:[#allocation7 + $0xe0] sm:$0xff]
        %v1823 = vld [vmem:[#allocation7 + $0xe8] sm:$0xff]
        %v1824 = vld [vmem:[#allocation7 + $0xf0] sm:$0xff]
        %v1825 = vld [vmem:[#allocation7 + $0xf8] sm:$0xff]
        %v1826 = vld [vmem:[#allocation7 + $0x100] sm:$0xff]
        %v1827 = vld [vmem:[#allocation7 + $0x108] sm:$0xff]
        %v1828 = vld [vmem:[#allocation7 + $0x110] sm:$0xff]
        %v1829 = vld [vmem:[#allocation7 + $0x118] sm:$0xff]
        %v1830 = vld [vmem:[#allocation7 + $0x120] sm:$0xff]
        %v1831 = vld [vmem:[#allocation7 + $0x128] sm:$0xff]
        %v1832 = vld [vmem:[#allocation7 + $0x130] sm:$0xff]
        %v1833 = vld [vmem:[#allocation7 + $0x138] sm:$0xff]
        %v1834 = vld [vmem:[#allocation7 + $0x140] sm:$0xff]
        %v1835 = vld [vmem:[#allocation7 + $0x148] sm:$0xff]
        %v1836 = vld [vmem:[#allocation7 + $0x150] sm:$0xff]
        %v1837 = vld [vmem:[#allocation7 + $0x158] sm:$0xff]
        %v1838 = vld [vmem:[#allocation7 + $0x160] sm:$0xff]
        %v1839 = vld [vmem:[#allocation7 + $0x168] sm:$0xff]
        %v1840 = vld [vmem:[#allocation7 + $0x170] sm:$0xff]
        %v1841 = vld [vmem:[#allocation7 + $0x178] sm:$0xff]
        %v1842 = vld [vmem:[#allocation9] sm:$0x3]
        %v1844 = vlaneseq
        %v1845 = vshrl.u32 %v1844, 7
        %v1846 = vsub.s32 0, %v1845
        %v1847 = vrot.slane %v1842, %v1846
        %v1848 = vlaneseq
        %v1849 = vshrl.u32 %v1848, 7
        %v1850 = vsub.s32 1, %v1849
        %v1851 = vrot.slane %v1842, %v1850
        %v1902 = vunpack.c.l.b16 %v1794
        %v1903 = vunpack.c.h.b16 %v1794
        %v1904 = vunpack.c.l.b16 %v1795
        %v1905 = vunpack.c.h.b16 %v1795
        %v1906 = vunpack.c.l.b16 %v1796
        %v1907 = vunpack.c.h.b16 %v1796
        %v1908 = vunpack.c.l.b16 %v1797
        %v1909 = vunpack.c.h.b16 %v1797
        %v1910 = vunpack.c.l.b16 %v1798
        %v1911 = vunpack.c.h.b16 %v1798
        %v1912 = vunpack.c.l.b16 %v1799
        %v1913 = vunpack.c.h.b16 %v1799
        %v1914 = vunpack.c.l.b16 %v1800
        %v1915 = vunpack.c.h.b16 %v1800
        %v1916 = vunpack.c.l.b16 %v1801
        %v1917 = vunpack.c.h.b16 %v1801
        %v1918 = vunpack.c.l.b16 %v1802
        %v1919 = vunpack.c.h.b16 %v1802
        %v1920 = vunpack.c.l.b16 %v1803
        %v1921 = vunpack.c.h.b16 %v1803
        %v1922 = vunpack.c.l.b16 %v1804
        %v1923 = vunpack.c.h.b16 %v1804
        %v1924 = vunpack.c.l.b16 %v1805
        %v1925 = vunpack.c.h.b16 %v1805
        %v1926 = vunpack.c.l.b16 %v1806
        %v1927 = vunpack.c.h.b16 %v1806
        %v1928 = vunpack.c.l.b16 %v1807
        %v1929 = vunpack.c.h.b16 %v1807
        %v1930 = vunpack.c.l.b16 %v1808
        %v1931 = vunpack.c.h.b16 %v1808
        %v1932 = vunpack.c.l.b16 %v1809
        %v1933 = vunpack.c.h.b16 %v1809
        %v1934 = vunpack.c.l.b16 %v1810
        %v1935 = vunpack.c.h.b16 %v1810
        %v1936 = vunpack.c.l.b16 %v1811
        %v1937 = vunpack.c.h.b16 %v1811
        %v1938 = vunpack.c.l.b16 %v1812
        %v1939 = vunpack.c.h.b16 %v1812
        %v1940 = vunpack.c.l.b16 %v1813
        %v1941 = vunpack.c.h.b16 %v1813
        %v1942 = vunpack.c.l.b16 %v1814
        %v1943 = vunpack.c.h.b16 %v1814
        %v1944 = vunpack.c.l.b16 %v1815
        %v1945 = vunpack.c.h.b16 %v1815
        %v1946 = vunpack.c.l.b16 %v1816
        %v1947 = vunpack.c.h.b16 %v1816
        %v1948 = vunpack.c.l.b16 %v1817
        %v1949 = vunpack.c.h.b16 %v1817
        %v1950 = vunpack.c.l.b16 %v1818
        %v1951 = vunpack.c.h.b16 %v1818
        %v1952 = vunpack.c.l.b16 %v1819
        %v1953 = vunpack.c.h.b16 %v1819
        %v1954 = vunpack.c.l.b16 %v1820
        %v1955 = vunpack.c.h.b16 %v1820
        %v1956 = vunpack.c.l.b16 %v1821
        %v1957 = vunpack.c.h.b16 %v1821
        %v1958 = vunpack.c.l.b16 %v1822
        %v1959 = vunpack.c.h.b16 %v1822
        %v1960 = vunpack.c.l.b16 %v1823
        %v1961 = vunpack.c.h.b16 %v1823
        %v1962 = vunpack.c.l.b16 %v1824
        %v1963 = vunpack.c.h.b16 %v1824
        %v1964 = vunpack.c.l.b16 %v1825
        %v1965 = vunpack.c.h.b16 %v1825
        %v1966 = vunpack.c.l.b16 %v1826
        %v1967 = vunpack.c.h.b16 %v1826
        %v1968 = vunpack.c.l.b16 %v1827
        %v1969 = vunpack.c.h.b16 %v1827
        %v1970 = vunpack.c.l.b16 %v1828
        %v1971 = vunpack.c.h.b16 %v1828
        %v1972 = vunpack.c.l.b16 %v1829
        %v1973 = vunpack.c.h.b16 %v1829
        %v1974 = vunpack.c.l.b16 %v1830
        %v1975 = vunpack.c.h.b16 %v1830
        %v1976 = vunpack.c.l.b16 %v1831
        %v1977 = vunpack.c.h.b16 %v1831
        %v1978 = vunpack.c.l.b16 %v1832
        %v1979 = vunpack.c.h.b16 %v1832
        %v1980 = vunpack.c.l.b16 %v1833
        %v1981 = vunpack.c.h.b16 %v1833
        %v1982 = vunpack.c.l.b16 %v1834
        %v1983 = vunpack.c.h.b16 %v1834
        %v1984 = vunpack.c.l.b16 %v1835
        %v1985 = vunpack.c.h.b16 %v1835
        %v1986 = vunpack.c.l.b16 %v1836
        %v1987 = vunpack.c.h.b16 %v1836
        %v1988 = vunpack.c.l.b16 %v1837
        %v1989 = vunpack.c.h.b16 %v1837
        %v1990 = vunpack.c.l.b16 %v1838
        %v1991 = vunpack.c.h.b16 %v1838
        %v1992 = vunpack.c.l.b16 %v1839
        %v1993 = vunpack.c.h.b16 %v1839
        %v1994 = vunpack.c.l.b16 %v1840
        %v1995 = vunpack.c.h.b16 %v1840
        %v1996 = vunpack.c.l.b16 %v1841
        %v1997 = vunpack.c.h.b16 %v1841
        %v1998 = vpack.c.b16 %v1904, %v1902
        %v1999 = vpack.c.b16 %v1905, %v1903
        %v2000 = vpack.c.b16 %v1908, %v1906
        %v2001 = vpack.c.b16 %v1909, %v1907
        %v2002 = vpack.c.b16 %v1912, %v1910
        %v2003 = vpack.c.b16 %v1913, %v1911
        %v2004 = vpack.c.b16 %v1916, %v1914
        %v2005 = vpack.c.b16 %v1917, %v1915
        %v2006 = vpack.c.b16 %v1920, %v1918
        %v2007 = vpack.c.b16 %v1921, %v1919
        %v2008 = vpack.c.b16 %v1924, %v1922
        %v2009 = vpack.c.b16 %v1925, %v1923
        %v2010 = vpack.c.b16 %v1928, %v1926
        %v2011 = vpack.c.b16 %v1929, %v1927
        %v2012 = vpack.c.b16 %v1932, %v1930
        %v2013 = vpack.c.b16 %v1933, %v1931
        %v2014 = vpack.c.b16 %v1936, %v1934
        %v2015 = vpack.c.b16 %v1937, %v1935
        %v2016 = vpack.c.b16 %v1940, %v1938
        %v2017 = vpack.c.b16 %v1941, %v1939
        %v2018 = vpack.c.b16 %v1944, %v1942
        %v2019 = vpack.c.b16 %v1945, %v1943
        %v2020 = vpack.c.b16 %v1948, %v1946
        %v2021 = vpack.c.b16 %v1949, %v1947
        %v2022 = vpack.c.b16 %v1952, %v1950
        %v2023 = vpack.c.b16 %v1953, %v1951
        %v2024 = vpack.c.b16 %v1956, %v1954
        %v2025 = vpack.c.b16 %v1957, %v1955
        %v2026 = vpack.c.b16 %v1960, %v1958
        %v2027 = vpack.c.b16 %v1961, %v1959
        %v2028 = vpack.c.b16 %v1964, %v1962
        %v2029 = vpack.c.b16 %v1965, %v1963
        %v2030 = vpack.c.b16 %v1968, %v1966
        %v2031 = vpack.c.b16 %v1969, %v1967
        %v2032 = vpack.c.b16 %v1972, %v1970
        %v2033 = vpack.c.b16 %v1973, %v1971
        %v2034 = vpack.c.b16 %v1976, %v1974
        %v2035 = vpack.c.b16 %v1977, %v1975
        %v2036 = vpack.c.b16 %v1980, %v1978
        %v2037 = vpack.c.b16 %v1981, %v1979
        %v2038 = vpack.c.b16 %v1984, %v1982
        %v2039 = vpack.c.b16 %v1985, %v1983
        %v2040 = vpack.c.b16 %v1988, %v1986
        %v2041 = vpack.c.b16 %v1989, %v1987
        %v2042 = vpack.c.b16 %v1992, %v1990
        %v2043 = vpack.c.b16 %v1993, %v1991
        %v2044 = vpack.c.b16 %v1996, %v1994
        %v2045 = vpack.c.b16 %v1997, %v1995
        %2094 = vmatprep.subr.bf16.mxu0 %v1999
        %2095 = vmatpush1.bf16.msra.mxu0 %v1998
        %2096 = vmatprep.subr.bf16.mxu0 %v2001
        %2097 = vmatpush1.bf16.msra.mxu0 %v2000
        %2098 = vmatprep.subr.bf16.mxu0 %v2003
        %2099 = vmatpush1.bf16.msra.mxu0 %v2002
        %2100 = vmatprep.subr.bf16.mxu0 %v2005
        %2101 = vmatpush1.bf16.msra.mxu0 %v2004
        %2102 = vmatprep.subr.bf16.mxu0 %v2007
        %2103 = vmatpush1.bf16.msra.mxu0 %v2006
        %2104 = vmatprep.subr.bf16.mxu0 %v2009
        %2105 = vmatpush1.bf16.msra.mxu0 %v2008
        %2106 = vmatprep.subr.bf16.mxu0 %v2011
        %2107 = vmatpush1.bf16.msra.mxu0 %v2010
        %2108 = vmatprep.subr.bf16.mxu0 %v2013
        %2109 = vmatpush1.bf16.msra.mxu0 %v2012
        %2110 = vmatprep.subr.bf16.mxu0 %v2015
        %2111 = vmatpush1.bf16.msra.mxu0 %v2014
        %2112 = vmatprep.subr.bf16.mxu0 %v2017
        %2113 = vmatpush1.bf16.msra.mxu0 %v2016
        %2114 = vmatprep.subr.bf16.mxu0 %v2019
        %2115 = vmatpush1.bf16.msra.mxu0 %v2018
        %2116 = vmatprep.subr.bf16.mxu0 %v2021
        %2117 = vmatpush1.bf16.msra.mxu0 %v2020
        %2118 = vmatprep.subr.bf16.mxu0 %v2023
        %2119 = vmatpush1.bf16.msra.mxu0 %v2022
        %2120 = vmatprep.subr.bf16.mxu0 %v2025
        %2121 = vmatpush1.bf16.msra.mxu0 %v2024
        %2122 = vmatprep.subr.bf16.mxu0 %v2027
        %2123 = vmatpush1.bf16.msra.mxu0 %v2026
        %2124 = vmatprep.subr.bf16.mxu0 %v2029
        %2125 = vmatpush1.bf16.msra.mxu0 %v2028
        %2126 = vmatprep.mubr.bf16.mxu0 %v1792
        %2127 = vmatmul.mubr.bf16.gmra.mrb[0].mxu0 %v1791
        %v2128 = vpop.f32.mrb[0].mxu0
        %v2129 = vadd.f32 %v1847, %v2128
        %v2130 = vpop.f32.mrb[0].mxu0
        %v2131 = vadd.f32 %v1851, %v2130
        %v2132 = vpop.f32.mrb[0].mxu0
        %v2133 = vadd.f32 %v1847, %v2132
        %v2134 = vpop.f32.mrb[0].mxu0
        %v2135 = vadd.f32 %v1851, %v2134
        %2136 = vdwg.mxu0
        %2137 = vmatprep.subr.bf16.mxu0 %v2031
        %2138 = vmatpush1.bf16.msra.mxu0 %v2030
        %2139 = vmatprep.subr.bf16.mxu0 %v2033
        %2140 = vmatpush1.bf16.msra.mxu0 %v2032
        %2141 = vmatprep.subr.bf16.mxu0 %v2035
        %2142 = vmatpush1.bf16.msra.mxu0 %v2034
        %2143 = vmatprep.subr.bf16.mxu0 %v2037
        %2144 = vmatpush1.bf16.msra.mxu0 %v2036
        %2145 = vmatprep.subr.bf16.mxu0 %v2039
        %2146 = vmatpush1.bf16.msra.mxu0 %v2038
        %2147 = vmatprep.subr.bf16.mxu0 %v2041
        %2148 = vmatpush1.bf16.msra.mxu0 %v2040
        %2149 = vmatprep.subr.bf16.mxu0 %v2043
        %2150 = vmatpush1.bf16.msra.mxu0 %v2042
        %2151 = vmatprep.subr.bf16.mxu0 %v2045
        %2152 = vmatpush1.bf16.msra.mxu0 %v2044
        %2153 = vmatprep.subr.bf16.mxu0 0
        %2154 = vmatpush1.bf16.msra.mxu0 0
        %2155 = vmatprep.subr.bf16.mxu0 0
        %2156 = vmatpush1.bf16.msra.mxu0 0
        %2157 = vmatprep.subr.bf16.mxu0 0
        %2158 = vmatpush1.bf16.msra.mxu0 0
        %2159 = vmatprep.subr.bf16.mxu0 0
        %2160 = vmatpush1.bf16.msra.mxu0 0
        %2161 = vmatprep.subr.bf16.mxu0 0
        %2162 = vmatpush1.bf16.msra.mxu0 0
        %2163 = vmatprep.subr.bf16.mxu0 0
        %2164 = vmatpush1.bf16.msra.mxu0 0
        %2165 = vmatprep.subr.bf16.mxu0 0
        %2166 = vmatpush1.bf16.msra.mxu0 0
        %2167 = vmatprep.subr.bf16.mxu0 0
        %2168 = vmatpush1.bf16.msra.mxu0 0
        %2169 = vmatprep.mubr.bf16.mxu0 0
        %2170 = vmatmul.mubr.bf16.gmra.mrb[0].mxu0 %v1793
        %v2171 = vpop.f32.mrb[0].mxu0
        %v2172 = vadd.f32 %v2129, %v2171
        %v2173 = vpop.f32.mrb[0].mxu0
        %v2174 = vadd.f32 %v2131, %v2173
        %v2175 = vpop.f32.mrb[0].mxu0
        %v2176 = vadd.f32 %v2133, %v2175
        %v2177 = vpop.f32.mrb[0].mxu0
        %v2178 = vadd.f32 %v2135, %v2177
        %2179 = vdwg.mxu0
        %v2180 = vmax.f32 %v2172, 0.0
        %v2181 = vmax.f32 %v2174, 0.0
        %v2182 = vmax.f32 %v2176, 0.0
        %v2183 = vmax.f32 %v2178, 0.0
        %v2184 = vpack.c.bf16 %v2182, %v2180
        %v2185 = vpack.c.bf16 %v2183, %v2181
        %v2186 = vld [vmem:[#allocation10] sm:$0xf]
        %v2187 = vld [vmem:[#allocation10 + $0x4] sm:$0xf]
        %v2188 = vld [vmem:[#allocation10 + $0x8] sm:$0xf]
        %v2189 = vld [vmem:[#allocation10 + $0xc] sm:$0xf]
        %v2190 = vld [vmem:[#allocation10 + $0x10] sm:$0xf]
        %v2191 = vld [vmem:[#allocation10 + $0x14] sm:$0xf]
        %v2192 = vld [vmem:[#allocation10 + $0x18] sm:$0xf]
        %v2193 = vld [vmem:[#allocation10 + $0x1c] sm:$0xf]
        %v2194 = vld [vmem:[#allocation10 + $0x20] sm:$0xf]
        %v2195 = vld [vmem:[#allocation10 + $0x24] sm:$0xf]
        %v2196 = vld [vmem:[#allocation10 + $0x28] sm:$0xf]
        %v2197 = vld [vmem:[#allocation10 + $0x2c] sm:$0xf]
        %v2198 = vld [vmem:[#allocation10 + $0x30] sm:$0xf]
        %v2199 = vld [vmem:[#allocation10 + $0x34] sm:$0xf]
        %v2200 = vld [vmem:[#allocation10 + $0x38] sm:$0xf]
        %v2201 = vld [vmem:[#allocation10 + $0x3c] sm:$0xf]
        %v2202 = vld [vmem:[#allocation10 + $0x40] sm:$0xf]
        %v2203 = vld [vmem:[#allocation10 + $0x44] sm:$0xf]
        %v2204 = vld [vmem:[#allocation10 + $0x48] sm:$0xf]
        %v2205 = vld [vmem:[#allocation10 + $0x4c] sm:$0xf]
        %v2206 = vld [vmem:[#allocation10 + $0x50] sm:$0xf]
        %v2207 = vld [vmem:[#allocation10 + $0x54] sm:$0xf]
        %v2208 = vld [vmem:[#allocation10 + $0x58] sm:$0xf]
        %v2209 = vld [vmem:[#allocation10 + $0x5c] sm:$0xf]
        %v2210 = vld [vmem:[#allocation10 + $0x60] sm:$0xf]
        %v2211 = vld [vmem:[#allocation10 + $0x64] sm:$0xf]
        %v2212 = vld [vmem:[#allocation10 + $0x68] sm:$0xf]
        %v2213 = vld [vmem:[#allocation10 + $0x6c] sm:$0xf]
        %v2214 = vld [vmem:[#allocation10 + $0x70] sm:$0xf]
        %v2215 = vld [vmem:[#allocation10 + $0x74] sm:$0xf]
        %v2216 = vld [vmem:[#allocation10 + $0x78] sm:$0xf]
        %v2217 = vld [vmem:[#allocation10 + $0x7c] sm:$0xf]
        %v2218 = vld [vmem:[#allocation12] sm:$0x1]
        %v2220 = vlaneseq
        %v2221 = vshrl.u32 %v2220, 7
        %v2222 = vsub.s32 0, %v2221
        %v2223 = vrot.slane %v2218, %v2222
        %v2257 = vunpack.c.l.b16 %v2186
        %v2258 = vunpack.c.l.b16 %v2187
        %v2259 = vunpack.c.l.b16 %v2188
        %v2260 = vunpack.c.l.b16 %v2189
        %v2261 = vunpack.c.l.b16 %v2190
        %v2262 = vunpack.c.l.b16 %v2191
        %v2263 = vunpack.c.l.b16 %v2192
        %v2264 = vunpack.c.l.b16 %v2193
        %v2265 = vunpack.c.l.b16 %v2194
        %v2266 = vunpack.c.l.b16 %v2195
        %v2267 = vunpack.c.l.b16 %v2196
        %v2268 = vunpack.c.l.b16 %v2197
        %v2269 = vunpack.c.l.b16 %v2198
        %v2270 = vunpack.c.l.b16 %v2199
        %v2271 = vunpack.c.l.b16 %v2200
        %v2272 = vunpack.c.l.b16 %v2201
        %v2273 = vunpack.c.l.b16 %v2202
        %v2274 = vunpack.c.l.b16 %v2203
        %v2275 = vunpack.c.l.b16 %v2204
        %v2276 = vunpack.c.l.b16 %v2205
        %v2277 = vunpack.c.l.b16 %v2206
        %v2278 = vunpack.c.l.b16 %v2207
        %v2279 = vunpack.c.l.b16 %v2208
        %v2280 = vunpack.c.l.b16 %v2209
        %v2281 = vunpack.c.l.b16 %v2210
        %v2282 = vunpack.c.l.b16 %v2211
        %v2283 = vunpack.c.l.b16 %v2212
        %v2284 = vunpack.c.l.b16 %v2213
        %v2285 = vunpack.c.l.b16 %v2214
        %v2286 = vunpack.c.l.b16 %v2215
        %v2287 = vunpack.c.l.b16 %v2216
        %v2288 = vunpack.c.l.b16 %v2217
        %v2289 = vpack.c.b16 %v2258, %v2257
        %v2290 = vpack.c.b16 %v2260, %v2259
        %v2291 = vpack.c.b16 %v2262, %v2261
        %v2292 = vpack.c.b16 %v2264, %v2263
        %v2293 = vpack.c.b16 %v2266, %v2265
        %v2294 = vpack.c.b16 %v2268, %v2267
        %v2295 = vpack.c.b16 %v2270, %v2269
        %v2296 = vpack.c.b16 %v2272, %v2271
        %v2297 = vpack.c.b16 %v2274, %v2273
        %v2298 = vpack.c.b16 %v2276, %v2275
        %v2299 = vpack.c.b16 %v2278, %v2277
        %v2300 = vpack.c.b16 %v2280, %v2279
        %v2301 = vpack.c.b16 %v2282, %v2281
        %v2302 = vpack.c.b16 %v2284, %v2283
        %v2303 = vpack.c.b16 %v2286, %v2285
        %v2304 = vpack.c.b16 %v2288, %v2287
        %2321 = vmatprep.subr.bf16.mxu0 0
        %2322 = vmatpush1.bf16.msra.mxu0 %v2289
        %2323 = vmatprep.subr.bf16.mxu0 0
        %2324 = vmatpush1.bf16.msra.mxu0 %v2290
        %2325 = vmatprep.subr.bf16.mxu0 0
        %2326 = vmatpush1.bf16.msra.mxu0 %v2291
        %2327 = vmatprep.subr.bf16.mxu0 0
        %2328 = vmatpush1.bf16.msra.mxu0 %v2292
        %2329 = vmatprep.subr.bf16.mxu0 0
        %2330 = vmatpush1.bf16.msra.mxu0 %v2293
        %2331 = vmatprep.subr.bf16.mxu0 0
        %2332 = vmatpush1.bf16.msra.mxu0 %v2294
        %2333 = vmatprep.subr.bf16.mxu0 0
        %2334 = vmatpush1.bf16.msra.mxu0 %v2295
        %2335 = vmatprep.subr.bf16.mxu0 0
        %2336 = vmatpush1.bf16.msra.mxu0 %v2296
        %2337 = vmatprep.subr.bf16.mxu0 0
        %2338 = vmatpush1.bf16.msra.mxu0 %v2297
        %2339 = vmatprep.subr.bf16.mxu0 0
        %2340 = vmatpush1.bf16.msra.mxu0 %v2298
        %2341 = vmatprep.subr.bf16.mxu0 0
        %2342 = vmatpush1.bf16.msra.mxu0 %v2299
        %2343 = vmatprep.subr.bf16.mxu0 0
        %2344 = vmatpush1.bf16.msra.mxu0 %v2300
        %2345 = vmatprep.subr.bf16.mxu0 0
        %2346 = vmatpush1.bf16.msra.mxu0 %v2301
        %2347 = vmatprep.subr.bf16.mxu0 0
        %2348 = vmatpush1.bf16.msra.mxu0 %v2302
        %2349 = vmatprep.subr.bf16.mxu0 0
        %2350 = vmatpush1.bf16.msra.mxu0 %v2303
        %2351 = vmatprep.subr.bf16.mxu0 0
        %2352 = vmatpush1.bf16.msra.mxu0 %v2304
        %2353 = vmatprep.mubr.bf16.mxu0 %v2185
        %2354 = vmatmul.mubr.bf16.gmra.mrb[0].mxu0 %v2184
        %v2355 = vpop.f32.mrb[0].mxu0
        %v2356 = vadd.f32 %v2223, %v2355
        %v2357 = vpop.f32.mrb[0].mxu0
        %v2358 = vpop.f32.mrb[0].mxu0
        %v2359 = vadd.f32 %v2223, %v2358
        %v2360 = vpop.f32.mrb[0].mxu0
        %2361 = vdwg.mxu0
        %v2362 = vmax.f32 %v2356, 0.0
        %v2363 = vmax.f32 %v2359, 0.0
        %v2364 = vpack.c.bf16 %v2363, %v2362
        %v2365 = vld [vmem:[%s9] sm:$0xf]
        %v2366 = vld [vmem:[%s9 + $0x4] sm:$0xf]
        %v2367 = vld [vmem:[%s9 + $0x8] sm:$0xf]
        %v2368 = vld [vmem:[%s9 + $0xc] sm:$0xf]
        %v2369 = vld [vmem:[%s9 + $0x10] sm:$0xf]
        %v2370 = vld [vmem:[%s9 + $0x14] sm:$0xf]
        %v2371 = vld [vmem:[%s9 + $0x18] sm:$0xf]
        %v2372 = vld [vmem:[%s9 + $0x1c] sm:$0xf]
        %v2373 = vld [vmem:[%s9 + $0x20] sm:$0xf]
        %v2374 = vld [vmem:[%s9 + $0x24] sm:$0xf]
        %v2375 = vld [vmem:[%s9 + $0x28] sm:$0xf]
        %v2376 = vld [vmem:[%s9 + $0x2c] sm:$0xf]
        %v2377 = vld [vmem:[%s9 + $0x30] sm:$0xf]
        %v2378 = vld [vmem:[%s9 + $0x34] sm:$0xf]
        %v2379 = vld [vmem:[%s9 + $0x38] sm:$0xf]
        %v2380 = vld [vmem:[%s9 + $0x3c] sm:$0xf]
        %v2381 = vld [vmem:[#allocation13] sm:$0x1]
        %v2383 = vlaneseq
        %v2384 = vshrl.u32 %v2383, 7
        %v2385 = vsub.s32 0, %v2384
        %v2386 = vrot.slane %v2381, %v2385
        %v2404 = vunpack.c.l.b16 %v2365
        %v2405 = vunpack.c.l.b16 %v2366
        %v2406 = vunpack.c.l.b16 %v2367
        %v2407 = vunpack.c.l.b16 %v2368
        %v2408 = vunpack.c.l.b16 %v2369
        %v2409 = vunpack.c.l.b16 %v2370
        %v2410 = vunpack.c.l.b16 %v2371
        %v2411 = vunpack.c.l.b16 %v2372
        %v2412 = vunpack.c.l.b16 %v2373
        %v2413 = vunpack.c.l.b16 %v2374
        %v2414 = vunpack.c.l.b16 %v2375
        %v2415 = vunpack.c.l.b16 %v2376
        %v2416 = vunpack.c.l.b16 %v2377
        %v2417 = vunpack.c.l.b16 %v2378
        %v2418 = vunpack.c.l.b16 %v2379
        %v2419 = vunpack.c.l.b16 %v2380
        %v2420 = vpack.c.b16 %v2405, %v2404
        %v2421 = vpack.c.b16 %v2407, %v2406
        %v2422 = vpack.c.b16 %v2409, %v2408
        %v2423 = vpack.c.b16 %v2411, %v2410
        %v2424 = vpack.c.b16 %v2413, %v2412
        %v2425 = vpack.c.b16 %v2415, %v2414
        %v2426 = vpack.c.b16 %v2417, %v2416
        %v2427 = vpack.c.b16 %v2419, %v2418
        %2436 = vmatprep.subr.bf16.mxu0 0
        %2437 = vmatpush1.bf16.msra.mxu0 %v2420
        %2438 = vmatprep.subr.bf16.mxu0 0
        %2439 = vmatpush1.bf16.msra.mxu0 %v2421
        %2440 = vmatprep.subr.bf16.mxu0 0
        %2441 = vmatpush1.bf16.msra.mxu0 %v2422
        %2442 = vmatprep.subr.bf16.mxu0 0
        %2443 = vmatpush1.bf16.msra.mxu0 %v2423
        %2444 = vmatprep.subr.bf16.mxu0 0
        %2445 = vmatpush1.bf16.msra.mxu0 %v2424
        %2446 = vmatprep.subr.bf16.mxu0 0
        %2447 = vmatpush1.bf16.msra.mxu0 %v2425
        %2448 = vmatprep.subr.bf16.mxu0 0
        %2449 = vmatpush1.bf16.msra.mxu0 %v2426
        %2450 = vmatprep.subr.bf16.mxu0 0
        %2451 = vmatpush1.bf16.msra.mxu0 %v2427
        %2452 = vmatprep.subr.bf16.mxu0 0
        %2453 = vmatpush1.bf16.msra.mxu0 0
        %2454 = vmatprep.subr.bf16.mxu0 0
        %2455 = vmatpush1.bf16.msra.mxu0 0
        %2456 = vmatprep.subr.bf16.mxu0 0
        %2457 = vmatpush1.bf16.msra.mxu0 0
        %2458 = vmatprep.subr.bf16.mxu0 0
        %2459 = vmatpush1.bf16.msra.mxu0 0
        %2460 = vmatprep.subr.bf16.mxu0 0
        %2461 = vmatpush1.bf16.msra.mxu0 0
        %2462 = vmatprep.subr.bf16.mxu0 0
        %2463 = vmatpush1.bf16.msra.mxu0 0
        %2464 = vmatprep.subr.bf16.mxu0 0
        %2465 = vmatpush1.bf16.msra.mxu0 0
        %2466 = vmatprep.subr.bf16.mxu0 0
        %2467 = vmatpush1.bf16.msra.mxu0 0
        %2468 = vmatprep.mubr.bf16.mxu0 0
        %2469 = vmatmul.mubr.bf16.gmra.mrb[0].mxu0 %v2364
        %v2470 = vpop.f32.mrb[0].mxu0
        %v2471 = vadd.f32 %v2386, %v2470
        %v2472 = vpop.f32.mrb[0].mxu0
        %v2473 = vpop.f32.mrb[0].mxu0
        %v2474 = vadd.f32 %v2386, %v2473
        %v2475 = vpop.f32.mrb[0].mxu0
        %2476 = vdwg.mxu0
        %v2477 = vmax.f32 %v2471, 0.0
        %v2478 = vmax.f32 %v2474, 0.0
        %v2479 = vpack.c.bf16 %v2478, %v2477
        %v2480 = vld [vmem:[#allocation15] sm:$0xf]
        %v2481 = vld [vmem:[#allocation15 + $0x4] sm:$0xf]
        %v2482 = vld [vmem:[#allocation15 + $0x8] sm:$0xf]
        %v2483 = vld [vmem:[#allocation15 + $0xc] sm:$0xf]
        %v2484 = vld [vmem:[#allocation15 + $0x10] sm:$0xf]
        %v2485 = vld [vmem:[#allocation15 + $0x14] sm:$0xf]
        %v2486 = vld [vmem:[#allocation15 + $0x18] sm:$0xf]
        %v2487 = vld [vmem:[#allocation15 + $0x1c] sm:$0xf]
        %v2488 = vld [vmem:[#allocation15 + $0x20] sm:$0xf]
        %v2489 = vld [vmem:[#allocation15 + $0x24] sm:$0xf]
        %v2490 = vld [vmem:[#allocation15 + $0x28] sm:$0xf]
        %v2491 = vld [vmem:[#allocation15 + $0x2c] sm:$0xf]
        %v2492 = vld [vmem:[#allocation15 + $0x30] sm:$0xf]
        %v2493 = vld [vmem:[#allocation15 + $0x34] sm:$0xf]
        %v2494 = vld [vmem:[#allocation15 + $0x38] sm:$0xf]
        %v2495 = vld [vmem:[#allocation15 + $0x3c] sm:$0xf]
        %v2496 = vld [vmem:[%s12] sm:$0x1]
        %v2498 = vlaneseq
        %v2499 = vshrl.u32 %v2498, 7
        %v2500 = vsub.s32 0, %v2499
        %v2501 = vrot.slane %v2496, %v2500
        %v2519 = vunpack.c.l.b16 %v2480
        %v2520 = vunpack.c.l.b16 %v2481
        %v2521 = vunpack.c.l.b16 %v2482
        %v2522 = vunpack.c.l.b16 %v2483
        %v2523 = vunpack.c.l.b16 %v2484
        %v2524 = vunpack.c.l.b16 %v2485
        %v2525 = vunpack.c.l.b16 %v2486
        %v2526 = vunpack.c.l.b16 %v2487
        %v2527 = vunpack.c.l.b16 %v2488
        %v2528 = vunpack.c.l.b16 %v2489
        %v2529 = vunpack.c.l.b16 %v2490
        %v2530 = vunpack.c.l.b16 %v2491
        %v2531 = vunpack.c.l.b16 %v2492
        %v2532 = vunpack.c.l.b16 %v2493
        %v2533 = vunpack.c.l.b16 %v2494
        %v2534 = vunpack.c.l.b16 %v2495
        %v2535 = vpack.c.b16 %v2520, %v2519
        %v2536 = vpack.c.b16 %v2522, %v2521
        %v2537 = vpack.c.b16 %v2524, %v2523
        %v2538 = vpack.c.b16 %v2526, %v2525
        %v2539 = vpack.c.b16 %v2528, %v2527
        %v2540 = vpack.c.b16 %v2530, %v2529
        %v2541 = vpack.c.b16 %v2532, %v2531
        %v2542 = vpack.c.b16 %v2534, %v2533
        %2551 = vmatprep.subr.bf16.mxu0 0
        %2552 = vmatpush1.bf16.msra.mxu0 %v2535
        %2553 = vmatprep.subr.bf16.mxu0 0
        %2554 = vmatpush1.bf16.msra.mxu0 %v2536
        %2555 = vmatprep.subr.bf16.mxu0 0
        %2556 = vmatpush1.bf16.msra.mxu0 %v2537
        %2557 = vmatprep.subr.bf16.mxu0 0
        %2558 = vmatpush1.bf16.msra.mxu0 %v2538
        %2559 = vmatprep.subr.bf16.mxu0 0
        %2560 = vmatpush1.bf16.msra.mxu0 %v2539
        %2561 = vmatprep.subr.bf16.mxu0 0
        %2562 = vmatpush1.bf16.msra.mxu0 %v2540
        %2563 = vmatprep.subr.bf16.mxu0 0
        %2564 = vmatpush1.bf16.msra.mxu0 %v2541
        %2565 = vmatprep.subr.bf16.mxu0 0
        %2566 = vmatpush1.bf16.msra.mxu0 %v2542
        %2567 = vmatprep.subr.bf16.mxu0 0
        %2568 = vmatpush1.bf16.msra.mxu0 0
        %2569 = vmatprep.subr.bf16.mxu0 0
        %2570 = vmatpush1.bf16.msra.mxu0 0
        %2571 = vmatprep.subr.bf16.mxu0 0
        %2572 = vmatpush1.bf16.msra.mxu0 0
        %2573 = vmatprep.subr.bf16.mxu0 0
        %2574 = vmatpush1.bf16.msra.mxu0 0
        %2575 = vmatprep.subr.bf16.mxu0 0
        %2576 = vmatpush1.bf16.msra.mxu0 0
        %2577 = vmatprep.subr.bf16.mxu0 0
        %2578 = vmatpush1.bf16.msra.mxu0 0
        %2579 = vmatprep.subr.bf16.mxu0 0
        %2580 = vmatpush1.bf16.msra.mxu0 0
        %2581 = vmatprep.subr.bf16.mxu0 0
        %2582 = vmatpush1.bf16.msra.mxu0 0
        %2583 = vmatprep.mubr.bf16.mxu0 0
        %2584 = vmatmul.mubr.bf16.gmra.mrb[0].mxu0 %v2479
        %v2585 = vpop.f32.mrb[0].mxu0
        %v2586 = vadd.f32 %v2501, %v2585
        %v2587 = vpop.f32.mrb[0].mxu0
        %v2588 = vpop.f32.mrb[0].mxu0
        %v2589 = vadd.f32 %v2501, %v2588
        %v2590 = vpop.f32.mrb[0].mxu0
        %2591 = vdwg.mxu0
        %v2592 = vmax.f32 %v2586, 0.0
        %v2593 = vmax.f32 %v2589, 0.0
        %v2594 = vpack.c.bf16 %v2593, %v2592
        %v2595 = vld [vmem:[#allocation16] sm:$0xff]
        %v2596 = vld [vmem:[#allocation16 + $0x8] sm:$0xff]
        %v2597 = vld [vmem:[#allocation16 + $0x10] sm:$0xff]
        %v2598 = vld [vmem:[#allocation16 + $0x18] sm:$0xff]
        %v2599 = vld [vmem:[#allocation16 + $0x20] sm:$0xff]
        %v2600 = vld [vmem:[#allocation16 + $0x28] sm:$0xff]
        %v2601 = vld [vmem:[#allocation16 + $0x30] sm:$0xff]
        %v2602 = vld [vmem:[#allocation16 + $0x38] sm:$0xff]
        %v2603 = vld [vmem:[#allocation16 + $0x40] sm:$0xff]
        %v2604 = vld [vmem:[#allocation16 + $0x48] sm:$0xff]
        %v2605 = vld [vmem:[#allocation16 + $0x50] sm:$0xff]
        %v2606 = vld [vmem:[#allocation16 + $0x58] sm:$0xff]
        %v2607 = vld [vmem:[#allocation16 + $0x60] sm:$0xff]
        %v2608 = vld [vmem:[#allocation16 + $0x68] sm:$0xff]
        %v2609 = vld [vmem:[#allocation16 + $0x70] sm:$0xff]
        %v2610 = vld [vmem:[#allocation16 + $0x78] sm:$0xff]
        %v2611 = vld [vmem:[%s14] sm:$0x3]
        %v2613 = vlaneseq
        %v2614 = vshrl.u32 %v2613, 7
        %v2615 = vsub.s32 0, %v2614
        %v2616 = vrot.slane %v2611, %v2615
        %v2617 = vlaneseq
        %v2618 = vshrl.u32 %v2617, 7
        %v2619 = vsub.s32 1, %v2618
        %v2620 = vrot.slane %v2611, %v2619
        %v2639 = vunpack.c.l.b16 %v2595
        %v2640 = vunpack.c.h.b16 %v2595
        %v2641 = vunpack.c.l.b16 %v2596
        %v2642 = vunpack.c.h.b16 %v2596
        %v2643 = vunpack.c.l.b16 %v2597
        %v2644 = vunpack.c.h.b16 %v2597
        %v2645 = vunpack.c.l.b16 %v2598
        %v2646 = vunpack.c.h.b16 %v2598
        %v2647 = vunpack.c.l.b16 %v2599
        %v2648 = vunpack.c.h.b16 %v2599
        %v2649 = vunpack.c.l.b16 %v2600
        %v2650 = vunpack.c.h.b16 %v2600
        %v2651 = vunpack.c.l.b16 %v2601
        %v2652 = vunpack.c.h.b16 %v2601
        %v2653 = vunpack.c.l.b16 %v2602
        %v2654 = vunpack.c.h.b16 %v2602
        %v2655 = vunpack.c.l.b16 %v2603
        %v2656 = vunpack.c.h.b16 %v2603
        %v2657 = vunpack.c.l.b16 %v2604
        %v2658 = vunpack.c.h.b16 %v2604
        %v2659 = vunpack.c.l.b16 %v2605
        %v2660 = vunpack.c.h.b16 %v2605
        %v2661 = vunpack.c.l.b16 %v2606
        %v2662 = vunpack.c.h.b16 %v2606
        %v2663 = vunpack.c.l.b16 %v2607
        %v2664 = vunpack.c.h.b16 %v2607
        %v2665 = vunpack.c.l.b16 %v2608
        %v2666 = vunpack.c.h.b16 %v2608
        %v2667 = vunpack.c.l.b16 %v2609
        %v2668 = vunpack.c.h.b16 %v2609
        %v2669 = vunpack.c.l.b16 %v2610
        %v2670 = vunpack.c.h.b16 %v2610
        %v2671 = vpack.c.b16 %v2641, %v2639
        %v2672 = vpack.c.b16 %v2642, %v2640
        %v2673 = vpack.c.b16 %v2645, %v2643
        %v2674 = vpack.c.b16 %v2646, %v2644
        %v2675 = vpack.c.b16 %v2649, %v2647
        %v2676 = vpack.c.b16 %v2650, %v2648
        %v2677 = vpack.c.b16 %v2653, %v2651
        %v2678 = vpack.c.b16 %v2654, %v2652
        %v2679 = vpack.c.b16 %v2657, %v2655
        %v2680 = vpack.c.b16 %v2658, %v2656
        %v2681 = vpack.c.b16 %v2661, %v2659
        %v2682 = vpack.c.b16 %v2662, %v2660
        %v2683 = vpack.c.b16 %v2665, %v2663
        %v2684 = vpack.c.b16 %v2666, %v2664
        %v2685 = vpack.c.b16 %v2669, %v2667
        %v2686 = vpack.c.b16 %v2670, %v2668
        %2703 = vmatprep.subr.bf16.mxu0 %v2672
        %2704 = vmatpush1.bf16.msra.mxu0 %v2671
        %2705 = vmatprep.subr.bf16.mxu0 %v2674
        %2706 = vmatpush1.bf16.msra.mxu0 %v2673
        %2707 = vmatprep.subr.bf16.mxu0 %v2676
        %2708 = vmatpush1.bf16.msra.mxu0 %v2675
        %2709 = vmatprep.subr.bf16.mxu0 %v2678
        %2710 = vmatpush1.bf16.msra.mxu0 %v2677
        %2711 = vmatprep.subr.bf16.mxu0 %v2680
        %2712 = vmatpush1.bf16.msra.mxu0 %v2679
        %2713 = vmatprep.subr.bf16.mxu0 %v2682
        %2714 = vmatpush1.bf16.msra.mxu0 %v2681
        %2715 = vmatprep.subr.bf16.mxu0 %v2684
        %2716 = vmatpush1.bf16.msra.mxu0 %v2683
        %2717 = vmatprep.subr.bf16.mxu0 %v2686
        %2718 = vmatpush1.bf16.msra.mxu0 %v2685
        %2719 = vmatprep.subr.bf16.mxu0 0
        %2720 = vmatpush1.bf16.msra.mxu0 0
        %2721 = vmatprep.subr.bf16.mxu0 0
        %2722 = vmatpush1.bf16.msra.mxu0 0
        %2723 = vmatprep.subr.bf16.mxu0 0
        %2724 = vmatpush1.bf16.msra.mxu0 0
        %2725 = vmatprep.subr.bf16.mxu0 0
        %2726 = vmatpush1.bf16.msra.mxu0 0
        %2727 = vmatprep.subr.bf16.mxu0 0
        %2728 = vmatpush1.bf16.msra.mxu0 0
        %2729 = vmatprep.subr.bf16.mxu0 0
        %2730 = vmatpush1.bf16.msra.mxu0 0
        %2731 = vmatprep.subr.bf16.mxu0 0
        %2732 = vmatpush1.bf16.msra.mxu0 0
        %2733 = vmatprep.subr.bf16.mxu0 0
        %2734 = vmatpush1.bf16.msra.mxu0 0
        %2735 = vmatprep.mubr.bf16.mxu0 0
        %2736 = vmatmul.mubr.bf16.gmra.mrb[0].mxu0 %v2594
        %v2737 = vpop.f32.mrb[0].mxu0
        %v2738 = vadd.f32 %v2616, %v2737
        %v2739 = vpop.f32.mrb[0].mxu0
        %v2740 = vadd.f32 %v2620, %v2739
        %v2741 = vpop.f32.mrb[0].mxu0
        %v2742 = vadd.f32 %v2616, %v2741
        %v2743 = vpop.f32.mrb[0].mxu0
        %v2744 = vadd.f32 %v2620, %v2743
        %2745 = vdwg.mxu0
        %v2746 = vmax.f32 %v2738, 0.0
        %v2747 = vmax.f32 %v2740, 0.0
        %v2748 = vmax.f32 %v2742, 0.0
        %v2749 = vmax.f32 %v2744, 0.0
        %v2750 = vpack.c.bf16 %v2748, %v2746
        %v2751 = vpack.c.bf16 %v2749, %v2747
        %v2752 = vld [vmem:[#allocation18] sm:$0xff]
        %v2753 = vld [vmem:[#allocation18 + $0x8] sm:$0xf]
        %v2754 = vld [vmem:[#allocation18 + $0xc] sm:$0xff]
        %v2755 = vld [vmem:[#allocation18 + $0x14] sm:$0xf]
        %v2756 = vld [vmem:[#allocation18 + $0x18] sm:$0xff]
        %v2757 = vld [vmem:[#allocation18 + $0x20] sm:$0xf]
        %v2758 = vld [vmem:[#allocation18 + $0x24] sm:$0xff]
        %v2759 = vld [vmem:[#allocation18 + $0x2c] sm:$0xf]
        %v2760 = vld [vmem:[#allocation18 + $0x30] sm:$0xff]
        %v2761 = vld [vmem:[#allocation18 + $0x38] sm:$0xf]
        %v2762 = vld [vmem:[#allocation18 + $0x3c] sm:$0xff]
        %v2763 = vld [vmem:[#allocation18 + $0x44] sm:$0xf]
        %v2764 = vld [vmem:[#allocation18 + $0x48] sm:$0xff]
        %v2765 = vld [vmem:[#allocation18 + $0x50] sm:$0xf]
        %v2766 = vld [vmem:[#allocation18 + $0x54] sm:$0xff]
        %v2767 = vld [vmem:[#allocation18 + $0x5c] sm:$0xf]
        %v2768 = vld [vmem:[#allocation18 + $0x60] sm:$0xff]
        %v2769 = vld [vmem:[#allocation18 + $0x68] sm:$0xf]
        %v2770 = vld [vmem:[#allocation18 + $0x6c] sm:$0xff]
        %v2771 = vld [vmem:[#allocation18 + $0x74] sm:$0xf]
        %v2772 = vld [vmem:[#allocation18 + $0x78] sm:$0xff]
        %v2773 = vld [vmem:[#allocation18 + $0x80] sm:$0xf]
        %v2774 = vld [vmem:[#allocation18 + $0x84] sm:$0xff]
        %v2775 = vld [vmem:[#allocation18 + $0x8c] sm:$0xf]
        %v2776 = vld [vmem:[#allocation18 + $0x90] sm:$0xff]
        %v2777 = vld [vmem:[#allocation18 + $0x98] sm:$0xf]
        %v2778 = vld [vmem:[#allocation18 + $0x9c] sm:$0xff]
        %v2779 = vld [vmem:[#allocation18 + $0xa4] sm:$0xf]
        %v2780 = vld [vmem:[#allocation18 + $0xa8] sm:$0xff]
        %v2781 = vld [vmem:[#allocation18 + $0xb0] sm:$0xf]
        %v2782 = vld [vmem:[#allocation18 + $0xb4] sm:$0xff]
        %v2783 = vld [vmem:[#allocation18 + $0xbc] sm:$0xf]
        %v2784 = vld [vmem:[#allocation18 + $0xc0] sm:$0xff]
        %v2785 = vld [vmem:[#allocation18 + $0xc8] sm:$0xf]
        %v2786 = vld [vmem:[#allocation18 + $0xcc] sm:$0xff]
        %v2787 = vld [vmem:[#allocation18 + $0xd4] sm:$0xf]
        %v2788 = vld [vmem:[#allocation18 + $0xd8] sm:$0xff]
        %v2789 = vld [vmem:[#allocation18 + $0xe0] sm:$0xf]
        %v2790 = vld [vmem:[#allocation18 + $0xe4] sm:$0xff]
        %v2791 = vld [vmem:[#allocation18 + $0xec] sm:$0xf]
        %v2792 = vld [vmem:[#allocation18 + $0xf0] sm:$0xff]
        %v2793 = vld [vmem:[#allocation18 + $0xf8] sm:$0xf]
        %v2794 = vld [vmem:[#allocation18 + $0xfc] sm:$0xff]
        %v2795 = vld [vmem:[#allocation18 + $0x104] sm:$0xf]
        %v2796 = vld [vmem:[#allocation18 + $0x108] sm:$0xff]
        %v2797 = vld [vmem:[#allocation18 + $0x110] sm:$0xf]
        %v2798 = vld [vmem:[#allocation18 + $0x114] sm:$0xff]
        %v2799 = vld [vmem:[#allocation18 + $0x11c] sm:$0xf]
        %v2800 = vld [vmem:[#allocation18 + $0x120] sm:$0xff]
        %v2801 = vld [vmem:[#allocation18 + $0x128] sm:$0xf]
        %v2802 = vld [vmem:[#allocation18 + $0x12c] sm:$0xff]
        %v2803 = vld [vmem:[#allocation18 + $0x134] sm:$0xf]
        %v2804 = vld [vmem:[#allocation18 + $0x138] sm:$0xff]
        %v2805 = vld [vmem:[#allocation18 + $0x140] sm:$0xf]
        %v2806 = vld [vmem:[#allocation18 + $0x144] sm:$0xff]
        %v2807 = vld [vmem:[#allocation18 + $0x14c] sm:$0xf]
        %v2808 = vld [vmem:[#allocation18 + $0x150] sm:$0xff]
        %v2809 = vld [vmem:[#allocation18 + $0x158] sm:$0xf]
        %v2810 = vld [vmem:[#allocation18 + $0x15c] sm:$0xff]
        %v2811 = vld [vmem:[#allocation18 + $0x164] sm:$0xf]
        %v2812 = vld [vmem:[#allocation18 + $0x168] sm:$0xff]
        %v2813 = vld [vmem:[#allocation18 + $0x170] sm:$0xf]
        %v2814 = vld [vmem:[#allocation18 + $0x174] sm:$0xff]
        %v2815 = vld [vmem:[#allocation18 + $0x17c] sm:$0xf]
        %v2816 = vld [vmem:[%s16] sm:$0x7]
        %v2818 = vlaneseq
        %v2819 = vshrl.u32 %v2818, 7
        %v2820 = vsub.s32 0, %v2819
        %v2821 = vrot.slane %v2816, %v2820
        %v2822 = vlaneseq
        %v2823 = vshrl.u32 %v2822, 7
        %v2824 = vsub.s32 1, %v2823
        %v2825 = vrot.slane %v2816, %v2824
        %v2826 = vlaneseq
        %v2827 = vshrl.u32 %v2826, 7
        %v2828 = vsub.s32 2, %v2827
        %v2829 = vrot.slane %v2816, %v2828
        %v2897 = vunpack.c.l.b16 %v2752
        %v2898 = vunpack.c.h.b16 %v2752
        %v2899 = vunpack.c.l.b16 %v2753
        %v2900 = vunpack.c.l.b16 %v2754
        %v2901 = vunpack.c.h.b16 %v2754
        %v2902 = vunpack.c.l.b16 %v2755
        %v2903 = vunpack.c.l.b16 %v2756
        %v2904 = vunpack.c.h.b16 %v2756
        %v2905 = vunpack.c.l.b16 %v2757
        %v2906 = vunpack.c.l.b16 %v2758
        %v2907 = vunpack.c.h.b16 %v2758
        %v2908 = vunpack.c.l.b16 %v2759
        %v2909 = vunpack.c.l.b16 %v2760
        %v2910 = vunpack.c.h.b16 %v2760
        %v2911 = vunpack.c.l.b16 %v2761
        %v2912 = vunpack.c.l.b16 %v2762
        %v2913 = vunpack.c.h.b16 %v2762
        %v2914 = vunpack.c.l.b16 %v2763
        %v2915 = vunpack.c.l.b16 %v2764
        %v2916 = vunpack.c.h.b16 %v2764
        %v2917 = vunpack.c.l.b16 %v2765
        %v2918 = vunpack.c.l.b16 %v2766
        %v2919 = vunpack.c.h.b16 %v2766
        %v2920 = vunpack.c.l.b16 %v2767
        %v2921 = vunpack.c.l.b16 %v2768
        %v2922 = vunpack.c.h.b16 %v2768
        %v2923 = vunpack.c.l.b16 %v2769
        %v2924 = vunpack.c.l.b16 %v2770
        %v2925 = vunpack.c.h.b16 %v2770
        %v2926 = vunpack.c.l.b16 %v2771
        %v2927 = vunpack.c.l.b16 %v2772
        %v2928 = vunpack.c.h.b16 %v2772
        %v2929 = vunpack.c.l.b16 %v2773
        %v2930 = vunpack.c.l.b16 %v2774
        %v2931 = vunpack.c.h.b16 %v2774
        %v2932 = vunpack.c.l.b16 %v2775
        %v2933 = vunpack.c.l.b16 %v2776
        %v2934 = vunpack.c.h.b16 %v2776
        %v2935 = vunpack.c.l.b16 %v2777
        %v2936 = vunpack.c.l.b16 %v2778
        %v2937 = vunpack.c.h.b16 %v2778
        %v2938 = vunpack.c.l.b16 %v2779
        %v2939 = vunpack.c.l.b16 %v2780
        %v2940 = vunpack.c.h.b16 %v2780
        %v2941 = vunpack.c.l.b16 %v2781
        %v2942 = vunpack.c.l.b16 %v2782
        %v2943 = vunpack.c.h.b16 %v2782
        %v2944 = vunpack.c.l.b16 %v2783
        %v2945 = vunpack.c.l.b16 %v2784
        %v2946 = vunpack.c.h.b16 %v2784
        %v2947 = vunpack.c.l.b16 %v2785
        %v2948 = vunpack.c.l.b16 %v2786
        %v2949 = vunpack.c.h.b16 %v2786
        %v2950 = vunpack.c.l.b16 %v2787
        %v2951 = vunpack.c.l.b16 %v2788
        %v2952 = vunpack.c.h.b16 %v2788
        %v2953 = vunpack.c.l.b16 %v2789
        %v2954 = vunpack.c.l.b16 %v2790
        %v2955 = vunpack.c.h.b16 %v2790
        %v2956 = vunpack.c.l.b16 %v2791
        %v2957 = vunpack.c.l.b16 %v2792
        %v2958 = vunpack.c.h.b16 %v2792
        %v2959 = vunpack.c.l.b16 %v2793
        %v2960 = vunpack.c.l.b16 %v2794
        %v2961 = vunpack.c.h.b16 %v2794
        %v2962 = vunpack.c.l.b16 %v2795
        %v2963 = vunpack.c.l.b16 %v2796
        %v2964 = vunpack.c.h.b16 %v2796
        %v2965 = vunpack.c.l.b16 %v2797
        %v2966 = vunpack.c.l.b16 %v2798
        %v2967 = vunpack.c.h.b16 %v2798
        %v2968 = vunpack.c.l.b16 %v2799
        %v2969 = vunpack.c.l.b16 %v2800
        %v2970 = vunpack.c.h.b16 %v2800
        %v2971 = vunpack.c.l.b16 %v2801
        %v2972 = vunpack.c.l.b16 %v2802
        %v2973 = vunpack.c.h.b16 %v2802
        %v2974 = vunpack.c.l.b16 %v2803
        %v2975 = vunpack.c.l.b16 %v2804
        %v2976 = vunpack.c.h.b16 %v2804
        %v2977 = vunpack.c.l.b16 %v2805
        %v2978 = vunpack.c.l.b16 %v2806
        %v2979 = vunpack.c.h.b16 %v2806
        %v2980 = vunpack.c.l.b16 %v2807
        %v2981 = vunpack.c.l.b16 %v2808
        %v2982 = vunpack.c.h.b16 %v2808
        %v2983 = vunpack.c.l.b16 %v2809
        %v2984 = vunpack.c.l.b16 %v2810
        %v2985 = vunpack.c.h.b16 %v2810
        %v2986 = vunpack.c.l.b16 %v2811
        %v2987 = vunpack.c.l.b16 %v2812
        %v2988 = vunpack.c.h.b16 %v2812
        %v2989 = vunpack.c.l.b16 %v2813
        %v2990 = vunpack.c.l.b16 %v2814
        %v2991 = vunpack.c.h.b16 %v2814
        %v2992 = vunpack.c.l.b16 %v2815
        %v2993 = vpack.c.b16 %v2900, %v2897
        %v2994 = vpack.c.b16 %v2901, %v2898
        %v2995 = vpack.c.b16 %v2902, %v2899
        %v2996 = vpack.c.b16 %v2906, %v2903
        %v2997 = vpack.c.b16 %v2907, %v2904
        %v2998 = vpack.c.b16 %v2908, %v2905
        %v2999 = vpack.c.b16 %v2912, %v2909
        %v3000 = vpack.c.b16 %v2913, %v2910
        %v3001 = vpack.c.b16 %v2914, %v2911
        %v3002 = vpack.c.b16 %v2918, %v2915
        %v3003 = vpack.c.b16 %v2919, %v2916
        %v3004 = vpack.c.b16 %v2920, %v2917
        %v3005 = vpack.c.b16 %v2924, %v2921
        %v3006 = vpack.c.b16 %v2925, %v2922
        %v3007 = vpack.c.b16 %v2926, %v2923
        %v3008 = vpack.c.b16 %v2930, %v2927
        %v3009 = vpack.c.b16 %v2931, %v2928
        %v3010 = vpack.c.b16 %v2932, %v2929
        %v3011 = vpack.c.b16 %v2936, %v2933
        %v3012 = vpack.c.b16 %v2937, %v2934
        %v3013 = vpack.c.b16 %v2938, %v2935
        %v3014 = vpack.c.b16 %v2942, %v2939
        %v3015 = vpack.c.b16 %v2943, %v2940
        %v3016 = vpack.c.b16 %v2944, %v2941
        %v3017 = vpack.c.b16 %v2948, %v2945
        %v3018 = vpack.c.b16 %v2949, %v2946
        %v3019 = vpack.c.b16 %v2950, %v2947
        %v3020 = vpack.c.b16 %v2954, %v2951
        %v3021 = vpack.c.b16 %v2955, %v2952
        %v3022 = vpack.c.b16 %v2956, %v2953
        %v3023 = vpack.c.b16 %v2960, %v2957
        %v3024 = vpack.c.b16 %v2961, %v2958
        %v3025 = vpack.c.b16 %v2962, %v2959
        %v3026 = vpack.c.b16 %v2966, %v2963
        %v3027 = vpack.c.b16 %v2967, %v2964
        %v3028 = vpack.c.b16 %v2968, %v2965
        %v3029 = vpack.c.b16 %v2972, %v2969
        %v3030 = vpack.c.b16 %v2973, %v2970
        %v3031 = vpack.c.b16 %v2974, %v2971
        %v3032 = vpack.c.b16 %v2978, %v2975
        %v3033 = vpack.c.b16 %v2979, %v2976
        %v3034 = vpack.c.b16 %v2980, %v2977
        %v3035 = vpack.c.b16 %v2984, %v2981
        %v3036 = vpack.c.b16 %v2985, %v2982
        %v3037 = vpack.c.b16 %v2986, %v2983
        %v3038 = vpack.c.b16 %v2990, %v2987
        %v3039 = vpack.c.b16 %v2991, %v2988
        %v3040 = vpack.c.b16 %v2992, %v2989
        %3089 = vmatprep.subr.bf16.mxu0 %v2994
        %3090 = vmatpush1.bf16.msra.mxu0 %v2993
        %3091 = vmatprep.subr.bf16.mxu0 %v2997
        %3092 = vmatpush1.bf16.msra.mxu0 %v2996
        %3093 = vmatprep.subr.bf16.mxu0 %v3000
        %3094 = vmatpush1.bf16.msra.mxu0 %v2999
        %3095 = vmatprep.subr.bf16.mxu0 %v3003
        %3096 = vmatpush1.bf16.msra.mxu0 %v3002
        %3097 = vmatprep.subr.bf16.mxu0 %v3006
        %3098 = vmatpush1.bf16.msra.mxu0 %v3005
        %3099 = vmatprep.subr.bf16.mxu0 %v3009
        %3100 = vmatpush1.bf16.msra.mxu0 %v3008
        %3101 = vmatprep.subr.bf16.mxu0 %v3012
        %3102 = vmatpush1.bf16.msra.mxu0 %v3011
        %3103 = vmatprep.subr.bf16.mxu0 %v3015
        %3104 = vmatpush1.bf16.msra.mxu0 %v3014
        %3105 = vmatprep.subr.bf16.mxu0 %v3018
        %3106 = vmatpush1.bf16.msra.mxu0 %v3017
        %3107 = vmatprep.subr.bf16.mxu0 %v3021
        %3108 = vmatpush1.bf16.msra.mxu0 %v3020
        %3109 = vmatprep.subr.bf16.mxu0 %v3024
        %3110 = vmatpush1.bf16.msra.mxu0 %v3023
        %3111 = vmatprep.subr.bf16.mxu0 %v3027
        %3112 = vmatpush1.bf16.msra.mxu0 %v3026
        %3113 = vmatprep.subr.bf16.mxu0 %v3030
        %3114 = vmatpush1.bf16.msra.mxu0 %v3029
        %3115 = vmatprep.subr.bf16.mxu0 %v3033
        %3116 = vmatpush1.bf16.msra.mxu0 %v3032
        %3117 = vmatprep.subr.bf16.mxu0 %v3036
        %3118 = vmatpush1.bf16.msra.mxu0 %v3035
        %3119 = vmatprep.subr.bf16.mxu0 %v3039
        %3120 = vmatpush1.bf16.msra.mxu0 %v3038
        %3121 = vmatprep.mubr.bf16.mxu0 %v2751
        %3122 = vmatmul.mubr.bf16.gmra.mrb[0].mxu0 %v2750
        %v3123 = vpop.f32.mrb[0].mxu0
        %v3124 = vadd.f32 %v2821, %v3123
        %v3125 = vpop.f32.mrb[0].mxu0
        %v3126 = vadd.f32 %v2825, %v3125
        %v3127 = vpop.f32.mrb[0].mxu0
        %v3128 = vadd.f32 %v2821, %v3127
        %v3129 = vpop.f32.mrb[0].mxu0
        %v3130 = vadd.f32 %v2825, %v3129
        %3131 = vdwg.mxu0
        %3132 = vmatprep.subr.bf16.mxu0 0
        %3133 = vmatpush1.bf16.msra.mxu0 %v2995
        %3134 = vmatprep.subr.bf16.mxu0 0
        %3135 = vmatpush1.bf16.msra.mxu0 %v2998
        %3136 = vmatprep.subr.bf16.mxu0 0
        %3137 = vmatpush1.bf16.msra.mxu0 %v3001
        %3138 = vmatprep.subr.bf16.mxu0 0
        %3139 = vmatpush1.bf16.msra.mxu0 %v3004
        %3140 = vmatprep.subr.bf16.mxu0 0
        %3141 = vmatpush1.bf16.msra.mxu0 %v3007
        %3142 = vmatprep.subr.bf16.mxu0 0
        %3143 = vmatpush1.bf16.msra.mxu0 %v3010
        %3144 = vmatprep.subr.bf16.mxu0 0
        %3145 = vmatpush1.bf16.msra.mxu0 %v3013
        %3146 = vmatprep.subr.bf16.mxu0 0
        %3147 = vmatpush1.bf16.msra.mxu0 %v3016
        %3148 = vmatprep.subr.bf16.mxu0 0
        %3149 = vmatpush1.bf16.msra.mxu0 %v3019
        %3150 = vmatprep.subr.bf16.mxu0 0
        %3151 = vmatpush1.bf16.msra.mxu0 %v3022
        %3152 = vmatprep.subr.bf16.mxu0 0
        %3153 = vmatpush1.bf16.msra.mxu0 %v3025
        %3154 = vmatprep.subr.bf16.mxu0 0
        %3155 = vmatpush1.bf16.msra.mxu0 %v3028
        %3156 = vmatprep.subr.bf16.mxu0 0
        %3157 = vmatpush1.bf16.msra.mxu0 %v3031
        %3158 = vmatprep.subr.bf16.mxu0 0
        %3159 = vmatpush1.bf16.msra.mxu0 %v3034
        %3160 = vmatprep.subr.bf16.mxu0 0
        %3161 = vmatpush1.bf16.msra.mxu0 %v3037
        %3162 = vmatprep.subr.bf16.mxu0 0
        %3163 = vmatpush1.bf16.msra.mxu0 %v3040
        %3164 = vmatprep.mubr.bf16.mxu0 %v2751
        %3165 = vmatmul.mubr.bf16.gmra.mrb[0].mxu0 %v2750
        %v3166 = vpop.f32.mrb[0].mxu0
        %v3167 = vadd.f32 %v2829, %v3166
        %v3168 = vpop.f32.mrb[0].mxu0
        %v3169 = vpop.f32.mrb[0].mxu0
        %v3170 = vadd.f32 %v2829, %v3169
        %v3171 = vpop.f32.mrb[0].mxu0
        %3172 = vdwg.mxu0
        %v3173 = vmax.f32 %v3124, 0.0
        %v3174 = vmax.f32 %v3126, 0.0
        %v3175 = vmax.f32 %v3167, 0.0
        %v3176 = vmax.f32 %v3128, 0.0
        %v3177 = vmax.f32 %v3130, 0.0
        %v3178 = vmax.f32 %v3170, 0.0
        %v3179 = vpack.c.bf16 %v3176, %v3173
        %v3180 = vpack.c.bf16 %v3177, %v3174
        %v3181 = vpack.c.bf16 %v3178, %v3175
        %v3182 = vld [vmem:[#allocation19] sm:$0xff]
        %v3183 = vld [vmem:[#allocation19 + $0x8] sm:$0xf]
        %v3184 = vld [vmem:[#allocation19 + $0xc] sm:$0xff]
        %v3185 = vld [vmem:[#allocation19 + $0x14] sm:$0xf]
        %v3186 = vld [vmem:[#allocation19 + $0x18] sm:$0xff]
        %v3187 = vld [vmem:[#allocation19 + $0x20] sm:$0xf]
        %v3188 = vld [vmem:[#allocation19 + $0x24] sm:$0xff]
        %v3189 = vld [vmem:[#allocation19 + $0x2c] sm:$0xf]
        %v3190 = vld [vmem:[#allocation19 + $0x30] sm:$0xff]
        %v3191 = vld [vmem:[#allocation19 + $0x38] sm:$0xf]
        %v3192 = vld [vmem:[#allocation19 + $0x3c] sm:$0xff]
        %v3193 = vld [vmem:[#allocation19 + $0x44] sm:$0xf]
        %v3194 = vld [vmem:[#allocation19 + $0x48] sm:$0xff]
        %v3195 = vld [vmem:[#allocation19 + $0x50] sm:$0xf]
        %v3196 = vld [vmem:[#allocation19 + $0x54] sm:$0xff]
        %v3197 = vld [vmem:[#allocation19 + $0x5c] sm:$0xf]
        %v3198 = vld [vmem:[#allocation19 + $0x60] sm:$0xff]
        %v3199 = vld [vmem:[#allocation19 + $0x68] sm:$0xf]
        %v3200 = vld [vmem:[#allocation19 + $0x6c] sm:$0xff]
        %v3201 = vld [vmem:[#allocation19 + $0x74] sm:$0xf]
        %v3202 = vld [vmem:[#allocation19 + $0x78] sm:$0xff]
        %v3203 = vld [vmem:[#allocation19 + $0x80] sm:$0xf]
        %v3204 = vld [vmem:[#allocation19 + $0x84] sm:$0xff]
        %v3205 = vld [vmem:[#allocation19 + $0x8c] sm:$0xf]
        %v3206 = vld [vmem:[#allocation19 + $0x90] sm:$0xff]
        %v3207 = vld [vmem:[#allocation19 + $0x98] sm:$0xf]
        %v3208 = vld [vmem:[#allocation19 + $0x9c] sm:$0xff]
        %v3209 = vld [vmem:[#allocation19 + $0xa4] sm:$0xf]
        %v3210 = vld [vmem:[#allocation19 + $0xa8] sm:$0xff]
        %v3211 = vld [vmem:[#allocation19 + $0xb0] sm:$0xf]
        %v3212 = vld [vmem:[#allocation19 + $0xb4] sm:$0xff]
        %v3213 = vld [vmem:[#allocation19 + $0xbc] sm:$0xf]
        %v3214 = vld [vmem:[#allocation19 + $0xc0] sm:$0xff]
        %v3215 = vld [vmem:[#allocation19 + $0xc8] sm:$0xf]
        %v3216 = vld [vmem:[#allocation19 + $0xcc] sm:$0xff]
        %v3217 = vld [vmem:[#allocation19 + $0xd4] sm:$0xf]
        %v3218 = vld [vmem:[#allocation19 + $0xd8] sm:$0xff]
        %v3219 = vld [vmem:[#allocation19 + $0xe0] sm:$0xf]
        %v3220 = vld [vmem:[#allocation19 + $0xe4] sm:$0xff]
        %v3221 = vld [vmem:[#allocation19 + $0xec] sm:$0xf]
        %v3222 = vld [vmem:[#allocation19 + $0xf0] sm:$0xff]
        %v3223 = vld [vmem:[#allocation19 + $0xf8] sm:$0xf]
        %v3224 = vld [vmem:[#allocation19 + $0xfc] sm:$0xff]
        %v3225 = vld [vmem:[#allocation19 + $0x104] sm:$0xf]
        %v3226 = vld [vmem:[#allocation19 + $0x108] sm:$0xff]
        %v3227 = vld [vmem:[#allocation19 + $0x110] sm:$0xf]
        %v3228 = vld [vmem:[#allocation19 + $0x114] sm:$0xff]
        %v3229 = vld [vmem:[#allocation19 + $0x11c] sm:$0xf]
        %v3230 = vld [vmem:[#allocation19 + $0x120] sm:$0xff]
        %v3231 = vld [vmem:[#allocation19 + $0x128] sm:$0xf]
        %v3232 = vld [vmem:[#allocation19 + $0x12c] sm:$0xff]
        %v3233 = vld [vmem:[#allocation19 + $0x134] sm:$0xf]
        %v3234 = vld [vmem:[#allocation19 + $0x138] sm:$0xff]
        %v3235 = vld [vmem:[#allocation19 + $0x140] sm:$0xf]
        %v3236 = vld [vmem:[#allocation19 + $0x144] sm:$0xff]
        %v3237 = vld [vmem:[#allocation19 + $0x14c] sm:$0xf]
        %v3238 = vld [vmem:[#allocation19 + $0x150] sm:$0xff]
        %v3239 = vld [vmem:[#allocation19 + $0x158] sm:$0xf]
        %v3240 = vld [vmem:[#allocation19 + $0x15c] sm:$0xff]
        %v3241 = vld [vmem:[#allocation19 + $0x164] sm:$0xf]
        %v3242 = vld [vmem:[#allocation19 + $0x168] sm:$0xff]
        %v3243 = vld [vmem:[#allocation19 + $0x170] sm:$0xf]
        %v3244 = vld [vmem:[#allocation19 + $0x174] sm:$0xff]
        %v3245 = vld [vmem:[#allocation19 + $0x17c] sm:$0xf]
        %v3246 = vld [vmem:[#allocation19 + $0x180] sm:$0xff]
        %v3247 = vld [vmem:[#allocation19 + $0x188] sm:$0xf]
        %v3248 = vld [vmem:[#allocation19 + $0x18c] sm:$0xff]
        %v3249 = vld [vmem:[#allocation19 + $0x194] sm:$0xf]
        %v3250 = vld [vmem:[#allocation19 + $0x198] sm:$0xff]
        %v3251 = vld [vmem:[#allocation19 + $0x1a0] sm:$0xf]
        %v3252 = vld [vmem:[#allocation19 + $0x1a4] sm:$0xff]
        %v3253 = vld [vmem:[#allocation19 + $0x1ac] sm:$0xf]
        %v3254 = vld [vmem:[#allocation19 + $0x1b0] sm:$0xff]
        %v3255 = vld [vmem:[#allocation19 + $0x1b8] sm:$0xf]
        %v3256 = vld [vmem:[#allocation19 + $0x1bc] sm:$0xff]
        %v3257 = vld [vmem:[#allocation19 + $0x1c4] sm:$0xf]
        %v3258 = vld [vmem:[#allocation19 + $0x1c8] sm:$0xff]
        %v3259 = vld [vmem:[#allocation19 + $0x1d0] sm:$0xf]
        %v3260 = vld [vmem:[#allocation19 + $0x1d4] sm:$0xff]
        %v3261 = vld [vmem:[#allocation19 + $0x1dc] sm:$0xf]
        %v3262 = vld [vmem:[#allocation19 + $0x1e0] sm:$0xff]
        %v3263 = vld [vmem:[#allocation19 + $0x1e8] sm:$0xf]
        %v3264 = vld [vmem:[#allocation19 + $0x1ec] sm:$0xff]
        %v3265 = vld [vmem:[#allocation19 + $0x1f4] sm:$0xf]
        %v3266 = vld [vmem:[#allocation19 + $0x1f8] sm:$0xff]
        %v3267 = vld [vmem:[#allocation19 + $0x200] sm:$0xf]
        %v3268 = vld [vmem:[#allocation19 + $0x204] sm:$0xff]
        %v3269 = vld [vmem:[#allocation19 + $0x20c] sm:$0xf]
        %v3270 = vld [vmem:[#allocation19 + $0x210] sm:$0xff]
        %v3271 = vld [vmem:[#allocation19 + $0x218] sm:$0xf]
        %v3272 = vld [vmem:[#allocation19 + $0x21c] sm:$0xff]
        %v3273 = vld [vmem:[#allocation19 + $0x224] sm:$0xf]
        %v3274 = vld [vmem:[#allocation19 + $0x228] sm:$0xff]
        %v3275 = vld [vmem:[#allocation19 + $0x230] sm:$0xf]
        %v3276 = vld [vmem:[#allocation19 + $0x234] sm:$0xff]
        %v3277 = vld [vmem:[#allocation19 + $0x23c] sm:$0xf]
        %v3278 = vld [vmem:[%s18] sm:$0x7]
        %v3280 = vlaneseq
        %v3281 = vshrl.u32 %v3280, 7
        %v3282 = vsub.s32 0, %v3281
        %v3283 = vrot.slane %v3278, %v3282
        %v3284 = vlaneseq
        %v3285 = vshrl.u32 %v3284, 7
        %v3286 = vsub.s32 1, %v3285
        %v3287 = vrot.slane %v3278, %v3286
        %v3288 = vlaneseq
        %v3289 = vshrl.u32 %v3288, 7
        %v3290 = vsub.s32 2, %v3289
        %v3291 = vrot.slane %v3278, %v3290
        %v3391 = vunpack.c.l.b16 %v3182
        %v3392 = vunpack.c.h.b16 %v3182
        %v3393 = vunpack.c.l.b16 %v3183
        %v3394 = vunpack.c.l.b16 %v3184
        %v3395 = vunpack.c.h.b16 %v3184
        %v3396 = vunpack.c.l.b16 %v3185
        %v3397 = vunpack.c.l.b16 %v3186
        %v3398 = vunpack.c.h.b16 %v3186
        %v3399 = vunpack.c.l.b16 %v3187
        %v3400 = vunpack.c.l.b16 %v3188
        %v3401 = vunpack.c.h.b16 %v3188
        %v3402 = vunpack.c.l.b16 %v3189
        %v3403 = vunpack.c.l.b16 %v3190
        %v3404 = vunpack.c.h.b16 %v3190
        %v3405 = vunpack.c.l.b16 %v3191
        %v3406 = vunpack.c.l.b16 %v3192
        %v3407 = vunpack.c.h.b16 %v3192
        %v3408 = vunpack.c.l.b16 %v3193
        %v3409 = vunpack.c.l.b16 %v3194
        %v3410 = vunpack.c.h.b16 %v3194
        %v3411 = vunpack.c.l.b16 %v3195
        %v3412 = vunpack.c.l.b16 %v3196
        %v3413 = vunpack.c.h.b16 %v3196
        %v3414 = vunpack.c.l.b16 %v3197
        %v3415 = vunpack.c.l.b16 %v3198
        %v3416 = vunpack.c.h.b16 %v3198
        %v3417 = vunpack.c.l.b16 %v3199
        %v3418 = vunpack.c.l.b16 %v3200
        %v3419 = vunpack.c.h.b16 %v3200
        %v3420 = vunpack.c.l.b16 %v3201
        %v3421 = vunpack.c.l.b16 %v3202
        %v3422 = vunpack.c.h.b16 %v3202
        %v3423 = vunpack.c.l.b16 %v3203
        %v3424 = vunpack.c.l.b16 %v3204
        %v3425 = vunpack.c.h.b16 %v3204
        %v3426 = vunpack.c.l.b16 %v3205
        %v3427 = vunpack.c.l.b16 %v3206
        %v3428 = vunpack.c.h.b16 %v3206
        %v3429 = vunpack.c.l.b16 %v3207
        %v3430 = vunpack.c.l.b16 %v3208
        %v3431 = vunpack.c.h.b16 %v3208
        %v3432 = vunpack.c.l.b16 %v3209
        %v3433 = vunpack.c.l.b16 %v3210
        %v3434 = vunpack.c.h.b16 %v3210
        %v3435 = vunpack.c.l.b16 %v3211
        %v3436 = vunpack.c.l.b16 %v3212
        %v3437 = vunpack.c.h.b16 %v3212
        %v3438 = vunpack.c.l.b16 %v3213
        %v3439 = vunpack.c.l.b16 %v3214
        %v3440 = vunpack.c.h.b16 %v3214
        %v3441 = vunpack.c.l.b16 %v3215
        %v3442 = vunpack.c.l.b16 %v3216
        %v3443 = vunpack.c.h.b16 %v3216
        %v3444 = vunpack.c.l.b16 %v3217
        %v3445 = vunpack.c.l.b16 %v3218
        %v3446 = vunpack.c.h.b16 %v3218
        %v3447 = vunpack.c.l.b16 %v3219
        %v3448 = vunpack.c.l.b16 %v3220
        %v3449 = vunpack.c.h.b16 %v3220
        %v3450 = vunpack.c.l.b16 %v3221
        %v3451 = vunpack.c.l.b16 %v3222
        %v3452 = vunpack.c.h.b16 %v3222
        %v3453 = vunpack.c.l.b16 %v3223
        %v3454 = vunpack.c.l.b16 %v3224
        %v3455 = vunpack.c.h.b16 %v3224
        %v3456 = vunpack.c.l.b16 %v3225
        %v3457 = vunpack.c.l.b16 %v3226
        %v3458 = vunpack.c.h.b16 %v3226
        %v3459 = vunpack.c.l.b16 %v3227
        %v3460 = vunpack.c.l.b16 %v3228
        %v3461 = vunpack.c.h.b16 %v3228
        %v3462 = vunpack.c.l.b16 %v3229
        %v3463 = vunpack.c.l.b16 %v3230
        %v3464 = vunpack.c.h.b16 %v3230
        %v3465 = vunpack.c.l.b16 %v3231
        %v3466 = vunpack.c.l.b16 %v3232
        %v3467 = vunpack.c.h.b16 %v3232
        %v3468 = vunpack.c.l.b16 %v3233
        %v3469 = vunpack.c.l.b16 %v3234
        %v3470 = vunpack.c.h.b16 %v3234
        %v3471 = vunpack.c.l.b16 %v3235
        %v3472 = vunpack.c.l.b16 %v3236
        %v3473 = vunpack.c.h.b16 %v3236
        %v3474 = vunpack.c.l.b16 %v3237
        %v3475 = vunpack.c.l.b16 %v3238
        %v3476 = vunpack.c.h.b16 %v3238
        %v3477 = vunpack.c.l.b16 %v3239
        %v3478 = vunpack.c.l.b16 %v3240
        %v3479 = vunpack.c.h.b16 %v3240
        %v3480 = vunpack.c.l.b16 %v3241
        %v3481 = vunpack.c.l.b16 %v3242
        %v3482 = vunpack.c.h.b16 %v3242
        %v3483 = vunpack.c.l.b16 %v3243
        %v3484 = vunpack.c.l.b16 %v3244
        %v3485 = vunpack.c.h.b16 %v3244
        %v3486 = vunpack.c.l.b16 %v3245
        %v3487 = vunpack.c.l.b16 %v3246
        %v3488 = vunpack.c.h.b16 %v3246
        %v3489 = vunpack.c.l.b16 %v3247
        %v3490 = vunpack.c.l.b16 %v3248
        %v3491 = vunpack.c.h.b16 %v3248
        %v3492 = vunpack.c.l.b16 %v3249
        %v3493 = vunpack.c.l.b16 %v3250
        %v3494 = vunpack.c.h.b16 %v3250
        %v3495 = vunpack.c.l.b16 %v3251
        %v3496 = vunpack.c.l.b16 %v3252
        %v3497 = vunpack.c.h.b16 %v3252
        %v3498 = vunpack.c.l.b16 %v3253
        %v3499 = vunpack.c.l.b16 %v3254
        %v3500 = vunpack.c.h.b16 %v3254
        %v3501 = vunpack.c.l.b16 %v3255
        %v3502 = vunpack.c.l.b16 %v3256
        %v3503 = vunpack.c.h.b16 %v3256
        %v3504 = vunpack.c.l.b16 %v3257
        %v3505 = vunpack.c.l.b16 %v3258
        %v3506 = vunpack.c.h.b16 %v3258
        %v3507 = vunpack.c.l.b16 %v3259
        %v3508 = vunpack.c.l.b16 %v3260
        %v3509 = vunpack.c.h.b16 %v3260
        %v3510 = vunpack.c.l.b16 %v3261
        %v3511 = vunpack.c.l.b16 %v3262
        %v3512 = vunpack.c.h.b16 %v3262
        %v3513 = vunpack.c.l.b16 %v3263
        %v3514 = vunpack.c.l.b16 %v3264
        %v3515 = vunpack.c.h.b16 %v3264
        %v3516 = vunpack.c.l.b16 %v3265
        %v3517 = vunpack.c.l.b16 %v3266
        %v3518 = vunpack.c.h.b16 %v3266
        %v3519 = vunpack.c.l.b16 %v3267
        %v3520 = vunpack.c.l.b16 %v3268
        %v3521 = vunpack.c.h.b16 %v3268
        %v3522 = vunpack.c.l.b16 %v3269
        %v3523 = vunpack.c.l.b16 %v3270
        %v3524 = vunpack.c.h.b16 %v3270
        %v3525 = vunpack.c.l.b16 %v3271
        %v3526 = vunpack.c.l.b16 %v3272
        %v3527 = vunpack.c.h.b16 %v3272
        %v3528 = vunpack.c.l.b16 %v3273
        %v3529 = vunpack.c.l.b16 %v3274
        %v3530 = vunpack.c.h.b16 %v3274
        %v3531 = vunpack.c.l.b16 %v3275
        %v3532 = vunpack.c.l.b16 %v3276
        %v3533 = vunpack.c.h.b16 %v3276
        %v3534 = vunpack.c.l.b16 %v3277
        %v3535 = vpack.c.b16 %v3394, %v3391
        %v3536 = vpack.c.b16 %v3395, %v3392
        %v3537 = vpack.c.b16 %v3396, %v3393
        %v3538 = vpack.c.b16 %v3400, %v3397
        %v3539 = vpack.c.b16 %v3401, %v3398
        %v3540 = vpack.c.b16 %v3402, %v3399
        %v3541 = vpack.c.b16 %v3406, %v3403
        %v3542 = vpack.c.b16 %v3407, %v3404
        %v3543 = vpack.c.b16 %v3408, %v3405
        %v3544 = vpack.c.b16 %v3412, %v3409
        %v3545 = vpack.c.b16 %v3413, %v3410
        %v3546 = vpack.c.b16 %v3414, %v3411
        %v3547 = vpack.c.b16 %v3418, %v3415
        %v3548 = vpack.c.b16 %v3419, %v3416
        %v3549 = vpack.c.b16 %v3420, %v3417
        %v3550 = vpack.c.b16 %v3424, %v3421
        %v3551 = vpack.c.b16 %v3425, %v3422
        %v3552 = vpack.c.b16 %v3426, %v3423
        %v3553 = vpack.c.b16 %v3430, %v3427
        %v3554 = vpack.c.b16 %v3431, %v3428
        %v3555 = vpack.c.b16 %v3432, %v3429
        %v3556 = vpack.c.b16 %v3436, %v3433
        %v3557 = vpack.c.b16 %v3437, %v3434
        %v3558 = vpack.c.b16 %v3438, %v3435
        %v3559 = vpack.c.b16 %v3442, %v3439
        %v3560 = vpack.c.b16 %v3443, %v3440
        %v3561 = vpack.c.b16 %v3444, %v3441
        %v3562 = vpack.c.b16 %v3448, %v3445
        %v3563 = vpack.c.b16 %v3449, %v3446
        %v3564 = vpack.c.b16 %v3450, %v3447
        %v3565 = vpack.c.b16 %v3454, %v3451
        %v3566 = vpack.c.b16 %v3455, %v3452
        %v3567 = vpack.c.b16 %v3456, %v3453
        %v3568 = vpack.c.b16 %v3460, %v3457
        %v3569 = vpack.c.b16 %v3461, %v3458
        %v3570 = vpack.c.b16 %v3462, %v3459
        %v3571 = vpack.c.b16 %v3466, %v3463
        %v3572 = vpack.c.b16 %v3467, %v3464
        %v3573 = vpack.c.b16 %v3468, %v3465
        %v3574 = vpack.c.b16 %v3472, %v3469
        %v3575 = vpack.c.b16 %v3473, %v3470
        %v3576 = vpack.c.b16 %v3474, %v3471
        %v3577 = vpack.c.b16 %v3478, %v3475
        %v3578 = vpack.c.b16 %v3479, %v3476
        %v3579 = vpack.c.b16 %v3480, %v3477
        %v3580 = vpack.c.b16 %v3484, %v3481
        %v3581 = vpack.c.b16 %v3485, %v3482
        %v3582 = vpack.c.b16 %v3486, %v3483
        %v3583 = vpack.c.b16 %v3490, %v3487
        %v3584 = vpack.c.b16 %v3491, %v3488
        %v3585 = vpack.c.b16 %v3492, %v3489
        %v3586 = vpack.c.b16 %v3496, %v3493
        %v3587 = vpack.c.b16 %v3497, %v3494
        %v3588 = vpack.c.b16 %v3498, %v3495
        %v3589 = vpack.c.b16 %v3502, %v3499
        %v3590 = vpack.c.b16 %v3503, %v3500
        %v3591 = vpack.c.b16 %v3504, %v3501
        %v3592 = vpack.c.b16 %v3508, %v3505
        %v3593 = vpack.c.b16 %v3509, %v3506
        %v3594 = vpack.c.b16 %v3510, %v3507
        %v3595 = vpack.c.b16 %v3514, %v3511
        %v3596 = vpack.c.b16 %v3515, %v3512
        %v3597 = vpack.c.b16 %v3516, %v3513
        %v3598 = vpack.c.b16 %v3520, %v3517
        %v3599 = vpack.c.b16 %v3521, %v3518
        %v3600 = vpack.c.b16 %v3522, %v3519
        %v3601 = vpack.c.b16 %v3526, %v3523
        %v3602 = vpack.c.b16 %v3527, %v3524
        %v3603 = vpack.c.b16 %v3528, %v3525
        %v3604 = vpack.c.b16 %v3532, %v3529
        %v3605 = vpack.c.b16 %v3533, %v3530
        %v3606 = vpack.c.b16 %v3534, %v3531
        %3679 = vmatprep.subr.bf16.mxu0 %v3536
        %3680 = vmatpush1.bf16.msra.mxu0 %v3535
        %3681 = vmatprep.subr.bf16.mxu0 %v3539
        %3682 = vmatpush1.bf16.msra.mxu0 %v3538
        %3683 = vmatprep.subr.bf16.mxu0 %v3542
        %3684 = vmatpush1.bf16.msra.mxu0 %v3541
        %3685 = vmatprep.subr.bf16.mxu0 %v3545
        %3686 = vmatpush1.bf16.msra.mxu0 %v3544
        %3687 = vmatprep.subr.bf16.mxu0 %v3548
        %3688 = vmatpush1.bf16.msra.mxu0 %v3547
        %3689 = vmatprep.subr.bf16.mxu0 %v3551
        %3690 = vmatpush1.bf16.msra.mxu0 %v3550
        %3691 = vmatprep.subr.bf16.mxu0 %v3554
        %3692 = vmatpush1.bf16.msra.mxu0 %v3553
        %3693 = vmatprep.subr.bf16.mxu0 %v3557
        %3694 = vmatpush1.bf16.msra.mxu0 %v3556
        %3695 = vmatprep.subr.bf16.mxu0 %v3560
        %3696 = vmatpush1.bf16.msra.mxu0 %v3559
        %3697 = vmatprep.subr.bf16.mxu0 %v3563
        %3698 = vmatpush1.bf16.msra.mxu0 %v3562
        %3699 = vmatprep.subr.bf16.mxu0 %v3566
        %3700 = vmatpush1.bf16.msra.mxu0 %v3565
        %3701 = vmatprep.subr.bf16.mxu0 %v3569
        %3702 = vmatpush1.bf16.msra.mxu0 %v3568
        %3703 = vmatprep.subr.bf16.mxu0 %v3572
        %3704 = vmatpush1.bf16.msra.mxu0 %v3571
        %3705 = vmatprep.subr.bf16.mxu0 %v3575
        %3706 = vmatpush1.bf16.msra.mxu0 %v3574
        %3707 = vmatprep.subr.bf16.mxu0 %v3578
        %3708 = vmatpush1.bf16.msra.mxu0 %v3577
        %3709 = vmatprep.subr.bf16.mxu0 %v3581
        %3710 = vmatpush1.bf16.msra.mxu0 %v3580
        %3711 = vmatprep.mubr.bf16.mxu0 %v3180
        %3712 = vmatmul.mubr.bf16.gmra.mrb[0].mxu0 %v3179
        %v3713 = vpop.f32.mrb[0].mxu0
        %v3714 = vadd.f32 %v3283, %v3713
        %v3715 = vpop.f32.mrb[0].mxu0
        %v3716 = vadd.f32 %v3287, %v3715
        %v3717 = vpop.f32.mrb[0].mxu0
        %v3718 = vadd.f32 %v3283, %v3717
        %v3719 = vpop.f32.mrb[0].mxu0
        %v3720 = vadd.f32 %v3287, %v3719
        %3721 = vdwg.mxu0
        %3722 = vmatprep.subr.bf16.mxu0 %v3584
        %3723 = vmatpush1.bf16.msra.mxu0 %v3583
        %3724 = vmatprep.subr.bf16.mxu0 %v3587
        %3725 = vmatpush1.bf16.msra.mxu0 %v3586
        %3726 = vmatprep.subr.bf16.mxu0 %v3590
        %3727 = vmatpush1.bf16.msra.mxu0 %v3589
        %3728 = vmatprep.subr.bf16.mxu0 %v3593
        %3729 = vmatpush1.bf16.msra.mxu0 %v3592
        %3730 = vmatprep.subr.bf16.mxu0 %v3596
        %3731 = vmatpush1.bf16.msra.mxu0 %v3595
        %3732 = vmatprep.subr.bf16.mxu0 %v3599
        %3733 = vmatpush1.bf16.msra.mxu0 %v3598
        %3734 = vmatprep.subr.bf16.mxu0 %v3602
        %3735 = vmatpush1.bf16.msra.mxu0 %v3601
        %3736 = vmatprep.subr.bf16.mxu0 %v3605
        %3737 = vmatpush1.bf16.msra.mxu0 %v3604
        %3738 = vmatprep.subr.bf16.mxu0 0
        %3739 = vmatpush1.bf16.msra.mxu0 0
        %3740 = vmatprep.subr.bf16.mxu0 0
        %3741 = vmatpush1.bf16.msra.mxu0 0
        %3742 = vmatprep.subr.bf16.mxu0 0
        %3743 = vmatpush1.bf16.msra.mxu0 0
        %3744 = vmatprep.subr.bf16.mxu0 0
        %3745 = vmatpush1.bf16.msra.mxu0 0
        %3746 = vmatprep.subr.bf16.mxu0 0
        %3747 = vmatpush1.bf16.msra.mxu0 0
        %3748 = vmatprep.subr.bf16.mxu0 0
        %3749 = vmatpush1.bf16.msra.mxu0 0
        %3750 = vmatprep.subr.bf16.mxu0 0
        %3751 = vmatpush1.bf16.msra.mxu0 0
        %3752 = vmatprep.subr.bf16.mxu0 0
        %3753 = vmatpush1.bf16.msra.mxu0 0
        %3754 = vmatprep.mubr.bf16.mxu0 0
        %3755 = vmatmul.mubr.bf16.gmra.mrb[0].mxu0 %v3181
        %v3756 = vpop.f32.mrb[0].mxu0
        %v3757 = vadd.f32 %v3714, %v3756
        %v3758 = vpop.f32.mrb[0].mxu0
        %v3759 = vadd.f32 %v3716, %v3758
        %v3760 = vpop.f32.mrb[0].mxu0
        %v3761 = vadd.f32 %v3718, %v3760
        %v3762 = vpop.f32.mrb[0].mxu0
        %v3763 = vadd.f32 %v3720, %v3762
        %3764 = vdwg.mxu0
        %3765 = vmatprep.subr.bf16.mxu0 0
        %3766 = vmatpush1.bf16.msra.mxu0 %v3537
        %3767 = vmatprep.subr.bf16.mxu0 0
        %3768 = vmatpush1.bf16.msra.mxu0 %v3540
        %3769 = vmatprep.subr.bf16.mxu0 0
        %3770 = vmatpush1.bf16.msra.mxu0 %v3543
        %3771 = vmatprep.subr.bf16.mxu0 0
        %3772 = vmatpush1.bf16.msra.mxu0 %v3546
        %3773 = vmatprep.subr.bf16.mxu0 0
        %3774 = vmatpush1.bf16.msra.mxu0 %v3549
        %3775 = vmatprep.subr.bf16.mxu0 0
        %3776 = vmatpush1.bf16.msra.mxu0 %v3552
        %3777 = vmatprep.subr.bf16.mxu0 0
        %3778 = vmatpush1.bf16.msra.mxu0 %v3555
        %3779 = vmatprep.subr.bf16.mxu0 0
        %3780 = vmatpush1.bf16.msra.mxu0 %v3558
        %3781 = vmatprep.subr.bf16.mxu0 0
        %3782 = vmatpush1.bf16.msra.mxu0 %v3561
        %3783 = vmatprep.subr.bf16.mxu0 0
        %3784 = vmatpush1.bf16.msra.mxu0 %v3564
        %3785 = vmatprep.subr.bf16.mxu0 0
        %3786 = vmatpush1.bf16.msra.mxu0 %v3567
        %3787 = vmatprep.subr.bf16.mxu0 0
        %3788 = vmatpush1.bf16.msra.mxu0 %v3570
        %3789 = vmatprep.subr.bf16.mxu0 0
        %3790 = vmatpush1.bf16.msra.mxu0 %v3573
        %3791 = vmatprep.subr.bf16.mxu0 0
        %3792 = vmatpush1.bf16.msra.mxu0 %v3576
        %3793 = vmatprep.subr.bf16.mxu0 0
        %3794 = vmatpush1.bf16.msra.mxu0 %v3579
        %3795 = vmatprep.subr.bf16.mxu0 0
        %3796 = vmatpush1.bf16.msra.mxu0 %v3582
        %3797 = vmatprep.mubr.bf16.mxu0 %v3180
        %3798 = vmatmul.mubr.bf16.gmra.mrb[0].mxu0 %v3179
        %v3799 = vpop.f32.mrb[0].mxu0
        %v3800 = vadd.f32 %v3291, %v3799
        %v3801 = vpop.f32.mrb[0].mxu0
        %v3802 = vpop.f32.mrb[0].mxu0
        %v3803 = vadd.f32 %v3291, %v3802
        %v3804 = vpop.f32.mrb[0].mxu0
        %3805 = vdwg.mxu0
        %3806 = vmatprep.subr.bf16.mxu0 0
        %3807 = vmatpush1.bf16.msra.mxu0 %v3585
        %3808 = vmatprep.subr.bf16.mxu0 0
        %3809 = vmatpush1.bf16.msra.mxu0 %v3588
        %3810 = vmatprep.subr.bf16.mxu0 0
        %3811 = vmatpush1.bf16.msra.mxu0 %v3591
        %3812 = vmatprep.subr.bf16.mxu0 0
        %3813 = vmatpush1.bf16.msra.mxu0 %v3594
        %3814 = vmatprep.subr.bf16.mxu0 0
        %3815 = vmatpush1.bf16.msra.mxu0 %v3597
        %3816 = vmatprep.subr.bf16.mxu0 0
        %3817 = vmatpush1.bf16.msra.mxu0 %v3600
        %3818 = vmatprep.subr.bf16.mxu0 0
        %3819 = vmatpush1.bf16.msra.mxu0 %v3603
        %3820 = vmatprep.subr.bf16.mxu0 0
        %3821 = vmatpush1.bf16.msra.mxu0 %v3606
        %3822 = vmatprep.subr.bf16.mxu0 0
        %3823 = vmatpush1.bf16.msra.mxu0 0
        %3824 = vmatprep.subr.bf16.mxu0 0
        %3825 = vmatpush1.bf16.msra.mxu0 0
        %3826 = vmatprep.subr.bf16.mxu0 0
        %3827 = vmatpush1.bf16.msra.mxu0 0
        %3828 = vmatprep.subr.bf16.mxu0 0
        %3829 = vmatpush1.bf16.msra.mxu0 0
        %3830 = vmatprep.subr.bf16.mxu0 0
        %3831 = vmatpush1.bf16.msra.mxu0 0
        %3832 = vmatprep.subr.bf16.mxu0 0
        %3833 = vmatpush1.bf16.msra.mxu0 0
        %3834 = vmatprep.subr.bf16.mxu0 0
        %3835 = vmatpush1.bf16.msra.mxu0 0
        %3836 = vmatprep.subr.bf16.mxu0 0
        %3837 = vmatpush1.bf16.msra.mxu0 0
        %3838 = vmatprep.mubr.bf16.mxu0 0
        %3839 = vmatmul.mubr.bf16.gmra.mrb[0].mxu0 %v3181
        %v3840 = vpop.f32.mrb[0].mxu0
        %v3841 = vadd.f32 %v3800, %v3840
        %v3842 = vpop.f32.mrb[0].mxu0
        %v3843 = vpop.f32.mrb[0].mxu0
        %v3844 = vadd.f32 %v3803, %v3843
        %v3845 = vpop.f32.mrb[0].mxu0
        %3846 = vdwg.mxu0
        %v3847 = vmax.f32 %v3757, 0.0
        %v3848 = vmax.f32 %v3759, 0.0
        %v3849 = vmax.f32 %v3841, 0.0
        %v3850 = vmax.f32 %v3761, 0.0
        %v3851 = vmax.f32 %v3763, 0.0
        %v3852 = vmax.f32 %v3844, 0.0
        %v3853 = vpack.c.bf16 %v3850, %v3847
        %v3854 = vpack.c.bf16 %v3851, %v3848
        %v3855 = vpack.c.bf16 %v3852, %v3849
        %v3856 = vld [vmem:[#allocation21] sm:$0xf]
        %v3857 = vld [vmem:[#allocation21 + $0x4] sm:$0xf]
        %v3858 = vld [vmem:[#allocation21 + $0x8] sm:$0xf]
        %v3859 = vld [vmem:[#allocation21 + $0xc] sm:$0xf]
        %v3860 = vld [vmem:[#allocation21 + $0x10] sm:$0xf]
        %v3861 = vld [vmem:[#allocation21 + $0x14] sm:$0xf]
        %v3862 = vld [vmem:[#allocation21 + $0x18] sm:$0xf]
        %v3863 = vld [vmem:[#allocation21 + $0x1c] sm:$0xf]
        %v3864 = vld [vmem:[#allocation21 + $0x20] sm:$0xf]
        %v3865 = vld [vmem:[#allocation21 + $0x24] sm:$0xf]
        %v3866 = vld [vmem:[#allocation21 + $0x28] sm:$0xf]
        %v3867 = vld [vmem:[#allocation21 + $0x2c] sm:$0xf]
        %v3868 = vld [vmem:[#allocation21 + $0x30] sm:$0xf]
        %v3869 = vld [vmem:[#allocation21 + $0x34] sm:$0xf]
        %v3870 = vld [vmem:[#allocation21 + $0x38] sm:$0xf]
        %v3871 = vld [vmem:[#allocation21 + $0x3c] sm:$0xf]
        %v3872 = vld [vmem:[#allocation21 + $0x40] sm:$0xf]
        %v3873 = vld [vmem:[#allocation21 + $0x44] sm:$0xf]
        %v3874 = vld [vmem:[#allocation21 + $0x48] sm:$0xf]
        %v3875 = vld [vmem:[#allocation21 + $0x4c] sm:$0xf]
        %v3876 = vld [vmem:[#allocation21 + $0x50] sm:$0xf]
        %v3877 = vld [vmem:[#allocation21 + $0x54] sm:$0xf]
        %v3878 = vld [vmem:[#allocation21 + $0x58] sm:$0xf]
        %v3879 = vld [vmem:[#allocation21 + $0x5c] sm:$0xf]
        %v3880 = vld [vmem:[#allocation21 + $0x60] sm:$0xf]
        %v3881 = vld [vmem:[#allocation21 + $0x64] sm:$0xf]
        %v3882 = vld [vmem:[#allocation21 + $0x68] sm:$0xf]
        %v3883 = vld [vmem:[#allocation21 + $0x6c] sm:$0xf]
        %v3884 = vld [vmem:[#allocation21 + $0x70] sm:$0xf]
        %v3885 = vld [vmem:[#allocation21 + $0x74] sm:$0xf]
        %v3886 = vld [vmem:[#allocation21 + $0x78] sm:$0xf]
        %v3887 = vld [vmem:[#allocation21 + $0x7c] sm:$0xf]
        %v3888 = vld [vmem:[#allocation21 + $0x80] sm:$0xf]
        %v3889 = vld [vmem:[#allocation21 + $0x84] sm:$0xf]
        %v3890 = vld [vmem:[#allocation21 + $0x88] sm:$0xf]
        %v3891 = vld [vmem:[#allocation21 + $0x8c] sm:$0xf]
        %v3892 = vld [vmem:[#allocation21 + $0x90] sm:$0xf]
        %v3893 = vld [vmem:[#allocation21 + $0x94] sm:$0xf]
        %v3894 = vld [vmem:[#allocation21 + $0x98] sm:$0xf]
        %v3895 = vld [vmem:[#allocation21 + $0x9c] sm:$0xf]
        %v3896 = vld [vmem:[#allocation21 + $0xa0] sm:$0xf]
        %v3897 = vld [vmem:[#allocation21 + $0xa4] sm:$0xf]
        %v3898 = vld [vmem:[#allocation21 + $0xa8] sm:$0xf]
        %v3899 = vld [vmem:[#allocation21 + $0xac] sm:$0xf]
        %v3900 = vld [vmem:[#allocation21 + $0xb0] sm:$0xf]
        %v3901 = vld [vmem:[#allocation21 + $0xb4] sm:$0xf]
        %v3902 = vld [vmem:[#allocation21 + $0xb8] sm:$0xf]
        %v3903 = vld [vmem:[#allocation21 + $0xbc] sm:$0xf]
        %v3904 = vld [vmem:[%s20] sm:$0x1]
        %v3906 = vlaneseq
        %v3907 = vshrl.u32 %v3906, 7
        %v3908 = vsub.s32 0, %v3907
        %v3909 = vrot.slane %v3904, %v3908
        %v3959 = vunpack.c.l.b16 %v3856
        %v3960 = vunpack.c.l.b16 %v3857
        %v3961 = vunpack.c.l.b16 %v3858
        %v3962 = vunpack.c.l.b16 %v3859
        %v3963 = vunpack.c.l.b16 %v3860
        %v3964 = vunpack.c.l.b16 %v3861
        %v3965 = vunpack.c.l.b16 %v3862
        %v3966 = vunpack.c.l.b16 %v3863
        %v3967 = vunpack.c.l.b16 %v3864
        %v3968 = vunpack.c.l.b16 %v3865
        %v3969 = vunpack.c.l.b16 %v3866
        %v3970 = vunpack.c.l.b16 %v3867
        %v3971 = vunpack.c.l.b16 %v3868
        %v3972 = vunpack.c.l.b16 %v3869
        %v3973 = vunpack.c.l.b16 %v3870
        %v3974 = vunpack.c.l.b16 %v3871
        %v3975 = vunpack.c.l.b16 %v3872
        %v3976 = vunpack.c.l.b16 %v3873
        %v3977 = vunpack.c.l.b16 %v3874
        %v3978 = vunpack.c.l.b16 %v3875
        %v3979 = vunpack.c.l.b16 %v3876
        %v3980 = vunpack.c.l.b16 %v3877
        %v3981 = vunpack.c.l.b16 %v3878
        %v3982 = vunpack.c.l.b16 %v3879
        %v3983 = vunpack.c.l.b16 %v3880
        %v3984 = vunpack.c.l.b16 %v3881
        %v3985 = vunpack.c.l.b16 %v3882
        %v3986 = vunpack.c.l.b16 %v3883
        %v3987 = vunpack.c.l.b16 %v3884
        %v3988 = vunpack.c.l.b16 %v3885
        %v3989 = vunpack.c.l.b16 %v3886
        %v3990 = vunpack.c.l.b16 %v3887
        %v3991 = vunpack.c.l.b16 %v3888
        %v3992 = vunpack.c.l.b16 %v3889
        %v3993 = vunpack.c.l.b16 %v3890
        %v3994 = vunpack.c.l.b16 %v3891
        %v3995 = vunpack.c.l.b16 %v3892
        %v3996 = vunpack.c.l.b16 %v3893
        %v3997 = vunpack.c.l.b16 %v3894
        %v3998 = vunpack.c.l.b16 %v3895
        %v3999 = vunpack.c.l.b16 %v3896
        %v4000 = vunpack.c.l.b16 %v3897
        %v4001 = vunpack.c.l.b16 %v3898
        %v4002 = vunpack.c.l.b16 %v3899
        %v4003 = vunpack.c.l.b16 %v3900
        %v4004 = vunpack.c.l.b16 %v3901
        %v4005 = vunpack.c.l.b16 %v3902
        %v4006 = vunpack.c.l.b16 %v3903
        %v4007 = vpack.c.b16 %v3960, %v3959
        %v4008 = vpack.c.b16 %v3962, %v3961
        %v4009 = vpack.c.b16 %v3964, %v3963
        %v4010 = vpack.c.b16 %v3966, %v3965
        %v4011 = vpack.c.b16 %v3968, %v3967
        %v4012 = vpack.c.b16 %v3970, %v3969
        %v4013 = vpack.c.b16 %v3972, %v3971
        %v4014 = vpack.c.b16 %v3974, %v3973
        %v4015 = vpack.c.b16 %v3976, %v3975
        %v4016 = vpack.c.b16 %v3978, %v3977
        %v4017 = vpack.c.b16 %v3980, %v3979
        %v4018 = vpack.c.b16 %v3982, %v3981
        %v4019 = vpack.c.b16 %v3984, %v3983
        %v4020 = vpack.c.b16 %v3986, %v3985
        %v4021 = vpack.c.b16 %v3988, %v3987
        %v4022 = vpack.c.b16 %v3990, %v3989
        %v4023 = vpack.c.b16 %v3992, %v3991
        %v4024 = vpack.c.b16 %v3994, %v3993
        %v4025 = vpack.c.b16 %v3996, %v3995
        %v4026 = vpack.c.b16 %v3998, %v3997
        %v4027 = vpack.c.b16 %v4000, %v3999
        %v4028 = vpack.c.b16 %v4002, %v4001
        %v4029 = vpack.c.b16 %v4004, %v4003
        %v4030 = vpack.c.b16 %v4006, %v4005
        %4055 = vmatprep.subr.bf16.mxu0 0
        %4056 = vmatpush1.bf16.msra.mxu0 %v4007
        %4057 = vmatprep.subr.bf16.mxu0 0
        %4058 = vmatpush1.bf16.msra.mxu0 %v4008
        %4059 = vmatprep.subr.bf16.mxu0 0
        %4060 = vmatpush1.bf16.msra.mxu0 %v4009
        %4061 = vmatprep.subr.bf16.mxu0 0
        %4062 = vmatpush1.bf16.msra.mxu0 %v4010
        %4063 = vmatprep.subr.bf16.mxu0 0
        %4064 = vmatpush1.bf16.msra.mxu0 %v4011
        %4065 = vmatprep.subr.bf16.mxu0 0
        %4066 = vmatpush1.bf16.msra.mxu0 %v4012
        %4067 = vmatprep.subr.bf16.mxu0 0
        %4068 = vmatpush1.bf16.msra.mxu0 %v4013
        %4069 = vmatprep.subr.bf16.mxu0 0
        %4070 = vmatpush1.bf16.msra.mxu0 %v4014
        %4071 = vmatprep.subr.bf16.mxu0 0
        %4072 = vmatpush1.bf16.msra.mxu0 %v4015
        %4073 = vmatprep.subr.bf16.mxu0 0
        %4074 = vmatpush1.bf16.msra.mxu0 %v4016
        %4075 = vmatprep.subr.bf16.mxu0 0
        %4076 = vmatpush1.bf16.msra.mxu0 %v4017
        %4077 = vmatprep.subr.bf16.mxu0 0
        %4078 = vmatpush1.bf16.msra.mxu0 %v4018
        %4079 = vmatprep.subr.bf16.mxu0 0
        %4080 = vmatpush1.bf16.msra.mxu0 %v4019
        %4081 = vmatprep.subr.bf16.mxu0 0
        %4082 = vmatpush1.bf16.msra.mxu0 %v4020
        %4083 = vmatprep.subr.bf16.mxu0 0
        %4084 = vmatpush1.bf16.msra.mxu0 %v4021
        %4085 = vmatprep.subr.bf16.mxu0 0
        %4086 = vmatpush1.bf16.msra.mxu0 %v4022
        %4087 = vmatprep.mubr.bf16.mxu0 %v3854
        %4088 = vmatmul.mubr.bf16.gmra.mrb[0].mxu0 %v3853
        %v4089 = vpop.f32.mrb[0].mxu0
        %v4090 = vadd.f32 %v3909, %v4089
        %v4091 = vpop.f32.mrb[0].mxu0
        %v4092 = vpop.f32.mrb[0].mxu0
        %v4093 = vadd.f32 %v3909, %v4092
        %v4094 = vpop.f32.mrb[0].mxu0
        %4095 = vdwg.mxu0
        %4096 = vmatprep.subr.bf16.mxu0 0
        %4097 = vmatpush1.bf16.msra.mxu0 %v4023
        %4098 = vmatprep.subr.bf16.mxu0 0
        %4099 = vmatpush1.bf16.msra.mxu0 %v4024
        %4100 = vmatprep.subr.bf16.mxu0 0
        %4101 = vmatpush1.bf16.msra.mxu0 %v4025
        %4102 = vmatprep.subr.bf16.mxu0 0
        %4103 = vmatpush1.bf16.msra.mxu0 %v4026
        %4104 = vmatprep.subr.bf16.mxu0 0
        %4105 = vmatpush1.bf16.msra.mxu0 %v4027
        %4106 = vmatprep.subr.bf16.mxu0 0
        %4107 = vmatpush1.bf16.msra.mxu0 %v4028
        %4108 = vmatprep.subr.bf16.mxu0 0
        %4109 = vmatpush1.bf16.msra.mxu0 %v4029
        %4110 = vmatprep.subr.bf16.mxu0 0
        %4111 = vmatpush1.bf16.msra.mxu0 %v4030
        %4112 = vmatprep.subr.bf16.mxu0 0
        %4113 = vmatpush1.bf16.msra.mxu0 0
        %4114 = vmatprep.subr.bf16.mxu0 0
        %4115 = vmatpush1.bf16.msra.mxu0 0
        %4116 = vmatprep.subr.bf16.mxu0 0
        %4117 = vmatpush1.bf16.msra.mxu0 0
        %4118 = vmatprep.subr.bf16.mxu0 0
        %4119 = vmatpush1.bf16.msra.mxu0 0
        %4120 = vmatprep.subr.bf16.mxu0 0
        %4121 = vmatpush1.bf16.msra.mxu0 0
        %4122 = vmatprep.subr.bf16.mxu0 0
        %4123 = vmatpush1.bf16.msra.mxu0 0
        %4124 = vmatprep.subr.bf16.mxu0 0
        %4125 = vmatpush1.bf16.msra.mxu0 0
        %4126 = vmatprep.subr.bf16.mxu0 0
        %4127 = vmatpush1.bf16.msra.mxu0 0
        %4128 = vmatprep.mubr.bf16.mxu0 0
        %4129 = vmatmul.mubr.bf16.gmra.mrb[0].mxu0 %v3855
        %v4130 = vpop.f32.mrb[0].mxu0
        %v4131 = vadd.f32 %v4090, %v4130
        %v4132 = vpop.f32.mrb[0].mxu0
        %v4133 = vpop.f32.mrb[0].mxu0
        %v4134 = vadd.f32 %v4093, %v4133
        %v4135 = vpop.f32.mrb[0].mxu0
        %4136 = vdwg.mxu0
        %v4137 = vtanh.pop %v4131
        %v4138 = vtanh.pop %v4134
        %4139 = vst [vmem:[%s839] sm:$0xff] %v4137
        %4140 = vst [vmem:[%s839 + $0x8] sm:$0xff] %v4138
        %s4141 = smul.u32 2, %s39
        %p4142 = scmp.lt.s32.totalorder %s4141, 3
        %s4143 = scalar_select %p4142, %s4141, 3
        %s4144 = smul.addr %s4143, 8
        %s4145 = scalar_lea.vmem %s21, %s4144
        // Predicated region
        $region157: #{ae_forward.1} parent=103 // pred_check
          %p4146 = pneg %p503
        $region158: #{ae_forward.1} parent=103 // pred_check_branch
          %4148 = sbr.rel (%p4146) target = $region160
        $region159: #{ae_forward.1} parent=103 // pred_region
          %s4149 = smul.u32 2, %s39
        $region160: #{ae_forward.1} parent=103 // pred_fallthru
          _
      $region104: #{ae_forward.1} parent=5 // pred_fallthru
        _
      %p4150 = scmp.le.s32.totalorder 2, %s34
      // Predicated region
      $region161: #{ae_forward.1} parent=5 // pred_check
        %p4151 = pneg %p4150
      $region162: #{ae_forward.1} parent=5 // pred_check_branch
        %4153 = sbr.rel (%p4151) target = $region164
      $region163: #{ae_forward.1} parent=5 // pred_region
        %s4154 = ssub.s32 %s34, 2
        // Predicated region
        $region165: #{ae_forward.1} parent=163 // pred_check
          %p4155 = pneg %p509
        $region166: #{ae_forward.1} parent=163 // pred_check_branch
          %4157 = sbr.rel (%p4155) target = $region168
        $region167: #{ae_forward.1} parent=163 // pred_region
          %s4158 = smul.u32 2, %s40
          %p4159 = scmp.lt.s32.totalorder %s4158, 3
          %s4160 = scalar_select %p4159, %s4158, 3
          %s4161 = smul.addr %s4160, 8
          %s4162 = scalar_lea.vmem %s21, %s4161
        $region168: #{ae_forward.1} parent=163 // pred_fallthru
          _
      $region164: #{ae_forward.1} parent=5 // pred_fallthru
        _
    $region6: #{ae_forward.1} parent=1 // loop_footer
      %s38 = sadd.s32 1, %s34
    $region7: #{ae_forward.1} parent=1 // loop_footer_branch
      %33 = sbr.rel target = $region3
    $region8: #{ae_forward.1} parent=1 // loop_exit
      _
    %4163 = vsyncpa [#allocation3], 1
    %s4164 = scalar_lea.sflag [#allocation3], 1
    %4165 = vsyncpa %s4164, 1
    %4166 = vsyncpa [#allocation5], 1
    %4167 = vsyncpa [#allocation8], 1
    %4168 = vsyncpa [#allocation11], 1
    %4169 = vsyncpa [#allocation14], 1
    %4170 = vsyncpa [#allocation17], 1
    %4171 = vsyncpa [#allocation20], 1

</llo_original>
